<compile_context>
chip_gen: v6e
topology: v6e:2x2x1
jax: 0.10.0
libtpu: 0.0.40
codegen_flags: <defaults>
</compile_context>

<pallas_src>
import jax
import jax.numpy as jnp
from jax.experimental import pallas as pl
from jax.experimental.pallas import tpu as pltpu

NEG_SLOPE = 0.01  # nn.LeakyReLU() default negative_slope


def _conv3x3_im2col(x_hwc, w_packed, h_out, w_out, c):
    """x_hwc: (H, W, C) f32.  w_packed: (9C, C) in (ky, kx, cin) row order.
    Returns (h_out*w_out, C) f32 via a single MXU matmul."""
    taps = [
        x_hwc[ky:ky + h_out, kx:kx + w_out, :].reshape(h_out * w_out, c)
        for ky in range(3) for kx in range(3)
    ]
    patches = jnp.concatenate(taps, axis=-1)                     # (P, 9C)
    return jnp.dot(patches.astype(w_packed.dtype), w_packed,
                   preferred_element_type=jnp.float32)           # (P, C) f32


def _residual_block_kernel(x_ref, w1_ref, b1_ref, w2_ref, b2_ref, o_ref):
    # x_ref : (1, H, W, C)        VMEM
    # w1_ref: (9C, C)             VMEM  (packed, possibly bf16)
    # b1_ref: (1, C)              VMEM  f32
    # w2_ref: (9C, C)             VMEM
    # b2_ref: (1, C)              VMEM  f32
    # o_ref : (1, H-4, W-4, C)    VMEM
    x = x_ref[0].astype(jnp.float32)                  # (H, W, C)
    H, W, C = x.shape
    H1, W1 = H - 2, W - 2                             # after conv1
    H2, W2 = H1 - 2, W1 - 2                           # after conv2

    # ---- conv1 (single im2col matmul) + bias + LeakyReLU (f32 on the VPU)
    y = _conv3x3_im2col(x, w1_ref[...], H1, W1, C) + b1_ref[...]   # (H1*W1, C)
    y = jnp.where(y > 0, y, NEG_SLOPE * y)
    y = y.reshape(H1, W1, C)

    # ---- conv2 (single im2col matmul) + bias
    out = _conv3x3_im2col(y, w2_ref[...], H2, W2, C) + b2_ref[...]  # (H2*W2, C)

    # ---- residual add with center-cropped input x[2:H-2, 2:W-2]
    out = out + x[2:2 + H2, 2:2 + W2, :].reshape(H2 * W2, C)

    o_ref[0] = out.reshape(H2, W2, C).astype(o_ref.dtype)


def residual_block(x_nchw, w1, b1, w2, b2, *, compute_dtype=jnp.float32):
    """x_nchw: (B, C, H, W). PyTorch-layout weights: w*: (C_out, C_in, 3, 3), b*: (C,).
    compute_dtype: dtype fed to the MXU (jnp.float32 or jnp.bfloat16; accumulation is f32).
    Returns (B, C, H-4, W-4)."""
    B, C, H, W = x_nchw.shape
    H1, W1 = H - 2, W - 2
    Ho, Wo = H - 4, W - 4

    # NCHW -> NHWC for the kernel (see TODO(synk) above about keeping the model NHWC).
    x = jnp.transpose(x_nchw, (0, 2, 3, 1))

    # Pre-pack weights: (C_out, C_in, kh, kw) -> (kh, kw, C_in, C_out) -> (9C, C_out),
    # row index = ky*3C + kx*C + cin  (matches the im2col tap/channel ordering).
    w1p = jnp.transpose(w1, (2, 3, 1, 0)).reshape(9 * C, C).astype(compute_dtype)
    w2p = jnp.transpose(w2, (2, 3, 1, 0)).reshape(9 * C, C).astype(compute_dtype)
    b1p = b1.reshape(1, C).astype(jnp.float32)
    b2p = b2.reshape(1, C).astype(jnp.float32)

    itemsize = jnp.dtype(compute_dtype).itemsize
    flops = 2 * 9 * C * C * (H1 * W1 + Ho * Wo) * B
    bytes_accessed = (B * H * W * C + B * Ho * Wo * C) * 4 \
        + 2 * 9 * C * C * itemsize + 2 * C * 4

    out_nhwc = pl.pallas_call(
        _residual_block_kernel,
        out_shape=jax.ShapeDtypeStruct((B, Ho, Wo, C), x.dtype),
        grid_spec=pltpu.PrefetchScalarGridSpec(
            num_scalar_prefetch=0,
            grid=(B,),
            in_specs=[
                pl.BlockSpec((1, H, W, C), lambda b: (b, 0, 0, 0)),
                pl.BlockSpec((9 * C, C), lambda b: (0, 0)),
                pl.BlockSpec((1, C), lambda b: (0, 0)),
                pl.BlockSpec((9 * C, C), lambda b: (0, 0)),
                pl.BlockSpec((1, C), lambda b: (0, 0)),
            ],
            out_specs=pl.BlockSpec((1, Ho, Wo, C), lambda b: (b, 0, 0, 0)),
        ),
        compiler_params=pltpu.CompilerParams(
            dimension_semantics=("parallel",),
            vmem_limit_bytes=48 * 1024 * 1024,
        ),
        cost_estimate=pl.CostEstimate(
            flops=flops, transcendentals=0, bytes_accessed=bytes_accessed),
    )(x, w1p, b1p, w2p, b2p)

    # NHWC -> NCHW to match the PyTorch output layout.
    return jnp.transpose(out_nhwc, (0, 3, 1, 2))


def _reference(x_nchw, w1, b1, w2, b2):
    """Plain-JAX reference (lax.conv) for sanity checking."""
    dn = jax.lax.conv_dimension_numbers(x_nchw.shape, w1.shape, ("NCHW", "OIHW", "NCHW"))
    y = jax.lax.conv_general_dilated(x_nchw, w1, (1, 1), "VALID", dimension_numbers=dn)
    y = y + b1.reshape(1, -1, 1, 1)
    y = jnp.where(y > 0, y, NEG_SLOPE * y)
    y = jax.lax.conv_general_dilated(y, w2, (1, 1), "VALID", dimension_numbers=dn)
    y = y + b2.reshape(1, -1, 1, 1)
    return y + x_nchw[:, :, 2:-2, 2:-2]


if __name__ == "__main__":
    B, C, H, W = 2, 4, 16, 16
    key = jax.random.PRNGKey(0)
    kx, kw1, kb1, kw2, kb2 = jax.random.split(key, 5)

    x = jax.random.normal(kx, (B, C, H, W), jnp.float32)
    # deterministic synthetic parameters (PyTorch-shaped): Conv2d(C, C, 3, 3) + bias
    fan_in = C * 3 * 3
    bound = 1.0 / (fan_in ** 0.5)
    w1 = jax.random.uniform(kw1, (C, C, 3, 3), jnp.float32, -bound, bound)
    b1 = jax.random.uniform(kb1, (C,), jnp.float32, -bound, bound)
    w2 = jax.random.uniform(kw2, (C, C, 3, 3), jnp.float32, -bound, bound)
    b2 = jax.random.uniform(kb2, (C,), jnp.float32, -bound, bound)

    ref = jax.block_until_ready(_reference(x, w1, b1, w2, b2))

    # f32 MXU path (exact-ish): tight tolerance vs. the reference.
    out = jax.block_until_ready(residual_block(x, w1, b1, w2, b2))
    assert out.shape == (B, C, H - 4, W - 4), out.shape
    assert jnp.allclose(out, ref, atol=1e-4, rtol=1e-4), float(jnp.max(jnp.abs(out - ref)))

    # bf16 MXU path (for v6e/v7x): accumulation stays f32; check it runs and is close.
    out_bf16 = jax.block_until_ready(
        residual_block(x, w1, b1, w2, b2, compute_dtype=jnp.bfloat16))
    assert out_bf16.shape == (B, C, H - 4, W - 4), out_bf16.shape
    assert bool(jnp.all(jnp.isfinite(out_bf16)))
    assert float(jnp.max(jnp.abs(out_bf16 - ref))) < 1.0

    print("KERNEL_OK")
</pallas_src>

<mosaic_0001>
module attributes {stable_mosaic.version = 11 : i64} {
  func.func @_residual_block_kernel(%arg0: i32, %arg1: memref<1x16x16x4xf32, #tpu.memory_space<vmem>>, %arg2: memref<36x4xf32, #tpu.memory_space<vmem>>, %arg3: memref<1x4xf32, #tpu.memory_space<vmem>>, %arg4: memref<36x4xf32, #tpu.memory_space<vmem>>, %arg5: memref<1x4xf32, #tpu.memory_space<vmem>>, %arg6: memref<1x12x12x4xf32, #tpu.memory_space<vmem>>) attributes {dimension_semantics = [#tpu.dimension_semantics<parallel>], iteration_bounds = array<i64: 2>, scalar_prefetch = 0 : i64, scratch_operands = 0 : i64, tpu.core_type = #tpu.core_type<tc>, window_params = [{transform_indices = @transform_0, window_bounds = array<i64: 1, 16, 16, 4>}, {pipeline_mode = #tpu.pipeline_mode<synchronous>, transform_indices = @transform_1, window_bounds = array<i64: 36, 4>}, {pipeline_mode = #tpu.pipeline_mode<synchronous>, transform_indices = @transform_2, window_bounds = array<i64: 1, 4>}, {pipeline_mode = #tpu.pipeline_mode<synchronous>, transform_indices = @transform_3, window_bounds = array<i64: 36, 4>}, {pipeline_mode = #tpu.pipeline_mode<synchronous>, transform_indices = @transform_4, window_bounds = array<i64: 1, 4>}, {transform_indices = @transform_5, window_bounds = array<i64: 1, 12, 12, 4>}]} {
    %c0 = arith.constant 0 : index
    %c0_0 = arith.constant 0 : index
    %c0_1 = arith.constant 0 : index
    %c0_2 = arith.constant 0 : index
    %0 = vector.load %arg1[%c0, %c0_0, %c0_1, %c0_2] : memref<1x16x16x4xf32, #tpu.memory_space<vmem>>, vector<1x16x16x4xf32>
    %1 = vector.shape_cast %0 : vector<1x16x16x4xf32> to vector<16x16x4xf32>
    %c0_3 = arith.constant 0 : index
    %c0_4 = arith.constant 0 : index
    %2 = vector.load %arg2[%c0_3, %c0_4] : memref<36x4xf32, #tpu.memory_space<vmem>>, vector<36x4xf32>
    %3 = vector.extract_strided_slice %1 {offsets = [0, 0, 0], sizes = [14, 14, 4], strides = [1, 1, 1]} : vector<16x16x4xf32> to vector<14x14x4xf32>
    %4 = vector.shape_cast %3 : vector<14x14x4xf32> to vector<196x4xf32>
    %5 = vector.extract_strided_slice %1 {offsets = [0, 1, 0], sizes = [14, 14, 4], strides = [1, 1, 1]} : vector<16x16x4xf32> to vector<14x14x4xf32>
    %6 = vector.shape_cast %5 : vector<14x14x4xf32> to vector<196x4xf32>
    %7 = vector.extract_strided_slice %1 {offsets = [0, 2, 0], sizes = [14, 14, 4], strides = [1, 1, 1]} : vector<16x16x4xf32> to vector<14x14x4xf32>
    %8 = vector.shape_cast %7 : vector<14x14x4xf32> to vector<196x4xf32>
    %9 = vector.extract_strided_slice %1 {offsets = [1, 0, 0], sizes = [14, 14, 4], strides = [1, 1, 1]} : vector<16x16x4xf32> to vector<14x14x4xf32>
    %10 = vector.shape_cast %9 : vector<14x14x4xf32> to vector<196x4xf32>
    %11 = vector.extract_strided_slice %1 {offsets = [1, 1, 0], sizes = [14, 14, 4], strides = [1, 1, 1]} : vector<16x16x4xf32> to vector<14x14x4xf32>
    %12 = vector.shape_cast %11 : vector<14x14x4xf32> to vector<196x4xf32>
    %13 = vector.extract_strided_slice %1 {offsets = [1, 2, 0], sizes = [14, 14, 4], strides = [1, 1, 1]} : vector<16x16x4xf32> to vector<14x14x4xf32>
    %14 = vector.shape_cast %13 : vector<14x14x4xf32> to vector<196x4xf32>
    %15 = vector.extract_strided_slice %1 {offsets = [2, 0, 0], sizes = [14, 14, 4], strides = [1, 1, 1]} : vector<16x16x4xf32> to vector<14x14x4xf32>
    %16 = vector.shape_cast %15 : vector<14x14x4xf32> to vector<196x4xf32>
    %17 = vector.extract_strided_slice %1 {offsets = [2, 1, 0], sizes = [14, 14, 4], strides = [1, 1, 1]} : vector<16x16x4xf32> to vector<14x14x4xf32>
    %18 = vector.shape_cast %17 : vector<14x14x4xf32> to vector<196x4xf32>
    %19 = vector.extract_strided_slice %1 {offsets = [2, 2, 0], sizes = [14, 14, 4], strides = [1, 1, 1]} : vector<16x16x4xf32> to vector<14x14x4xf32>
    %20 = vector.shape_cast %19 : vector<14x14x4xf32> to vector<196x4xf32>
    %21 = tpu.concatenate %4, %6, %8, %10, %12, %14, %16, %18, %20 in 1 : vector<196x4xf32>, vector<196x4xf32>, vector<196x4xf32>, vector<196x4xf32>, vector<196x4xf32>, vector<196x4xf32>, vector<196x4xf32>, vector<196x4xf32>, vector<196x4xf32> -> vector<196x36xf32>
    %cst = arith.constant dense<0.000000e+00> : vector<196x4xf32>
    %22 = tpu.matmul %21, %2, %cst {dimension_numbers = #tpu.dot_dimension_numbers<[1], [0], [0], [1], [0, 0, 1, 1], [], []>} : vector<196x36xf32>, vector<36x4xf32>, vector<196x4xf32> -> vector<196x4xf32>
    %c0_5 = arith.constant 0 : index
    %c0_6 = arith.constant 0 : index
    %23 = vector.load %arg3[%c0_5, %c0_6] : memref<1x4xf32, #tpu.memory_space<vmem>>, vector<1x4xf32>
    %24 = vector.broadcast %23 : vector<1x4xf32> to vector<196x4xf32>
    %25 = arith.addf %22, %24 : vector<196x4xf32>
    %cst_7 = arith.constant 0.000000e+00 : f32
    %26 = vector.broadcast %cst_7 : f32 to vector<196x4xf32>
    %27 = arith.cmpf ogt, %25, %26 : vector<196x4xf32>
    %cst_8 = arith.constant 0.00999999977 : f32
    %28 = vector.broadcast %cst_8 : f32 to vector<196x4xf32>
    %29 = arith.mulf %28, %25 : vector<196x4xf32>
    %30 = arith.select %27, %25, %29 : vector<196x4xi1>, vector<196x4xf32>
    %31 = vector.shape_cast %30 : vector<196x4xf32> to vector<14x14x4xf32>
    %c0_9 = arith.constant 0 : index
    %c0_10 = arith.constant 0 : index
    %32 = vector.load %arg4[%c0_9, %c0_10] : memref<36x4xf32, #tpu.memory_space<vmem>>, vector<36x4xf32>
    %33 = vector.extract_strided_slice %31 {offsets = [0, 0, 0], sizes = [12, 12, 4], strides = [1, 1, 1]} : vector<14x14x4xf32> to vector<12x12x4xf32>
    %34 = vector.shape_cast %33 : vector<12x12x4xf32> to vector<144x4xf32>
    %35 = vector.extract_strided_slice %31 {offsets = [0, 1, 0], sizes = [12, 12, 4], strides = [1, 1, 1]} : vector<14x14x4xf32> to vector<12x12x4xf32>
    %36 = vector.shape_cast %35 : vector<12x12x4xf32> to vector<144x4xf32>
    %37 = vector.extract_strided_slice %31 {offsets = [0, 2, 0], sizes = [12, 12, 4], strides = [1, 1, 1]} : vector<14x14x4xf32> to vector<12x12x4xf32>
    %38 = vector.shape_cast %37 : vector<12x12x4xf32> to vector<144x4xf32>
    %39 = vector.extract_strided_slice %31 {offsets = [1, 0, 0], sizes = [12, 12, 4], strides = [1, 1, 1]} : vector<14x14x4xf32> to vector<12x12x4xf32>
    %40 = vector.shape_cast %39 : vector<12x12x4xf32> to vector<144x4xf32>
    %41 = vector.extract_strided_slice %31 {offsets = [1, 1, 0], sizes = [12, 12, 4], strides = [1, 1, 1]} : vector<14x14x4xf32> to vector<12x12x4xf32>
    %42 = vector.shape_cast %41 : vector<12x12x4xf32> to vector<144x4xf32>
    %43 = vector.extract_strided_slice %31 {offsets = [1, 2, 0], sizes = [12, 12, 4], strides = [1, 1, 1]} : vector<14x14x4xf32> to vector<12x12x4xf32>
    %44 = vector.shape_cast %43 : vector<12x12x4xf32> to vector<144x4xf32>
    %45 = vector.extract_strided_slice %31 {offsets = [2, 0, 0], sizes = [12, 12, 4], strides = [1, 1, 1]} : vector<14x14x4xf32> to vector<12x12x4xf32>
    %46 = vector.shape_cast %45 : vector<12x12x4xf32> to vector<144x4xf32>
    %47 = vector.extract_strided_slice %31 {offsets = [2, 1, 0], sizes = [12, 12, 4], strides = [1, 1, 1]} : vector<14x14x4xf32> to vector<12x12x4xf32>
    %48 = vector.shape_cast %47 : vector<12x12x4xf32> to vector<144x4xf32>
    %49 = vector.extract_strided_slice %31 {offsets = [2, 2, 0], sizes = [12, 12, 4], strides = [1, 1, 1]} : vector<14x14x4xf32> to vector<12x12x4xf32>
    %50 = vector.shape_cast %49 : vector<12x12x4xf32> to vector<144x4xf32>
    %51 = tpu.concatenate %34, %36, %38, %40, %42, %44, %46, %48, %50 in 1 : vector<144x4xf32>, vector<144x4xf32>, vector<144x4xf32>, vector<144x4xf32>, vector<144x4xf32>, vector<144x4xf32>, vector<144x4xf32>, vector<144x4xf32>, vector<144x4xf32> -> vector<144x36xf32>
    %cst_11 = arith.constant dense<0.000000e+00> : vector<144x4xf32>
    %52 = tpu.matmul %51, %32, %cst_11 {dimension_numbers = #tpu.dot_dimension_numbers<[1], [0], [0], [1], [0, 0, 1, 1], [], []>} : vector<144x36xf32>, vector<36x4xf32>, vector<144x4xf32> -> vector<144x4xf32>
    %c0_12 = arith.constant 0 : index
    %c0_13 = arith.constant 0 : index
    %53 = vector.load %arg5[%c0_12, %c0_13] : memref<1x4xf32, #tpu.memory_space<vmem>>, vector<1x4xf32>
    %54 = vector.broadcast %53 : vector<1x4xf32> to vector<144x4xf32>
    %55 = arith.addf %52, %54 : vector<144x4xf32>
    %56 = vector.extract_strided_slice %1 {offsets = [2, 2, 0], sizes = [12, 12, 4], strides = [1, 1, 1]} : vector<16x16x4xf32> to vector<12x12x4xf32>
    %57 = vector.shape_cast %56 : vector<12x12x4xf32> to vector<144x4xf32>
    %58 = arith.addf %55, %57 : vector<144x4xf32>
    %59 = vector.shape_cast %58 : vector<144x4xf32> to vector<12x12x4xf32>
    %c0_14 = arith.constant 0 : index
    %c0_15 = arith.constant 0 : index
    %c0_16 = arith.constant 0 : index
    %c0_17 = arith.constant 0 : index
    %60 = vector.load %arg6[%c0_14, %c0_15, %c0_16, %c0_17] : memref<1x12x12x4xf32, #tpu.memory_space<vmem>>, vector<1x12x12x4xf32>
    %61 = vector.shape_cast %60 : vector<1x12x12x4xf32> to vector<12x12x4xf32>
    %62 = vector.shape_cast %59 : vector<12x12x4xf32> to vector<1x12x12x4xf32>
    tpu.vector_store %arg6[%c0_14, %c0_15, %c0_16, %c0_17], %62 {strides = array<i32>} : memref<1x12x12x4xf32, #tpu.memory_space<vmem>>, vector<1x12x12x4xf32>,
    return
  }
  func.func @transform_0(%arg0: i32) -> (i32, i32, i32, i32) {
    %c0_i32 = arith.constant 0 : i32
    %c0_i32_0 = arith.constant 0 : i32
    %c0_i32_1 = arith.constant 0 : i32
    %c0_i32_2 = arith.constant 0 : i32
    return %arg0, %c0_i32, %c0_i32_0, %c0_i32_1 : i32, i32, i32, i32
  }
  func.func @transform_1(%arg0: i32) -> (i32, i32) {
    %c0_i32 = arith.constant 0 : i32
    %c0_i32_0 = arith.constant 0 : i32
    %c0_i32_1 = arith.constant 0 : i32
    return %c0_i32, %c0_i32_0 : i32, i32
  }
  func.func @transform_2(%arg0: i32) -> (i32, i32) {
    %c0_i32 = arith.constant 0 : i32
    %c0_i32_0 = arith.constant 0 : i32
    %c0_i32_1 = arith.constant 0 : i32
    return %c0_i32, %c0_i32_0 : i32, i32
  }
  func.func @transform_3(%arg0: i32) -> (i32, i32) {
    %c0_i32 = arith.constant 0 : i32
    %c0_i32_0 = arith.constant 0 : i32
    %c0_i32_1 = arith.constant 0 : i32
    return %c0_i32, %c0_i32_0 : i32, i32
  }
  func.func @transform_4(%arg0: i32) -> (i32, i32) {
    %c0_i32 = arith.constant 0 : i32
    %c0_i32_0 = arith.constant 0 : i32
    %c0_i32_1 = arith.constant 0 : i32
    return %c0_i32, %c0_i32_0 : i32, i32
  }
  func.func @transform_5(%arg0: i32) -> (i32, i32, i32, i32) {
    %c0_i32 = arith.constant 0 : i32
    %c0_i32_0 = arith.constant 0 : i32
    %c0_i32_1 = arith.constant 0 : i32
    %c0_i32_2 = arith.constant 0 : i32
    return %arg0, %c0_i32, %c0_i32_0, %c0_i32_1 : i32, i32, i32, i32
  }
}

</mosaic_0001>

<llo_original>
// kernel: tpu_custom_call.1
$region0: #{tpu_custom_call.1}
  #allocation0 [shape = 'u32[]', space=smem, size = 0x4, offset = 0x4, fixed_abs, tag = 'smem constant byte address 0x4 - core index']
  #allocation1 [shape = 'u32[144,128]{1,0:T(1,128)}', space=vmem, size = 0x12000, scoped, tag = 'internal scratch']
  %s0 = inlined_call_operand.vmem [shape: f32[2,16,16,4], index: 0, kind: input, shape index: {}]
  %s1 = inlined_call_operand.vmem [shape: f32[36,4], index: 1, kind: input, shape index: {}]
  %s2 = inlined_call_operand.vmem [shape: f32[1,4], index: 2, kind: input, shape index: {}]
  %s3 = inlined_call_operand.vmem [shape: f32[36,4], index: 3, kind: input, shape index: {}]
  %s4 = inlined_call_operand.vmem [shape: f32[1,4], index: 4, kind: input, shape index: {}]
  %s5 = inlined_call_operand.vmem [shape: f32[2,12,12,4], index: 5, kind: output, shape index: {}]
  %s6 = sld [smem:[#allocation0]]
  $region53: #{tpu_custom_call.1} parent=0
    _
  %s8 = ssub.s32 1, %s6
  %s9 = scalar_select 0, %s8, %s6
  loop: start=0, step=1, limit=4
  $region2: #{tpu_custom_call.1} parent=0 // loop_pre_header
    _
  $region3: #{tpu_custom_call.1} parent=0 // loop_header
    %s11 = sphi 0, %s15
    %p12 = scmp.ge.s32.totalorder %s11, 4
    %s21 = sphi 0, %s23
    %s24 = sphi 0, %s21
    %s25 = sphi 0, %s24
    %s41 = sphi 0, %s25
    %s45 = sphi 0, %s45
    %s47 = sphi 0, %s45
    %s48 = sphi 0, %s47
    %s62 = sphi 0, %s48
    %s66 = sphi 0, %s66
    %s68 = sphi 0, %s66
    %s69 = sphi 0, %s68
    %s83 = sphi 0, %s69
    %s87 = sphi 0, %s87
    %s89 = sphi 0, %s87
    %s90 = sphi 0, %s89
    %s104 = sphi 0, %s90
    %s108 = sphi 0, %s108
    %s110 = sphi 0, %s108
    %s111 = sphi 0, %s110
    %s125 = sphi 0, %s111
    %s131 = sphi 0, %s133
    %s134 = sphi 0, %s131
    %s135 = sphi 0, %s134
    %s151 = sphi 0, %s135
  $region4: #{tpu_custom_call.1} parent=0 // loop_header_branch
    %14 = sbr.rel (%p12) target = $region8
  $region5: #{tpu_custom_call.1} parent=0 // loop_body
    %s16 = ssub.s32 %s11, 1
    %s17 = ssub.s32 %s11, 2
    %s18 = sadd.s32 %s11, 1
    %s19 = ssub.s32 %s11, %s18
    %p20 = scmp.eq.s32.totalorder %s19, 0
    %s22 = sadd.s32 %s21, 1
    %s23 = scalar_select %p20, %s21, %s22
    %p26 = pneg %p20
    %p27 = scmp.eq.s32.totalorder %s11, 1
    %p28 = por %p26, %p27
    %p29 = scmp.ne.s32.totalorder %s21, %s24
    %p30 = scmp.eq.s32.totalorder %s11, 0
    %p31 = por %p29, %p30
    %p32 = scmp.ne.s32.totalorder %s21, %s24
    %p33 = scmp.eq.s32.totalorder %s16, 1
    %p34 = por %p32, %p33
    %p35 = scmp.ne.s32.totalorder %s24, %s25
    %p36 = scmp.eq.s32.totalorder %s16, 0
    %p37 = por %p35, %p36
    %p38 = scmp.ne.s32.totalorder %s24, %s25
    %p39 = scmp.eq.s32.totalorder %s17, 1
    %p40 = por %p38, %p39
    %p42 = scmp.ne.s32.totalorder %s25, %s41
    %p43 = scmp.eq.s32.totalorder %s17, 0
    %p44 = por %p42, %p43
    %s46 = sadd.s32 %s45, 1
    %p49 = scmp.eq.s32.totalorder %s11, 1
    %p50 = scmp.ne.s32.totalorder %s45, %s47
    %p51 = scmp.eq.s32.totalorder %s11, 0
    %p52 = por %p50, %p51
    %p53 = scmp.ne.s32.totalorder %s45, %s47
    %p54 = scmp.eq.s32.totalorder %s16, 1
    %p55 = por %p53, %p54
    %p56 = scmp.ne.s32.totalorder %s47, %s48
    %p57 = scmp.eq.s32.totalorder %s16, 0
    %p58 = por %p56, %p57
    %p59 = scmp.ne.s32.totalorder %s47, %s48
    %p60 = scmp.eq.s32.totalorder %s17, 1
    %p61 = por %p59, %p60
    %p63 = scmp.ne.s32.totalorder %s48, %s62
    %p64 = scmp.eq.s32.totalorder %s17, 0
    %p65 = por %p63, %p64
    %s67 = sadd.s32 %s66, 1
    %p70 = scmp.eq.s32.totalorder %s11, 1
    %p71 = scmp.ne.s32.totalorder %s66, %s68
    %p72 = scmp.eq.s32.totalorder %s11, 0
    %p73 = por %p71, %p72
    %p74 = scmp.ne.s32.totalorder %s66, %s68
    %p75 = scmp.eq.s32.totalorder %s16, 1
    %p76 = por %p74, %p75
    %p77 = scmp.ne.s32.totalorder %s68, %s69
    %p78 = scmp.eq.s32.totalorder %s16, 0
    %p79 = por %p77, %p78
    %p80 = scmp.ne.s32.totalorder %s68, %s69
    %p81 = scmp.eq.s32.totalorder %s17, 1
    %p82 = por %p80, %p81
    %p84 = scmp.ne.s32.totalorder %s69, %s83
    %p85 = scmp.eq.s32.totalorder %s17, 0
    %p86 = por %p84, %p85
    %s88 = sadd.s32 %s87, 1
    %p91 = scmp.eq.s32.totalorder %s11, 1
    %p92 = scmp.ne.s32.totalorder %s87, %s89
    %p93 = scmp.eq.s32.totalorder %s11, 0
    %p94 = por %p92, %p93
    %p95 = scmp.ne.s32.totalorder %s87, %s89
    %p96 = scmp.eq.s32.totalorder %s16, 1
    %p97 = por %p95, %p96
    %p98 = scmp.ne.s32.totalorder %s89, %s90
    %p99 = scmp.eq.s32.totalorder %s16, 0
    %p100 = por %p98, %p99
    %p101 = scmp.ne.s32.totalorder %s89, %s90
    %p102 = scmp.eq.s32.totalorder %s17, 1
    %p103 = por %p101, %p102
    %p105 = scmp.ne.s32.totalorder %s90, %s104
    %p106 = scmp.eq.s32.totalorder %s17, 0
    %p107 = por %p105, %p106
    %s109 = sadd.s32 %s108, 1
    %p112 = scmp.eq.s32.totalorder %s11, 1
    %p113 = scmp.ne.s32.totalorder %s108, %s110
    %p114 = scmp.eq.s32.totalorder %s11, 0
    %p115 = por %p113, %p114
    %p116 = scmp.ne.s32.totalorder %s108, %s110
    %p117 = scmp.eq.s32.totalorder %s16, 1
    %p118 = por %p116, %p117
    %p119 = scmp.ne.s32.totalorder %s110, %s111
    %p120 = scmp.eq.s32.totalorder %s16, 0
    %p121 = por %p119, %p120
    %p122 = scmp.ne.s32.totalorder %s110, %s111
    %p123 = scmp.eq.s32.totalorder %s17, 1
    %p124 = por %p122, %p123
    %p126 = scmp.ne.s32.totalorder %s111, %s125
    %p127 = scmp.eq.s32.totalorder %s17, 0
    %p128 = por %p126, %p127
    %s129 = ssub.s32 %s11, %s18
    %p130 = scmp.eq.s32.totalorder %s129, 0
    %s132 = sadd.s32 %s131, 1
    %s133 = scalar_select %p130, %s131, %s132
    %p136 = pneg %p130
    %p137 = scmp.eq.s32.totalorder %s11, 1
    %p138 = por %p136, %p137
    %p139 = scmp.ne.s32.totalorder %s131, %s134
    %p140 = scmp.eq.s32.totalorder %s11, 0
    %p141 = por %p139, %p140
    %p142 = scmp.ne.s32.totalorder %s131, %s134
    %p143 = scmp.eq.s32.totalorder %s16, 1
    %p144 = por %p142, %p143
    %p145 = scmp.ne.s32.totalorder %s134, %s135
    %p146 = scmp.eq.s32.totalorder %s16, 0
    %p147 = por %p145, %p146
    %p148 = scmp.ne.s32.totalorder %s134, %s135
    %p149 = scmp.eq.s32.totalorder %s17, 1
    %p150 = por %p148, %p149
    %p152 = scmp.ne.s32.totalorder %s135, %s151
    %p153 = scmp.eq.s32.totalorder %s17, 0
    %p154 = por %p152, %p153
    %p155 = scmp.le.s32.totalorder 1, %s11
    %p156 = scmp.lt.s32.totalorder %s11, 3
    %p157 = pnand %p155, %p156
    %p158 = pneg %p157
    // Predicated region
    $region9: #{tpu_custom_call.1} parent=5 // pred_check
      _
    $region10: #{tpu_custom_call.1} parent=5 // pred_check_branch
      %160 = sbr.rel (%p157) target = $region12
    $region11: #{tpu_custom_call.1} parent=5 // pred_region
      %s161 = ssub.s32 %s11, 1
      // Predicated region
      $region13: #{tpu_custom_call.1} parent=11 // pred_check
        %p162 = pneg %p58
      $region14: #{tpu_custom_call.1} parent=11 // pred_check_branch
        %164 = sbr.rel (%p162) target = $region16
      $region15: #{tpu_custom_call.1} parent=11 // pred_region
        _
      $region16: #{tpu_custom_call.1} parent=11 // pred_fallthru
        _
      // Predicated region
      $region17: #{tpu_custom_call.1} parent=11 // pred_check
        %p165 = pneg %p79
      $region18: #{tpu_custom_call.1} parent=11 // pred_check_branch
        %167 = sbr.rel (%p165) target = $region20
      $region19: #{tpu_custom_call.1} parent=11 // pred_region
        _
      $region20: #{tpu_custom_call.1} parent=11 // pred_fallthru
        _
      // Predicated region
      $region21: #{tpu_custom_call.1} parent=11 // pred_check
        %p168 = pneg %p100
      $region22: #{tpu_custom_call.1} parent=11 // pred_check_branch
        %170 = sbr.rel (%p168) target = $region24
      $region23: #{tpu_custom_call.1} parent=11 // pred_region
        _
      $region24: #{tpu_custom_call.1} parent=11 // pred_fallthru
        _
      // Predicated region
      $region25: #{tpu_custom_call.1} parent=11 // pred_check
        %p171 = pneg %p121
      $region26: #{tpu_custom_call.1} parent=11 // pred_check_branch
        %173 = sbr.rel (%p171) target = $region28
      $region27: #{tpu_custom_call.1} parent=11 // pred_region
        _
      $region28: #{tpu_custom_call.1} parent=11 // pred_fallthru
        _
    $region12: #{tpu_custom_call.1} parent=5 // pred_fallthru
      _
    %p174 = scmp.lt.s32.totalorder %s11, 2
    // Predicated region
    $region29: #{tpu_custom_call.1} parent=5 // pred_check
      %p175 = pneg %p174
    $region30: #{tpu_custom_call.1} parent=5 // pred_check_branch
      %177 = sbr.rel (%p175) target = $region32
    $region31: #{tpu_custom_call.1} parent=5 // pred_region
      // Predicated region
      $region33: #{tpu_custom_call.1} parent=31 // pred_check
        %p178 = pneg %p31
      $region34: #{tpu_custom_call.1} parent=31 // pred_check_branch
        %180 = sbr.rel (%p178) target = $region36
      $region35: #{tpu_custom_call.1} parent=31 // pred_region
        %p181 = scmp.lt.s32.totalorder %s11, 1
        %s182 = scalar_select %p181, %s11, 1
        %s183 = smul.addr %s182, 32
        %s184 = smul.addr %s183, 8
        %s185 = scalar_lea.vmem %s0, %s184
      $region36: #{tpu_custom_call.1} parent=31 // pred_fallthru
        _
    $region32: #{tpu_custom_call.1} parent=5 // pred_fallthru
      _
    %p186 = scmp.le.s32.totalorder 1, %s11
    %p187 = scmp.lt.s32.totalorder %s11, 3
    %p188 = pnand %p186, %p187
    %p189 = pneg %p188
    // Predicated region
    $region37: #{tpu_custom_call.1} parent=5 // pred_check
      _
    $region38: #{tpu_custom_call.1} parent=5 // pred_check_branch
      %191 = sbr.rel (%p188) target = $region40
    $region39: #{tpu_custom_call.1} parent=5 // pred_region
      %s192 = ssub.s32 %s11, 1
      %p193 = scmp.lt.s32.totalorder %s16, 1
      %s194 = scalar_select %p193, %s16, 1
      %s195 = smul.addr %s194, 32
      %s196 = smul.addr %s195, 8
      %s197 = scalar_lea.vmem %s0, %s196
      %p198 = pneg %p37
      %p199 = pneg %p34
      %p200 = pneg %p58
      %p201 = pneg %p55
      %p202 = pneg %p79
      %p203 = pneg %p76
      %p204 = pneg %p100
      %p205 = pneg %p97
      %p206 = pneg %p121
      %p207 = pneg %p118
      %p208 = pneg %p147
      %p209 = pneg %p144
      %p210 = scmp.lt.s32.totalorder %s16, 1
      %s211 = scalar_select %p210, %s16, 1
      %s212 = smul.addr %s211, 24
      %s213 = smul.addr %s212, 8
      %s214 = scalar_lea.vmem %s5, %s213
      %p215 = scmp.lt.s32.totalorder %s16, 1
      %s216 = scalar_select %p215, %s16, 1
      %s217 = smul.addr %s216, 32
      %s218 = smul.addr %s217, 8
      %s219 = scalar_lea.vmem %s0, %s218
      %p220 = scmp.lt.s32.totalorder %s16, 1
      %s221 = scalar_select %p220, %s16, 1
      %s222 = smul.addr %s221, 24
      %s223 = smul.addr %s222, 8
      %s224 = scalar_lea.vmem %s5, %s223
      %v225 = vld [vmem:[%s219] sm:$0xff]
      %v226 = vld [vmem:[%s219 + $0x8] sm:$0xff]
      %v227 = vld [vmem:[%s219 + $0x10] sm:$0xff]
      %v228 = vld [vmem:[%s219 + $0x18] sm:$0xff]
      %v229 = vld [vmem:[%s219 + $0x20] sm:$0xff]
      %v230 = vld [vmem:[%s219 + $0x28] sm:$0xff]
      %v231 = vld [vmem:[%s219 + $0x30] sm:$0xff]
      %v232 = vld [vmem:[%s219 + $0x38] sm:$0xff]
      %v233 = vld [vmem:[%s219 + $0x40] sm:$0xff]
      %v234 = vld [vmem:[%s219 + $0x48] sm:$0xff]
      %v235 = vld [vmem:[%s219 + $0x50] sm:$0xff]
      %v236 = vld [vmem:[%s219 + $0x58] sm:$0xff]
      %v237 = vld [vmem:[%s219 + $0x60] sm:$0xff]
      %v238 = vld [vmem:[%s219 + $0x68] sm:$0xff]
      %v239 = vld [vmem:[%s219 + $0x70] sm:$0xff]
      %v240 = vld [vmem:[%s219 + $0x78] sm:$0xff]
      %v241 = vld [vmem:[%s219 + $0x80] sm:$0xff]
      %v242 = vld [vmem:[%s219 + $0x88] sm:$0xff]
      %v243 = vld [vmem:[%s219 + $0x90] sm:$0xff]
      %v244 = vld [vmem:[%s219 + $0x98] sm:$0xff]
      %v245 = vld [vmem:[%s219 + $0xa0] sm:$0xff]
      %v246 = vld [vmem:[%s219 + $0xa8] sm:$0xff]
      %v247 = vld [vmem:[%s219 + $0xb0] sm:$0xff]
      %v248 = vld [vmem:[%s219 + $0xb8] sm:$0xff]
      %v249 = vld [vmem:[%s219 + $0xc0] sm:$0xff]
      %v250 = vld [vmem:[%s219 + $0xc8] sm:$0xff]
      %v251 = vld [vmem:[%s219 + $0xd0] sm:$0xff]
      %v252 = vld [vmem:[%s219 + $0xd8] sm:$0xff]
      %v253 = vld [vmem:[%s219 + $0xe0] sm:$0xff]
      %v254 = vld [vmem:[%s219 + $0xe8] sm:$0xff]
      %v255 = vld [vmem:[%s219 + $0xf0] sm:$0xff]
      %v256 = vld [vmem:[%s219 + $0xf8] sm:$0xff]
      %v257 = vld [vmem:[%s1] sm:$0xff]
      %v258 = vld [vmem:[%s1 + $0x8] sm:$0xff]
      %v259 = vld [vmem:[%s1 + $0x10] sm:$0xff]
      %v260 = vld [vmem:[%s1 + $0x18] sm:$0xff]
      %v261 = vld [vmem:[%s1 + $0x20] sm:$0xf]
      %v290 = vcombine.high %v225, %v225
      %v292 = vunpack.c.l.s4 1983009808
      %v293 = vunpack.c.0.s8 %v292
      %v294 = vlaneseq
      %v295 = vshrl.u32 %v294, 7
      %v296 = vsub.s32 %v293, %v295
      %v297 = vrot.slane %v225, %v296
      %v299 = vunpack.c.l.s4 1983009808
      %v300 = vunpack.c.0.s8 %v299
      %v301 = vlaneseq
      %v302 = vshrl.u32 %v301, 7
      %v303 = vsub.s32 %v300, %v302
      %v304 = vrot.slane %v290, %v303
      %v305 = vcombine.high %v297, %v297
      %v306 = vcombine.high %v304, %v304
      %v307 = vcombine.high %v226, %v226
      %v309 = vunpack.c.l.s4 1983009808
      %v310 = vunpack.c.0.s8 %v309
      %v311 = vlaneseq
      %v312 = vshrl.u32 %v311, 7
      %v313 = vsub.s32 %v310, %v312
      %v314 = vrot.slane %v226, %v313
      %v316 = vunpack.c.l.s4 1983009808
      %v317 = vunpack.c.0.s8 %v316
      %v318 = vlaneseq
      %v319 = vshrl.u32 %v318, 7
      %v320 = vsub.s32 %v317, %v319
      %v321 = vrot.slane %v307, %v320
      %v322 = vcombine.high %v314, %v314
      %v323 = vcombine.high %v227, %v227
      %v325 = vunpack.c.l.s4 1983009808
      %v326 = vunpack.c.0.s8 %v325
      %v327 = vlaneseq
      %v328 = vshrl.u32 %v327, 7
      %v329 = vsub.s32 %v326, %v328
      %v330 = vrot.slane %v227, %v329
      %v332 = vunpack.c.l.s4 1983009808
      %v333 = vunpack.c.0.s8 %v332
      %v334 = vlaneseq
      %v335 = vshrl.u32 %v334, 7
      %v336 = vsub.s32 %v333, %v335
      %v337 = vrot.slane %v323, %v336
      %v338 = vcombine.high %v330, %v330
      %v339 = vcombine.high %v337, %v337
      %v340 = vcombine.high %v228, %v228
      %v342 = vunpack.c.l.s4 1983009808
      %v343 = vunpack.c.0.s8 %v342
      %v344 = vlaneseq
      %v345 = vshrl.u32 %v344, 7
      %v346 = vsub.s32 %v343, %v345
      %v347 = vrot.slane %v228, %v346
      %v349 = vunpack.c.l.s4 1983009808
      %v350 = vunpack.c.0.s8 %v349
      %v351 = vlaneseq
      %v352 = vshrl.u32 %v351, 7
      %v353 = vsub.s32 %v350, %v352
      %v354 = vrot.slane %v340, %v353
      %v355 = vcombine.high %v347, %v347
      %v356 = vcombine.high %v229, %v229
      %v358 = vunpack.c.l.s4 1983009808
      %v359 = vunpack.c.0.s8 %v358
      %v360 = vlaneseq
      %v361 = vshrl.u32 %v360, 7
      %v362 = vsub.s32 %v359, %v361
      %v363 = vrot.slane %v229, %v362
      %v365 = vunpack.c.l.s4 1983009808
      %v366 = vunpack.c.0.s8 %v365
      %v367 = vlaneseq
      %v368 = vshrl.u32 %v367, 7
      %v369 = vsub.s32 %v366, %v368
      %v370 = vrot.slane %v356, %v369
      %v371 = vcombine.high %v363, %v363
      %v372 = vcombine.high %v370, %v370
      %v373 = vcombine.high %v230, %v230
      %v375 = vunpack.c.l.s4 1983009808
      %v376 = vunpack.c.0.s8 %v375
      %v377 = vlaneseq
      %v378 = vshrl.u32 %v377, 7
      %v379 = vsub.s32 %v376, %v378
      %v380 = vrot.slane %v230, %v379
      %v382 = vunpack.c.l.s4 1983009808
      %v383 = vunpack.c.0.s8 %v382
      %v384 = vlaneseq
      %v385 = vshrl.u32 %v384, 7
      %v386 = vsub.s32 %v383, %v385
      %v387 = vrot.slane %v373, %v386
      %v388 = vcombine.high %v380, %v380
      %v389 = vcombine.high %v231, %v231
      %v391 = vunpack.c.l.s4 1983009808
      %v392 = vunpack.c.0.s8 %v391
      %v393 = vlaneseq
      %v394 = vshrl.u32 %v393, 7
      %v395 = vsub.s32 %v392, %v394
      %v396 = vrot.slane %v231, %v395
      %v398 = vunpack.c.l.s4 1983009808
      %v399 = vunpack.c.0.s8 %v398
      %v400 = vlaneseq
      %v401 = vshrl.u32 %v400, 7
      %v402 = vsub.s32 %v399, %v401
      %v403 = vrot.slane %v389, %v402
      %v404 = vcombine.high %v396, %v396
      %v405 = vcombine.high %v403, %v403
      %v406 = vcombine.high %v232, %v232
      %v408 = vunpack.c.l.s4 1983009808
      %v409 = vunpack.c.0.s8 %v408
      %v410 = vlaneseq
      %v411 = vshrl.u32 %v410, 7
      %v412 = vsub.s32 %v409, %v411
      %v413 = vrot.slane %v232, %v412
      %v415 = vunpack.c.l.s4 1983009808
      %v416 = vunpack.c.0.s8 %v415
      %v417 = vlaneseq
      %v418 = vshrl.u32 %v417, 7
      %v419 = vsub.s32 %v416, %v418
      %v420 = vrot.slane %v406, %v419
      %v421 = vcombine.high %v413, %v413
      %v422 = vcombine.high %v233, %v233
      %v424 = vunpack.c.l.s4 1983009808
      %v425 = vunpack.c.0.s8 %v424
      %v426 = vlaneseq
      %v427 = vshrl.u32 %v426, 7
      %v428 = vsub.s32 %v425, %v427
      %v429 = vrot.slane %v233, %v428
      %v431 = vunpack.c.l.s4 1983009808
      %v432 = vunpack.c.0.s8 %v431
      %v433 = vlaneseq
      %v434 = vshrl.u32 %v433, 7
      %v435 = vsub.s32 %v432, %v434
      %v436 = vrot.slane %v422, %v435
      %v437 = vcombine.high %v429, %v429
      %v438 = vcombine.high %v436, %v436
      %v439 = vcombine.high %v234, %v234
      %v441 = vunpack.c.l.s4 1983009808
      %v442 = vunpack.c.0.s8 %v441
      %v443 = vlaneseq
      %v444 = vshrl.u32 %v443, 7
      %v445 = vsub.s32 %v442, %v444
      %v446 = vrot.slane %v234, %v445
      %v448 = vunpack.c.l.s4 1983009808
      %v449 = vunpack.c.0.s8 %v448
      %v450 = vlaneseq
      %v451 = vshrl.u32 %v450, 7
      %v452 = vsub.s32 %v449, %v451
      %v453 = vrot.slane %v439, %v452
      %v454 = vcombine.high %v446, %v446
      %v455 = vcombine.high %v235, %v235
      %v457 = vunpack.c.l.s4 1983009808
      %v458 = vunpack.c.0.s8 %v457
      %v459 = vlaneseq
      %v460 = vshrl.u32 %v459, 7
      %v461 = vsub.s32 %v458, %v460
      %v462 = vrot.slane %v235, %v461
      %v464 = vunpack.c.l.s4 1983009808
      %v465 = vunpack.c.0.s8 %v464
      %v466 = vlaneseq
      %v467 = vshrl.u32 %v466, 7
      %v468 = vsub.s32 %v465, %v467
      %v469 = vrot.slane %v455, %v468
      %v470 = vcombine.high %v462, %v462
      %v471 = vcombine.high %v469, %v469
      %v472 = vcombine.high %v236, %v236
      %v474 = vunpack.c.l.s4 1983009808
      %v475 = vunpack.c.0.s8 %v474
      %v476 = vlaneseq
      %v477 = vshrl.u32 %v476, 7
      %v478 = vsub.s32 %v475, %v477
      %v479 = vrot.slane %v236, %v478
      %v481 = vunpack.c.l.s4 1983009808
      %v482 = vunpack.c.0.s8 %v481
      %v483 = vlaneseq
      %v484 = vshrl.u32 %v483, 7
      %v485 = vsub.s32 %v482, %v484
      %v486 = vrot.slane %v472, %v485
      %v487 = vcombine.high %v479, %v479
      %v488 = vcombine.high %v237, %v237
      %v490 = vunpack.c.l.s4 1983009808
      %v491 = vunpack.c.0.s8 %v490
      %v492 = vlaneseq
      %v493 = vshrl.u32 %v492, 7
      %v494 = vsub.s32 %v491, %v493
      %v495 = vrot.slane %v237, %v494
      %v497 = vunpack.c.l.s4 1983009808
      %v498 = vunpack.c.0.s8 %v497
      %v499 = vlaneseq
      %v500 = vshrl.u32 %v499, 7
      %v501 = vsub.s32 %v498, %v500
      %v502 = vrot.slane %v488, %v501
      %v503 = vcombine.high %v495, %v495
      %v504 = vcombine.high %v502, %v502
      %v505 = vcombine.high %v238, %v238
      %v507 = vunpack.c.l.s4 1983009808
      %v508 = vunpack.c.0.s8 %v507
      %v509 = vlaneseq
      %v510 = vshrl.u32 %v509, 7
      %v511 = vsub.s32 %v508, %v510
      %v512 = vrot.slane %v238, %v511
      %v514 = vunpack.c.l.s4 1983009808
      %v515 = vunpack.c.0.s8 %v514
      %v516 = vlaneseq
      %v517 = vshrl.u32 %v516, 7
      %v518 = vsub.s32 %v515, %v517
      %v519 = vrot.slane %v505, %v518
      %v520 = vcombine.high %v512, %v512
      %v521 = vcombine.high %v239, %v239
      %v523 = vunpack.c.l.s4 1983009808
      %v524 = vunpack.c.0.s8 %v523
      %v525 = vlaneseq
      %v526 = vshrl.u32 %v525, 7
      %v527 = vsub.s32 %v524, %v526
      %v528 = vrot.slane %v239, %v527
      %v530 = vunpack.c.l.s4 1983009808
      %v531 = vunpack.c.0.s8 %v530
      %v532 = vlaneseq
      %v533 = vshrl.u32 %v532, 7
      %v534 = vsub.s32 %v531, %v533
      %v535 = vrot.slane %v521, %v534
      %v536 = vcombine.high %v528, %v528
      %v537 = vcombine.high %v535, %v535
      %v538 = vcombine.high %v240, %v240
      %v540 = vunpack.c.l.s4 1983009808
      %v541 = vunpack.c.0.s8 %v540
      %v542 = vlaneseq
      %v543 = vshrl.u32 %v542, 7
      %v544 = vsub.s32 %v541, %v543
      %v545 = vrot.slane %v240, %v544
      %v547 = vunpack.c.l.s4 1983009808
      %v548 = vunpack.c.0.s8 %v547
      %v549 = vlaneseq
      %v550 = vshrl.u32 %v549, 7
      %v551 = vsub.s32 %v548, %v550
      %v552 = vrot.slane %v538, %v551
      %v553 = vcombine.high %v545, %v545
      %v554 = vcombine.high %v241, %v241
      %v556 = vunpack.c.l.s4 1983009808
      %v557 = vunpack.c.0.s8 %v556
      %v558 = vlaneseq
      %v559 = vshrl.u32 %v558, 7
      %v560 = vsub.s32 %v557, %v559
      %v561 = vrot.slane %v241, %v560
      %v563 = vunpack.c.l.s4 1983009808
      %v564 = vunpack.c.0.s8 %v563
      %v565 = vlaneseq
      %v566 = vshrl.u32 %v565, 7
      %v567 = vsub.s32 %v564, %v566
      %v568 = vrot.slane %v554, %v567
      %v569 = vcombine.high %v561, %v561
      %v570 = vcombine.high %v568, %v568
      %v571 = vcombine.high %v242, %v242
      %v573 = vunpack.c.l.s4 1983009808
      %v574 = vunpack.c.0.s8 %v573
      %v575 = vlaneseq
      %v576 = vshrl.u32 %v575, 7
      %v577 = vsub.s32 %v574, %v576
      %v578 = vrot.slane %v242, %v577
      %v580 = vunpack.c.l.s4 1983009808
      %v581 = vunpack.c.0.s8 %v580
      %v582 = vlaneseq
      %v583 = vshrl.u32 %v582, 7
      %v584 = vsub.s32 %v581, %v583
      %v585 = vrot.slane %v571, %v584
      %v586 = vcombine.high %v578, %v578
      %v587 = vcombine.high %v243, %v243
      %v589 = vunpack.c.l.s4 1983009808
      %v590 = vunpack.c.0.s8 %v589
      %v591 = vlaneseq
      %v592 = vshrl.u32 %v591, 7
      %v593 = vsub.s32 %v590, %v592
      %v594 = vrot.slane %v243, %v593
      %v596 = vunpack.c.l.s4 1983009808
      %v597 = vunpack.c.0.s8 %v596
      %v598 = vlaneseq
      %v599 = vshrl.u32 %v598, 7
      %v600 = vsub.s32 %v597, %v599
      %v601 = vrot.slane %v587, %v600
      %v602 = vcombine.high %v594, %v594
      %v603 = vcombine.high %v601, %v601
      %v604 = vcombine.high %v244, %v244
      %v606 = vunpack.c.l.s4 1983009808
      %v607 = vunpack.c.0.s8 %v606
      %v608 = vlaneseq
      %v609 = vshrl.u32 %v608, 7
      %v610 = vsub.s32 %v607, %v609
      %v611 = vrot.slane %v244, %v610
      %v613 = vunpack.c.l.s4 1983009808
      %v614 = vunpack.c.0.s8 %v613
      %v615 = vlaneseq
      %v616 = vshrl.u32 %v615, 7
      %v617 = vsub.s32 %v614, %v616
      %v618 = vrot.slane %v604, %v617
      %v619 = vcombine.high %v611, %v611
      %v620 = vcombine.high %v245, %v245
      %v622 = vunpack.c.l.s4 1983009808
      %v623 = vunpack.c.0.s8 %v622
      %v624 = vlaneseq
      %v625 = vshrl.u32 %v624, 7
      %v626 = vsub.s32 %v623, %v625
      %v627 = vrot.slane %v245, %v626
      %v629 = vunpack.c.l.s4 1983009808
      %v630 = vunpack.c.0.s8 %v629
      %v631 = vlaneseq
      %v632 = vshrl.u32 %v631, 7
      %v633 = vsub.s32 %v630, %v632
      %v634 = vrot.slane %v620, %v633
      %v635 = vcombine.high %v627, %v627
      %v636 = vcombine.high %v634, %v634
      %v637 = vcombine.high %v246, %v246
      %v639 = vunpack.c.l.s4 1983009808
      %v640 = vunpack.c.0.s8 %v639
      %v641 = vlaneseq
      %v642 = vshrl.u32 %v641, 7
      %v643 = vsub.s32 %v640, %v642
      %v644 = vrot.slane %v246, %v643
      %v646 = vunpack.c.l.s4 1983009808
      %v647 = vunpack.c.0.s8 %v646
      %v648 = vlaneseq
      %v649 = vshrl.u32 %v648, 7
      %v650 = vsub.s32 %v647, %v649
      %v651 = vrot.slane %v637, %v650
      %v652 = vcombine.high %v644, %v644
      %v653 = vcombine.high %v247, %v247
      %v655 = vunpack.c.l.s4 1983009808
      %v656 = vunpack.c.0.s8 %v655
      %v657 = vlaneseq
      %v658 = vshrl.u32 %v657, 7
      %v659 = vsub.s32 %v656, %v658
      %v660 = vrot.slane %v247, %v659
      %v662 = vunpack.c.l.s4 1983009808
      %v663 = vunpack.c.0.s8 %v662
      %v664 = vlaneseq
      %v665 = vshrl.u32 %v664, 7
      %v666 = vsub.s32 %v663, %v665
      %v667 = vrot.slane %v653, %v666
      %v668 = vcombine.high %v660, %v660
      %v669 = vcombine.high %v667, %v667
      %v670 = vcombine.high %v248, %v248
      %v672 = vunpack.c.l.s4 1983009808
      %v673 = vunpack.c.0.s8 %v672
      %v674 = vlaneseq
      %v675 = vshrl.u32 %v674, 7
      %v676 = vsub.s32 %v673, %v675
      %v677 = vrot.slane %v248, %v676
      %v679 = vunpack.c.l.s4 1983009808
      %v680 = vunpack.c.0.s8 %v679
      %v681 = vlaneseq
      %v682 = vshrl.u32 %v681, 7
      %v683 = vsub.s32 %v680, %v682
      %v684 = vrot.slane %v670, %v683
      %v685 = vcombine.high %v677, %v677
      %v686 = vcombine.high %v249, %v249
      %v688 = vunpack.c.l.s4 1983009808
      %v689 = vunpack.c.0.s8 %v688
      %v690 = vlaneseq
      %v691 = vshrl.u32 %v690, 7
      %v692 = vsub.s32 %v689, %v691
      %v693 = vrot.slane %v249, %v692
      %v695 = vunpack.c.l.s4 1983009808
      %v696 = vunpack.c.0.s8 %v695
      %v697 = vlaneseq
      %v698 = vshrl.u32 %v697, 7
      %v699 = vsub.s32 %v696, %v698
      %v700 = vrot.slane %v686, %v699
      %v701 = vcombine.high %v693, %v693
      %v702 = vcombine.high %v700, %v700
      %v703 = vcombine.high %v250, %v250
      %v705 = vunpack.c.l.s4 1983009808
      %v706 = vunpack.c.0.s8 %v705
      %v707 = vlaneseq
      %v708 = vshrl.u32 %v707, 7
      %v709 = vsub.s32 %v706, %v708
      %v710 = vrot.slane %v250, %v709
      %v712 = vunpack.c.l.s4 1983009808
      %v713 = vunpack.c.0.s8 %v712
      %v714 = vlaneseq
      %v715 = vshrl.u32 %v714, 7
      %v716 = vsub.s32 %v713, %v715
      %v717 = vrot.slane %v703, %v716
      %v718 = vcombine.high %v710, %v710
      %v719 = vcombine.high %v251, %v251
      %v721 = vunpack.c.l.s4 1983009808
      %v722 = vunpack.c.0.s8 %v721
      %v723 = vlaneseq
      %v724 = vshrl.u32 %v723, 7
      %v725 = vsub.s32 %v722, %v724
      %v726 = vrot.slane %v251, %v725
      %v728 = vunpack.c.l.s4 1983009808
      %v729 = vunpack.c.0.s8 %v728
      %v730 = vlaneseq
      %v731 = vshrl.u32 %v730, 7
      %v732 = vsub.s32 %v729, %v731
      %v733 = vrot.slane %v719, %v732
      %v734 = vcombine.high %v726, %v726
      %v735 = vcombine.high %v733, %v733
      %v736 = vcombine.high %v252, %v252
      %v738 = vunpack.c.l.s4 1983009808
      %v739 = vunpack.c.0.s8 %v738
      %v740 = vlaneseq
      %v741 = vshrl.u32 %v740, 7
      %v742 = vsub.s32 %v739, %v741
      %v743 = vrot.slane %v252, %v742
      %v745 = vunpack.c.l.s4 1983009808
      %v746 = vunpack.c.0.s8 %v745
      %v747 = vlaneseq
      %v748 = vshrl.u32 %v747, 7
      %v749 = vsub.s32 %v746, %v748
      %v750 = vrot.slane %v736, %v749
      %v751 = vcombine.high %v743, %v743
      %v752 = vcombine.high %v321, %v321
      %v753 = vcombine.high %v354, %v354
      %v754 = vcombine.high %v387, %v387
      %v755 = vcombine.high %v420, %v420
      %v756 = vcombine.high %v453, %v453
      %v757 = vcombine.high %v486, %v486
      %v758 = vcombine.high %v519, %v519
      %v759 = vcombine.high %v552, %v552
      %v760 = vcombine.high %v585, %v585
      %v761 = vcombine.high %v618, %v618
      %v762 = vcombine.high %v651, %v651
      %v763 = vcombine.high %v684, %v684
      %v764 = vcombine.high %v717, %v717
      %v765 = vcombine.high %v750, %v750
      %vm766 = vcmask 1040384
      %vm767 = vcmask 1042434
      %vm768 = vmor %vm766, %vm767
      %vm769 = vcmask 1044484
      %vm770 = vmor %vm768, %vm769
      %vm771 = vcmask 1046534
      %vm772 = vmor %vm770, %vm771
      %v773 = vrot.slane %v297, 7
      %v774 = vrot.slane %v773, 2
      %v775 = vrot.slane %v305, 7
      %v776 = vsel %vm772, %v774, %v775
      %v777 = vrot.slane %v775, 2
      %v778 = vrot.slane %v304, 7
      %v779 = vsel %vm772, %v777, %v778
      %v780 = vrot.slane %v778, 2
      %v781 = vrot.slane %v306, 7
      %v782 = vsel %vm772, %v780, %v781
      %v783 = vrot.slane %v781, 2
      %v784 = vrot.slane %v314, 7
      %v785 = vsel %vm772, %v783, %v784
      %v786 = vrot.slane %v784, 2
      %v787 = vrot.slane %v322, 7
      %v788 = vsel %vm772, %v786, %v787
      %v789 = vrot.slane %v787, 2
      %v790 = vrot.slane %v321, 7
      %v791 = vsel %vm772, %v789, %v790
      %v792 = vrot.slane %v790, 2
      %v793 = vrot.slane %v752, 7
      %v794 = vsel %vm772, %v792, %v793
      %v795 = vrot.slane %v330, 7
      %v796 = vrot.slane %v795, 2
      %v797 = vrot.slane %v338, 7
      %v798 = vsel %vm772, %v796, %v797
      %v799 = vrot.slane %v797, 2
      %v800 = vrot.slane %v337, 7
      %v801 = vsel %vm772, %v799, %v800
      %v802 = vrot.slane %v800, 2
      %v803 = vrot.slane %v339, 7
      %v804 = vsel %vm772, %v802, %v803
      %v805 = vrot.slane %v803, 2
      %v806 = vrot.slane %v347, 7
      %v807 = vsel %vm772, %v805, %v806
      %v808 = vrot.slane %v806, 2
      %v809 = vrot.slane %v355, 7
      %v810 = vsel %vm772, %v808, %v809
      %v811 = vrot.slane %v809, 2
      %v812 = vrot.slane %v354, 7
      %v813 = vsel %vm772, %v811, %v812
      %v814 = vrot.slane %v812, 2
      %v815 = vrot.slane %v753, 7
      %v816 = vsel %vm772, %v814, %v815
      %v817 = vrot.slane %v363, 7
      %v818 = vrot.slane %v817, 2
      %v819 = vrot.slane %v371, 7
      %v820 = vsel %vm772, %v818, %v819
      %v821 = vrot.slane %v819, 2
      %v822 = vrot.slane %v370, 7
      %v823 = vsel %vm772, %v821, %v822
      %v824 = vrot.slane %v822, 2
      %v825 = vrot.slane %v372, 7
      %v826 = vsel %vm772, %v824, %v825
      %v827 = vrot.slane %v825, 2
      %v828 = vrot.slane %v380, 7
      %v829 = vsel %vm772, %v827, %v828
      %v830 = vrot.slane %v828, 2
      %v831 = vrot.slane %v388, 7
      %v832 = vsel %vm772, %v830, %v831
      %v833 = vrot.slane %v831, 2
      %v834 = vrot.slane %v387, 7
      %v835 = vsel %vm772, %v833, %v834
      %v836 = vrot.slane %v834, 2
      %v837 = vrot.slane %v754, 7
      %v838 = vsel %vm772, %v836, %v837
      %v839 = vrot.slane %v396, 7
      %v840 = vrot.slane %v839, 2
      %v841 = vrot.slane %v404, 7
      %v842 = vsel %vm772, %v840, %v841
      %v843 = vrot.slane %v841, 2
      %v844 = vrot.slane %v403, 7
      %v845 = vsel %vm772, %v843, %v844
      %v846 = vrot.slane %v844, 2
      %v847 = vrot.slane %v405, 7
      %v848 = vsel %vm772, %v846, %v847
      %v849 = vrot.slane %v847, 2
      %v850 = vrot.slane %v413, 7
      %v851 = vsel %vm772, %v849, %v850
      %v852 = vrot.slane %v850, 2
      %v853 = vrot.slane %v421, 7
      %v854 = vsel %vm772, %v852, %v853
      %v855 = vrot.slane %v853, 2
      %v856 = vrot.slane %v420, 7
      %v857 = vsel %vm772, %v855, %v856
      %v858 = vrot.slane %v856, 2
      %v859 = vrot.slane %v755, 7
      %v860 = vsel %vm772, %v858, %v859
      %v861 = vrot.slane %v429, 7
      %v862 = vrot.slane %v861, 2
      %v863 = vrot.slane %v437, 7
      %v864 = vsel %vm772, %v862, %v863
      %v865 = vrot.slane %v863, 2
      %v866 = vrot.slane %v436, 7
      %v867 = vsel %vm772, %v865, %v866
      %v868 = vrot.slane %v866, 2
      %v869 = vrot.slane %v438, 7
      %v870 = vsel %vm772, %v868, %v869
      %v871 = vrot.slane %v869, 2
      %v872 = vrot.slane %v446, 7
      %v873 = vsel %vm772, %v871, %v872
      %v874 = vrot.slane %v872, 2
      %v875 = vrot.slane %v454, 7
      %v876 = vsel %vm772, %v874, %v875
      %v877 = vrot.slane %v875, 2
      %v878 = vrot.slane %v453, 7
      %v879 = vsel %vm772, %v877, %v878
      %v880 = vrot.slane %v878, 2
      %v881 = vrot.slane %v756, 7
      %v882 = vsel %vm772, %v880, %v881
      %v883 = vrot.slane %v462, 7
      %v884 = vrot.slane %v883, 2
      %v885 = vrot.slane %v470, 7
      %v886 = vsel %vm772, %v884, %v885
      %v887 = vrot.slane %v885, 2
      %v888 = vrot.slane %v469, 7
      %v889 = vsel %vm772, %v887, %v888
      %v890 = vrot.slane %v888, 2
      %v891 = vrot.slane %v471, 7
      %v892 = vsel %vm772, %v890, %v891
      %v893 = vrot.slane %v891, 2
      %v894 = vrot.slane %v479, 7
      %v895 = vsel %vm772, %v893, %v894
      %v896 = vrot.slane %v894, 2
      %v897 = vrot.slane %v487, 7
      %v898 = vsel %vm772, %v896, %v897
      %v899 = vrot.slane %v897, 2
      %v900 = vrot.slane %v486, 7
      %v901 = vsel %vm772, %v899, %v900
      %v902 = vrot.slane %v900, 2
      %v903 = vrot.slane %v757, 7
      %v904 = vsel %vm772, %v902, %v903
      %v905 = vrot.slane %v495, 7
      %v906 = vrot.slane %v905, 2
      %v907 = vrot.slane %v503, 7
      %v908 = vsel %vm772, %v906, %v907
      %v909 = vrot.slane %v907, 2
      %v910 = vrot.slane %v502, 7
      %v911 = vsel %vm772, %v909, %v910
      %v912 = vrot.slane %v910, 2
      %v913 = vrot.slane %v504, 7
      %v914 = vsel %vm772, %v912, %v913
      %v915 = vrot.slane %v913, 2
      %v916 = vrot.slane %v512, 7
      %v917 = vsel %vm772, %v915, %v916
      %v918 = vrot.slane %v916, 2
      %v919 = vrot.slane %v520, 7
      %v920 = vsel %vm772, %v918, %v919
      %v921 = vrot.slane %v919, 2
      %v922 = vrot.slane %v519, 7
      %v923 = vsel %vm772, %v921, %v922
      %v924 = vrot.slane %v922, 2
      %v925 = vrot.slane %v758, 7
      %v926 = vsel %vm772, %v924, %v925
      %v927 = vrot.slane %v528, 7
      %v928 = vrot.slane %v927, 2
      %v929 = vrot.slane %v536, 7
      %v930 = vsel %vm772, %v928, %v929
      %v931 = vrot.slane %v929, 2
      %v932 = vrot.slane %v535, 7
      %v933 = vsel %vm772, %v931, %v932
      %v934 = vrot.slane %v932, 2
      %v935 = vrot.slane %v537, 7
      %v936 = vsel %vm772, %v934, %v935
      %v937 = vrot.slane %v935, 2
      %v938 = vrot.slane %v545, 7
      %v939 = vsel %vm772, %v937, %v938
      %v940 = vrot.slane %v938, 2
      %v941 = vrot.slane %v553, 7
      %v942 = vsel %vm772, %v940, %v941
      %v943 = vrot.slane %v941, 2
      %v944 = vrot.slane %v552, 7
      %v945 = vsel %vm772, %v943, %v944
      %v946 = vrot.slane %v944, 2
      %v947 = vrot.slane %v759, 7
      %v948 = vsel %vm772, %v946, %v947
      %v949 = vrot.slane %v561, 7
      %v950 = vrot.slane %v949, 2
      %v951 = vrot.slane %v569, 7
      %v952 = vsel %vm772, %v950, %v951
      %v953 = vrot.slane %v951, 2
      %v954 = vrot.slane %v568, 7
      %v955 = vsel %vm772, %v953, %v954
      %v956 = vrot.slane %v954, 2
      %v957 = vrot.slane %v570, 7
      %v958 = vsel %vm772, %v956, %v957
      %v959 = vrot.slane %v957, 2
      %v960 = vrot.slane %v578, 7
      %v961 = vsel %vm772, %v959, %v960
      %v962 = vrot.slane %v960, 2
      %v963 = vrot.slane %v586, 7
      %v964 = vsel %vm772, %v962, %v963
      %v965 = vrot.slane %v963, 2
      %v966 = vrot.slane %v585, 7
      %v967 = vsel %vm772, %v965, %v966
      %v968 = vrot.slane %v966, 2
      %v969 = vrot.slane %v760, 7
      %v970 = vsel %vm772, %v968, %v969
      %v971 = vrot.slane %v594, 7
      %v972 = vrot.slane %v971, 2
      %v973 = vrot.slane %v602, 7
      %v974 = vsel %vm772, %v972, %v973
      %v975 = vrot.slane %v973, 2
      %v976 = vrot.slane %v601, 7
      %v977 = vsel %vm772, %v975, %v976
      %v978 = vrot.slane %v976, 2
      %v979 = vrot.slane %v603, 7
      %v980 = vsel %vm772, %v978, %v979
      %v981 = vrot.slane %v979, 2
      %v982 = vrot.slane %v611, 7
      %v983 = vsel %vm772, %v981, %v982
      %v984 = vrot.slane %v982, 2
      %v985 = vrot.slane %v619, 7
      %v986 = vsel %vm772, %v984, %v985
      %v987 = vrot.slane %v985, 2
      %v988 = vrot.slane %v618, 7
      %v989 = vsel %vm772, %v987, %v988
      %v990 = vrot.slane %v988, 2
      %v991 = vrot.slane %v761, 7
      %v992 = vsel %vm772, %v990, %v991
      %v993 = vrot.slane %v627, 7
      %v994 = vrot.slane %v993, 2
      %v995 = vrot.slane %v635, 7
      %v996 = vsel %vm772, %v994, %v995
      %v997 = vrot.slane %v995, 2
      %v998 = vrot.slane %v634, 7
      %v999 = vsel %vm772, %v997, %v998
      %v1000 = vrot.slane %v998, 2
      %v1001 = vrot.slane %v636, 7
      %v1002 = vsel %vm772, %v1000, %v1001
      %v1003 = vrot.slane %v1001, 2
      %v1004 = vrot.slane %v644, 7
      %v1005 = vsel %vm772, %v1003, %v1004
      %v1006 = vrot.slane %v1004, 2
      %v1007 = vrot.slane %v652, 7
      %v1008 = vsel %vm772, %v1006, %v1007
      %v1009 = vrot.slane %v1007, 2
      %v1010 = vrot.slane %v651, 7
      %v1011 = vsel %vm772, %v1009, %v1010
      %v1012 = vrot.slane %v1010, 2
      %v1013 = vrot.slane %v762, 7
      %v1014 = vsel %vm772, %v1012, %v1013
      %v1015 = vrot.slane %v660, 7
      %v1016 = vrot.slane %v1015, 2
      %v1017 = vrot.slane %v668, 7
      %v1018 = vsel %vm772, %v1016, %v1017
      %v1019 = vrot.slane %v1017, 2
      %v1020 = vrot.slane %v667, 7
      %v1021 = vsel %vm772, %v1019, %v1020
      %v1022 = vrot.slane %v1020, 2
      %v1023 = vrot.slane %v669, 7
      %v1024 = vsel %vm772, %v1022, %v1023
      %v1025 = vrot.slane %v1023, 2
      %v1026 = vrot.slane %v677, 7
      %v1027 = vsel %vm772, %v1025, %v1026
      %v1028 = vrot.slane %v1026, 2
      %v1029 = vrot.slane %v685, 7
      %v1030 = vsel %vm772, %v1028, %v1029
      %v1031 = vrot.slane %v1029, 2
      %v1032 = vrot.slane %v684, 7
      %v1033 = vsel %vm772, %v1031, %v1032
      %v1034 = vrot.slane %v1032, 2
      %v1035 = vrot.slane %v763, 7
      %v1036 = vsel %vm772, %v1034, %v1035
      %v1037 = vrot.slane %v693, 7
      %v1038 = vrot.slane %v1037, 2
      %v1039 = vrot.slane %v701, 7
      %v1040 = vsel %vm772, %v1038, %v1039
      %v1041 = vrot.slane %v1039, 2
      %v1042 = vrot.slane %v700, 7
      %v1043 = vsel %vm772, %v1041, %v1042
      %v1044 = vrot.slane %v1042, 2
      %v1045 = vrot.slane %v702, 7
      %v1046 = vsel %vm772, %v1044, %v1045
      %v1047 = vrot.slane %v1045, 2
      %v1048 = vrot.slane %v710, 7
      %v1049 = vsel %vm772, %v1047, %v1048
      %v1050 = vrot.slane %v1048, 2
      %v1051 = vrot.slane %v718, 7
      %v1052 = vsel %vm772, %v1050, %v1051
      %v1053 = vrot.slane %v1051, 2
      %v1054 = vrot.slane %v717, 7
      %v1055 = vsel %vm772, %v1053, %v1054
      %v1056 = vrot.slane %v1054, 2
      %v1057 = vrot.slane %v764, 7
      %v1058 = vsel %vm772, %v1056, %v1057
      %v1059 = vrot.slane %v726, 7
      %v1060 = vrot.slane %v1059, 2
      %v1061 = vrot.slane %v734, 7
      %v1062 = vsel %vm772, %v1060, %v1061
      %v1063 = vrot.slane %v1061, 2
      %v1064 = vrot.slane %v733, 7
      %v1065 = vsel %vm772, %v1063, %v1064
      %v1066 = vrot.slane %v1064, 2
      %v1067 = vrot.slane %v735, 7
      %v1068 = vsel %vm772, %v1066, %v1067
      %v1069 = vrot.slane %v1067, 2
      %v1070 = vrot.slane %v743, 7
      %v1071 = vsel %vm772, %v1069, %v1070
      %v1072 = vrot.slane %v1070, 2
      %v1073 = vrot.slane %v751, 7
      %v1074 = vsel %vm772, %v1072, %v1073
      %v1075 = vrot.slane %v1073, 2
      %v1076 = vrot.slane %v750, 7
      %v1077 = vsel %vm772, %v1075, %v1076
      %v1078 = vrot.slane %v1076, 2
      %v1079 = vrot.slane %v765, 7
      %v1080 = vsel %vm772, %v1078, %v1079
      %v1083 = vcombine.high %v253, %v253
      %v1085 = vunpack.c.l.s4 1983009808
      %v1086 = vunpack.c.0.s8 %v1085
      %v1087 = vlaneseq
      %v1088 = vshrl.u32 %v1087, 7
      %v1089 = vsub.s32 %v1086, %v1088
      %v1090 = vrot.slane %v253, %v1089
      %v1092 = vunpack.c.l.s4 1983009808
      %v1093 = vunpack.c.0.s8 %v1092
      %v1094 = vlaneseq
      %v1095 = vshrl.u32 %v1094, 7
      %v1096 = vsub.s32 %v1093, %v1095
      %v1097 = vrot.slane %v1083, %v1096
      %v1098 = vcombine.high %v1090, %v1090
      %v1099 = vcombine.high %v1097, %v1097
      %v1100 = vcombine.high %v254, %v254
      %v1102 = vunpack.c.l.s4 1983009808
      %v1103 = vunpack.c.0.s8 %v1102
      %v1104 = vlaneseq
      %v1105 = vshrl.u32 %v1104, 7
      %v1106 = vsub.s32 %v1103, %v1105
      %v1107 = vrot.slane %v254, %v1106
      %v1109 = vunpack.c.l.s4 1983009808
      %v1110 = vunpack.c.0.s8 %v1109
      %v1111 = vlaneseq
      %v1112 = vshrl.u32 %v1111, 7
      %v1113 = vsub.s32 %v1110, %v1112
      %v1114 = vrot.slane %v1100, %v1113
      %v1115 = vcombine.high %v1107, %v1107
      %v1116 = vcombine.high %v1114, %v1114
      %v1117 = vrot.slane %v1090, 7
      %v1118 = vrot.slane %v1117, 2
      %v1119 = vrot.slane %v1098, 7
      %v1120 = vsel %vm772, %v1118, %v1119
      %v1121 = vrot.slane %v1119, 2
      %v1122 = vrot.slane %v1097, 7
      %v1123 = vsel %vm772, %v1121, %v1122
      %v1124 = vrot.slane %v1122, 2
      %v1125 = vrot.slane %v1099, 7
      %v1126 = vsel %vm772, %v1124, %v1125
      %v1127 = vrot.slane %v1125, 2
      %v1128 = vrot.slane %v1107, 7
      %v1129 = vsel %vm772, %v1127, %v1128
      %v1130 = vrot.slane %v1128, 2
      %v1131 = vrot.slane %v1115, 7
      %v1132 = vsel %vm772, %v1130, %v1131
      %v1133 = vrot.slane %v1131, 2
      %v1134 = vrot.slane %v1114, 7
      %v1135 = vsel %vm772, %v1133, %v1134
      %v1136 = vrot.slane %v1134, 2
      %v1137 = vrot.slane %v1116, 7
      %v1138 = vsel %vm772, %v1136, %v1137
      %v1141 = vcombine.high %v255, %v255
      %v1143 = vunpack.c.l.s4 1983009808
      %v1144 = vunpack.c.0.s8 %v1143
      %v1145 = vlaneseq
      %v1146 = vshrl.u32 %v1145, 7
      %v1147 = vsub.s32 %v1144, %v1146
      %v1148 = vrot.slane %v255, %v1147
      %v1150 = vunpack.c.l.s4 1983009808
      %v1151 = vunpack.c.0.s8 %v1150
      %v1152 = vlaneseq
      %v1153 = vshrl.u32 %v1152, 7
      %v1154 = vsub.s32 %v1151, %v1153
      %v1155 = vrot.slane %v1141, %v1154
      %v1156 = vcombine.high %v1148, %v1148
      %v1157 = vcombine.high %v1155, %v1155
      %v1158 = vcombine.high %v256, %v256
      %v1160 = vunpack.c.l.s4 1983009808
      %v1161 = vunpack.c.0.s8 %v1160
      %v1162 = vlaneseq
      %v1163 = vshrl.u32 %v1162, 7
      %v1164 = vsub.s32 %v1161, %v1163
      %v1165 = vrot.slane %v256, %v1164
      %v1167 = vunpack.c.l.s4 1983009808
      %v1168 = vunpack.c.0.s8 %v1167
      %v1169 = vlaneseq
      %v1170 = vshrl.u32 %v1169, 7
      %v1171 = vsub.s32 %v1168, %v1170
      %v1172 = vrot.slane %v1158, %v1171
      %v1173 = vcombine.high %v1165, %v1165
      %v1174 = vcombine.high %v1172, %v1172
      %v1175 = vrot.slane %v1148, 7
      %v1176 = vrot.slane %v1175, 2
      %v1177 = vrot.slane %v1156, 7
      %v1178 = vsel %vm772, %v1176, %v1177
      %v1179 = vrot.slane %v1177, 2
      %v1180 = vrot.slane %v1155, 7
      %v1181 = vsel %vm772, %v1179, %v1180
      %v1182 = vrot.slane %v1180, 2
      %v1183 = vrot.slane %v1157, 7
      %v1184 = vsel %vm772, %v1182, %v1183
      %v1185 = vrot.slane %v1183, 2
      %v1186 = vrot.slane %v1165, 7
      %v1187 = vsel %vm772, %v1185, %v1186
      %v1188 = vrot.slane %v1186, 2
      %v1189 = vrot.slane %v1173, 7
      %v1190 = vsel %vm772, %v1188, %v1189
      %v1191 = vrot.slane %v1189, 2
      %v1192 = vrot.slane %v1172, 7
      %v1193 = vsel %vm772, %v1191, %v1192
      %v1194 = vrot.slane %v1192, 2
      %v1195 = vrot.slane %v1174, 7
      %v1196 = vsel %vm772, %v1194, %v1195
      %v1197 = vcombine.low %v297, %v305
      %v1198 = vcombine.low %v304, %v306
      %v1200 = vunpack.c.l.s4 1983009808
      %v1201 = vunpack.c.0.s8 %v1200
      %v1202 = vlaneseq
      %v1203 = vshrl.u32 %v1202, 7
      %v1204 = vsub.s32 %v1201, %v1203
      %v1205 = vrot.slane %v1197, %v1204
      %v1207 = vunpack.c.l.s4 1983009808
      %v1208 = vunpack.c.0.s8 %v1207
      %v1209 = vlaneseq
      %v1210 = vshrl.u32 %v1209, 7
      %v1211 = vsub.s32 %v1208, %v1210
      %v1212 = vrot.slane %v1198, %v1211
      %v1213 = vcombine.low %v1205, %v1212
      %v1214 = vcombine.low %v314, %v322
      %v1215 = vcombine.low %v321, %v330
      %v1217 = vunpack.c.l.s4 1983009808
      %v1218 = vunpack.c.0.s8 %v1217
      %v1219 = vlaneseq
      %v1220 = vshrl.u32 %v1219, 7
      %v1221 = vsub.s32 %v1218, %v1220
      %v1222 = vrot.slane %v1214, %v1221
      %v1224 = vunpack.c.l.s4 1983009808
      %v1225 = vunpack.c.0.s8 %v1224
      %v1226 = vlaneseq
      %v1227 = vshrl.u32 %v1226, 7
      %v1228 = vsub.s32 %v1225, %v1227
      %v1229 = vrot.slane %v1215, %v1228
      %v1230 = vcombine.low %v1222, %v1229
      %v1231 = vcombine.low %v338, %v337
      %v1232 = vcombine.low %v339, %v347
      %v1234 = vunpack.c.l.s4 1983009808
      %v1235 = vunpack.c.0.s8 %v1234
      %v1236 = vlaneseq
      %v1237 = vshrl.u32 %v1236, 7
      %v1238 = vsub.s32 %v1235, %v1237
      %v1239 = vrot.slane %v1231, %v1238
      %v1241 = vunpack.c.l.s4 1983009808
      %v1242 = vunpack.c.0.s8 %v1241
      %v1243 = vlaneseq
      %v1244 = vshrl.u32 %v1243, 7
      %v1245 = vsub.s32 %v1242, %v1244
      %v1246 = vrot.slane %v1232, %v1245
      %v1247 = vcombine.low %v1239, %v1246
      %v1248 = vcombine.low %v355, %v354
      %v1249 = vcombine.low %v363, %v371
      %v1251 = vunpack.c.l.s4 1983009808
      %v1252 = vunpack.c.0.s8 %v1251
      %v1253 = vlaneseq
      %v1254 = vshrl.u32 %v1253, 7
      %v1255 = vsub.s32 %v1252, %v1254
      %v1256 = vrot.slane %v1248, %v1255
      %v1258 = vunpack.c.l.s4 1983009808
      %v1259 = vunpack.c.0.s8 %v1258
      %v1260 = vlaneseq
      %v1261 = vshrl.u32 %v1260, 7
      %v1262 = vsub.s32 %v1259, %v1261
      %v1263 = vrot.slane %v1249, %v1262
      %v1264 = vcombine.low %v1256, %v1263
      %v1265 = vcombine.low %v370, %v372
      %v1266 = vcombine.low %v380, %v388
      %v1268 = vunpack.c.l.s4 1983009808
      %v1269 = vunpack.c.0.s8 %v1268
      %v1270 = vlaneseq
      %v1271 = vshrl.u32 %v1270, 7
      %v1272 = vsub.s32 %v1269, %v1271
      %v1273 = vrot.slane %v1265, %v1272
      %v1275 = vunpack.c.l.s4 1983009808
      %v1276 = vunpack.c.0.s8 %v1275
      %v1277 = vlaneseq
      %v1278 = vshrl.u32 %v1277, 7
      %v1279 = vsub.s32 %v1276, %v1278
      %v1280 = vrot.slane %v1266, %v1279
      %v1281 = vcombine.low %v1273, %v1280
      %v1282 = vcombine.low %v387, %v396
      %v1283 = vcombine.low %v404, %v403
      %v1285 = vunpack.c.l.s4 1983009808
      %v1286 = vunpack.c.0.s8 %v1285
      %v1287 = vlaneseq
      %v1288 = vshrl.u32 %v1287, 7
      %v1289 = vsub.s32 %v1286, %v1288
      %v1290 = vrot.slane %v1282, %v1289
      %v1292 = vunpack.c.l.s4 1983009808
      %v1293 = vunpack.c.0.s8 %v1292
      %v1294 = vlaneseq
      %v1295 = vshrl.u32 %v1294, 7
      %v1296 = vsub.s32 %v1293, %v1295
      %v1297 = vrot.slane %v1283, %v1296
      %v1298 = vcombine.low %v1290, %v1297
      %v1299 = vcombine.low %v405, %v413
      %v1300 = vcombine.low %v421, %v420
      %v1302 = vunpack.c.l.s4 1983009808
      %v1303 = vunpack.c.0.s8 %v1302
      %v1304 = vlaneseq
      %v1305 = vshrl.u32 %v1304, 7
      %v1306 = vsub.s32 %v1303, %v1305
      %v1307 = vrot.slane %v1299, %v1306
      %v1309 = vunpack.c.l.s4 1983009808
      %v1310 = vunpack.c.0.s8 %v1309
      %v1311 = vlaneseq
      %v1312 = vshrl.u32 %v1311, 7
      %v1313 = vsub.s32 %v1310, %v1312
      %v1314 = vrot.slane %v1300, %v1313
      %v1315 = vcombine.low %v1307, %v1314
      %v1316 = vcombine.low %v429, %v437
      %v1317 = vcombine.low %v436, %v438
      %v1319 = vunpack.c.l.s4 1983009808
      %v1320 = vunpack.c.0.s8 %v1319
      %v1321 = vlaneseq
      %v1322 = vshrl.u32 %v1321, 7
      %v1323 = vsub.s32 %v1320, %v1322
      %v1324 = vrot.slane %v1316, %v1323
      %v1326 = vunpack.c.l.s4 1983009808
      %v1327 = vunpack.c.0.s8 %v1326
      %v1328 = vlaneseq
      %v1329 = vshrl.u32 %v1328, 7
      %v1330 = vsub.s32 %v1327, %v1329
      %v1331 = vrot.slane %v1317, %v1330
      %v1332 = vcombine.low %v1324, %v1331
      %v1333 = vcombine.low %v446, %v454
      %v1334 = vcombine.low %v453, %v462
      %v1336 = vunpack.c.l.s4 1983009808
      %v1337 = vunpack.c.0.s8 %v1336
      %v1338 = vlaneseq
      %v1339 = vshrl.u32 %v1338, 7
      %v1340 = vsub.s32 %v1337, %v1339
      %v1341 = vrot.slane %v1333, %v1340
      %v1343 = vunpack.c.l.s4 1983009808
      %v1344 = vunpack.c.0.s8 %v1343
      %v1345 = vlaneseq
      %v1346 = vshrl.u32 %v1345, 7
      %v1347 = vsub.s32 %v1344, %v1346
      %v1348 = vrot.slane %v1334, %v1347
      %v1349 = vcombine.low %v1341, %v1348
      %v1350 = vcombine.low %v470, %v469
      %v1351 = vcombine.low %v471, %v479
      %v1353 = vunpack.c.l.s4 1983009808
      %v1354 = vunpack.c.0.s8 %v1353
      %v1355 = vlaneseq
      %v1356 = vshrl.u32 %v1355, 7
      %v1357 = vsub.s32 %v1354, %v1356
      %v1358 = vrot.slane %v1350, %v1357
      %v1360 = vunpack.c.l.s4 1983009808
      %v1361 = vunpack.c.0.s8 %v1360
      %v1362 = vlaneseq
      %v1363 = vshrl.u32 %v1362, 7
      %v1364 = vsub.s32 %v1361, %v1363
      %v1365 = vrot.slane %v1351, %v1364
      %v1366 = vcombine.low %v1358, %v1365
      %v1367 = vcombine.low %v487, %v486
      %v1368 = vcombine.low %v495, %v503
      %v1370 = vunpack.c.l.s4 1983009808
      %v1371 = vunpack.c.0.s8 %v1370
      %v1372 = vlaneseq
      %v1373 = vshrl.u32 %v1372, 7
      %v1374 = vsub.s32 %v1371, %v1373
      %v1375 = vrot.slane %v1367, %v1374
      %v1377 = vunpack.c.l.s4 1983009808
      %v1378 = vunpack.c.0.s8 %v1377
      %v1379 = vlaneseq
      %v1380 = vshrl.u32 %v1379, 7
      %v1381 = vsub.s32 %v1378, %v1380
      %v1382 = vrot.slane %v1368, %v1381
      %v1383 = vcombine.low %v1375, %v1382
      %v1384 = vcombine.low %v502, %v504
      %v1385 = vcombine.low %v512, %v520
      %v1387 = vunpack.c.l.s4 1983009808
      %v1388 = vunpack.c.0.s8 %v1387
      %v1389 = vlaneseq
      %v1390 = vshrl.u32 %v1389, 7
      %v1391 = vsub.s32 %v1388, %v1390
      %v1392 = vrot.slane %v1384, %v1391
      %v1394 = vunpack.c.l.s4 1983009808
      %v1395 = vunpack.c.0.s8 %v1394
      %v1396 = vlaneseq
      %v1397 = vshrl.u32 %v1396, 7
      %v1398 = vsub.s32 %v1395, %v1397
      %v1399 = vrot.slane %v1385, %v1398
      %v1400 = vcombine.low %v1392, %v1399
      %v1401 = vcombine.low %v519, %v528
      %v1402 = vcombine.low %v536, %v535
      %v1404 = vunpack.c.l.s4 1983009808
      %v1405 = vunpack.c.0.s8 %v1404
      %v1406 = vlaneseq
      %v1407 = vshrl.u32 %v1406, 7
      %v1408 = vsub.s32 %v1405, %v1407
      %v1409 = vrot.slane %v1401, %v1408
      %v1411 = vunpack.c.l.s4 1983009808
      %v1412 = vunpack.c.0.s8 %v1411
      %v1413 = vlaneseq
      %v1414 = vshrl.u32 %v1413, 7
      %v1415 = vsub.s32 %v1412, %v1414
      %v1416 = vrot.slane %v1402, %v1415
      %v1417 = vcombine.low %v1409, %v1416
      %v1418 = vcombine.low %v537, %v545
      %v1419 = vcombine.low %v553, %v552
      %v1421 = vunpack.c.l.s4 1983009808
      %v1422 = vunpack.c.0.s8 %v1421
      %v1423 = vlaneseq
      %v1424 = vshrl.u32 %v1423, 7
      %v1425 = vsub.s32 %v1422, %v1424
      %v1426 = vrot.slane %v1418, %v1425
      %v1428 = vunpack.c.l.s4 1983009808
      %v1429 = vunpack.c.0.s8 %v1428
      %v1430 = vlaneseq
      %v1431 = vshrl.u32 %v1430, 7
      %v1432 = vsub.s32 %v1429, %v1431
      %v1433 = vrot.slane %v1419, %v1432
      %v1434 = vcombine.low %v1426, %v1433
      %v1435 = vcombine.low %v561, %v569
      %v1436 = vcombine.low %v568, %v570
      %v1438 = vunpack.c.l.s4 1983009808
      %v1439 = vunpack.c.0.s8 %v1438
      %v1440 = vlaneseq
      %v1441 = vshrl.u32 %v1440, 7
      %v1442 = vsub.s32 %v1439, %v1441
      %v1443 = vrot.slane %v1435, %v1442
      %v1445 = vunpack.c.l.s4 1983009808
      %v1446 = vunpack.c.0.s8 %v1445
      %v1447 = vlaneseq
      %v1448 = vshrl.u32 %v1447, 7
      %v1449 = vsub.s32 %v1446, %v1448
      %v1450 = vrot.slane %v1436, %v1449
      %v1451 = vcombine.low %v1443, %v1450
      %v1452 = vcombine.low %v578, %v586
      %v1453 = vcombine.low %v585, %v594
      %v1455 = vunpack.c.l.s4 1983009808
      %v1456 = vunpack.c.0.s8 %v1455
      %v1457 = vlaneseq
      %v1458 = vshrl.u32 %v1457, 7
      %v1459 = vsub.s32 %v1456, %v1458
      %v1460 = vrot.slane %v1452, %v1459
      %v1462 = vunpack.c.l.s4 1983009808
      %v1463 = vunpack.c.0.s8 %v1462
      %v1464 = vlaneseq
      %v1465 = vshrl.u32 %v1464, 7
      %v1466 = vsub.s32 %v1463, %v1465
      %v1467 = vrot.slane %v1453, %v1466
      %v1468 = vcombine.low %v1460, %v1467
      %v1469 = vcombine.low %v602, %v601
      %v1470 = vcombine.low %v603, %v611
      %v1472 = vunpack.c.l.s4 1983009808
      %v1473 = vunpack.c.0.s8 %v1472
      %v1474 = vlaneseq
      %v1475 = vshrl.u32 %v1474, 7
      %v1476 = vsub.s32 %v1473, %v1475
      %v1477 = vrot.slane %v1469, %v1476
      %v1479 = vunpack.c.l.s4 1983009808
      %v1480 = vunpack.c.0.s8 %v1479
      %v1481 = vlaneseq
      %v1482 = vshrl.u32 %v1481, 7
      %v1483 = vsub.s32 %v1480, %v1482
      %v1484 = vrot.slane %v1470, %v1483
      %v1485 = vcombine.low %v1477, %v1484
      %v1486 = vcombine.low %v619, %v618
      %v1487 = vcombine.low %v627, %v635
      %v1489 = vunpack.c.l.s4 1983009808
      %v1490 = vunpack.c.0.s8 %v1489
      %v1491 = vlaneseq
      %v1492 = vshrl.u32 %v1491, 7
      %v1493 = vsub.s32 %v1490, %v1492
      %v1494 = vrot.slane %v1486, %v1493
      %v1496 = vunpack.c.l.s4 1983009808
      %v1497 = vunpack.c.0.s8 %v1496
      %v1498 = vlaneseq
      %v1499 = vshrl.u32 %v1498, 7
      %v1500 = vsub.s32 %v1497, %v1499
      %v1501 = vrot.slane %v1487, %v1500
      %v1502 = vcombine.low %v1494, %v1501
      %v1503 = vcombine.low %v634, %v636
      %v1504 = vcombine.low %v644, %v652
      %v1506 = vunpack.c.l.s4 1983009808
      %v1507 = vunpack.c.0.s8 %v1506
      %v1508 = vlaneseq
      %v1509 = vshrl.u32 %v1508, 7
      %v1510 = vsub.s32 %v1507, %v1509
      %v1511 = vrot.slane %v1503, %v1510
      %v1513 = vunpack.c.l.s4 1983009808
      %v1514 = vunpack.c.0.s8 %v1513
      %v1515 = vlaneseq
      %v1516 = vshrl.u32 %v1515, 7
      %v1517 = vsub.s32 %v1514, %v1516
      %v1518 = vrot.slane %v1504, %v1517
      %v1519 = vcombine.low %v1511, %v1518
      %v1520 = vcombine.low %v651, %v660
      %v1521 = vcombine.low %v668, %v667
      %v1523 = vunpack.c.l.s4 1983009808
      %v1524 = vunpack.c.0.s8 %v1523
      %v1525 = vlaneseq
      %v1526 = vshrl.u32 %v1525, 7
      %v1527 = vsub.s32 %v1524, %v1526
      %v1528 = vrot.slane %v1520, %v1527
      %v1530 = vunpack.c.l.s4 1983009808
      %v1531 = vunpack.c.0.s8 %v1530
      %v1532 = vlaneseq
      %v1533 = vshrl.u32 %v1532, 7
      %v1534 = vsub.s32 %v1531, %v1533
      %v1535 = vrot.slane %v1521, %v1534
      %v1536 = vcombine.low %v1528, %v1535
      %v1537 = vcombine.low %v669, %v677
      %v1538 = vcombine.low %v685, %v684
      %v1540 = vunpack.c.l.s4 1983009808
      %v1541 = vunpack.c.0.s8 %v1540
      %v1542 = vlaneseq
      %v1543 = vshrl.u32 %v1542, 7
      %v1544 = vsub.s32 %v1541, %v1543
      %v1545 = vrot.slane %v1537, %v1544
      %v1547 = vunpack.c.l.s4 1983009808
      %v1548 = vunpack.c.0.s8 %v1547
      %v1549 = vlaneseq
      %v1550 = vshrl.u32 %v1549, 7
      %v1551 = vsub.s32 %v1548, %v1550
      %v1552 = vrot.slane %v1538, %v1551
      %v1553 = vcombine.low %v1545, %v1552
      %v1554 = vcombine.low %v693, %v701
      %v1555 = vcombine.low %v700, %v702
      %v1557 = vunpack.c.l.s4 1983009808
      %v1558 = vunpack.c.0.s8 %v1557
      %v1559 = vlaneseq
      %v1560 = vshrl.u32 %v1559, 7
      %v1561 = vsub.s32 %v1558, %v1560
      %v1562 = vrot.slane %v1554, %v1561
      %v1564 = vunpack.c.l.s4 1983009808
      %v1565 = vunpack.c.0.s8 %v1564
      %v1566 = vlaneseq
      %v1567 = vshrl.u32 %v1566, 7
      %v1568 = vsub.s32 %v1565, %v1567
      %v1569 = vrot.slane %v1555, %v1568
      %v1570 = vcombine.low %v1562, %v1569
      %v1571 = vcombine.low %v710, %v718
      %v1572 = vcombine.low %v717, %v726
      %v1574 = vunpack.c.l.s4 1983009808
      %v1575 = vunpack.c.0.s8 %v1574
      %v1576 = vlaneseq
      %v1577 = vshrl.u32 %v1576, 7
      %v1578 = vsub.s32 %v1575, %v1577
      %v1579 = vrot.slane %v1571, %v1578
      %v1581 = vunpack.c.l.s4 1983009808
      %v1582 = vunpack.c.0.s8 %v1581
      %v1583 = vlaneseq
      %v1584 = vshrl.u32 %v1583, 7
      %v1585 = vsub.s32 %v1582, %v1584
      %v1586 = vrot.slane %v1572, %v1585
      %v1587 = vcombine.low %v1579, %v1586
      %v1588 = vcombine.low %v734, %v733
      %v1589 = vcombine.low %v735, %v743
      %v1591 = vunpack.c.l.s4 1983009808
      %v1592 = vunpack.c.0.s8 %v1591
      %v1593 = vlaneseq
      %v1594 = vshrl.u32 %v1593, 7
      %v1595 = vsub.s32 %v1592, %v1594
      %v1596 = vrot.slane %v1588, %v1595
      %v1598 = vunpack.c.l.s4 1983009808
      %v1599 = vunpack.c.0.s8 %v1598
      %v1600 = vlaneseq
      %v1601 = vshrl.u32 %v1600, 7
      %v1602 = vsub.s32 %v1599, %v1601
      %v1603 = vrot.slane %v1589, %v1602
      %v1604 = vcombine.low %v1596, %v1603
      %v1605 = vcombine.low %v751, %v750
      %v1607 = vunpack.c.l.s4 1983009808
      %v1608 = vunpack.c.0.s8 %v1607
      %v1609 = vlaneseq
      %v1610 = vshrl.u32 %v1609, 7
      %v1611 = vsub.s32 %v1608, %v1610
      %v1612 = vrot.slane %v1605, %v1611
      %v1638 = vcombine.low %v776, %v779
      %v1639 = vcombine.low %v782, %v785
      %v1641 = vunpack.c.l.s4 1983009808
      %v1642 = vunpack.c.0.s8 %v1641
      %v1643 = vlaneseq
      %v1644 = vshrl.u32 %v1643, 7
      %v1645 = vsub.s32 %v1642, %v1644
      %v1646 = vrot.slane %v1638, %v1645
      %v1648 = vunpack.c.l.s4 1983009808
      %v1649 = vunpack.c.0.s8 %v1648
      %v1650 = vlaneseq
      %v1651 = vshrl.u32 %v1650, 7
      %v1652 = vsub.s32 %v1649, %v1651
      %v1653 = vrot.slane %v1639, %v1652
      %v1654 = vcombine.low %v1646, %v1653
      %v1655 = vcombine.low %v788, %v791
      %v1656 = vcombine.low %v794, %v798
      %v1658 = vunpack.c.l.s4 1983009808
      %v1659 = vunpack.c.0.s8 %v1658
      %v1660 = vlaneseq
      %v1661 = vshrl.u32 %v1660, 7
      %v1662 = vsub.s32 %v1659, %v1661
      %v1663 = vrot.slane %v1655, %v1662
      %v1665 = vunpack.c.l.s4 1983009808
      %v1666 = vunpack.c.0.s8 %v1665
      %v1667 = vlaneseq
      %v1668 = vshrl.u32 %v1667, 7
      %v1669 = vsub.s32 %v1666, %v1668
      %v1670 = vrot.slane %v1656, %v1669
      %v1671 = vcombine.low %v1663, %v1670
      %v1672 = vcombine.low %v801, %v804
      %v1673 = vcombine.low %v807, %v810
      %v1675 = vunpack.c.l.s4 1983009808
      %v1676 = vunpack.c.0.s8 %v1675
      %v1677 = vlaneseq
      %v1678 = vshrl.u32 %v1677, 7
      %v1679 = vsub.s32 %v1676, %v1678
      %v1680 = vrot.slane %v1672, %v1679
      %v1682 = vunpack.c.l.s4 1983009808
      %v1683 = vunpack.c.0.s8 %v1682
      %v1684 = vlaneseq
      %v1685 = vshrl.u32 %v1684, 7
      %v1686 = vsub.s32 %v1683, %v1685
      %v1687 = vrot.slane %v1673, %v1686
      %v1688 = vcombine.low %v1680, %v1687
      %v1689 = vcombine.low %v813, %v816
      %v1690 = vcombine.low %v820, %v823
      %v1692 = vunpack.c.l.s4 1983009808
      %v1693 = vunpack.c.0.s8 %v1692
      %v1694 = vlaneseq
      %v1695 = vshrl.u32 %v1694, 7
      %v1696 = vsub.s32 %v1693, %v1695
      %v1697 = vrot.slane %v1689, %v1696
      %v1699 = vunpack.c.l.s4 1983009808
      %v1700 = vunpack.c.0.s8 %v1699
      %v1701 = vlaneseq
      %v1702 = vshrl.u32 %v1701, 7
      %v1703 = vsub.s32 %v1700, %v1702
      %v1704 = vrot.slane %v1690, %v1703
      %v1705 = vcombine.low %v1697, %v1704
      %v1706 = vcombine.low %v826, %v829
      %v1707 = vcombine.low %v832, %v835
      %v1709 = vunpack.c.l.s4 1983009808
      %v1710 = vunpack.c.0.s8 %v1709
      %v1711 = vlaneseq
      %v1712 = vshrl.u32 %v1711, 7
      %v1713 = vsub.s32 %v1710, %v1712
      %v1714 = vrot.slane %v1706, %v1713
      %v1716 = vunpack.c.l.s4 1983009808
      %v1717 = vunpack.c.0.s8 %v1716
      %v1718 = vlaneseq
      %v1719 = vshrl.u32 %v1718, 7
      %v1720 = vsub.s32 %v1717, %v1719
      %v1721 = vrot.slane %v1707, %v1720
      %v1722 = vcombine.low %v1714, %v1721
      %v1723 = vcombine.low %v838, %v842
      %v1724 = vcombine.low %v845, %v848
      %v1726 = vunpack.c.l.s4 1983009808
      %v1727 = vunpack.c.0.s8 %v1726
      %v1728 = vlaneseq
      %v1729 = vshrl.u32 %v1728, 7
      %v1730 = vsub.s32 %v1727, %v1729
      %v1731 = vrot.slane %v1723, %v1730
      %v1733 = vunpack.c.l.s4 1983009808
      %v1734 = vunpack.c.0.s8 %v1733
      %v1735 = vlaneseq
      %v1736 = vshrl.u32 %v1735, 7
      %v1737 = vsub.s32 %v1734, %v1736
      %v1738 = vrot.slane %v1724, %v1737
      %v1739 = vcombine.low %v1731, %v1738
      %v1740 = vcombine.low %v851, %v854
      %v1741 = vcombine.low %v857, %v860
      %v1743 = vunpack.c.l.s4 1983009808
      %v1744 = vunpack.c.0.s8 %v1743
      %v1745 = vlaneseq
      %v1746 = vshrl.u32 %v1745, 7
      %v1747 = vsub.s32 %v1744, %v1746
      %v1748 = vrot.slane %v1740, %v1747
      %v1750 = vunpack.c.l.s4 1983009808
      %v1751 = vunpack.c.0.s8 %v1750
      %v1752 = vlaneseq
      %v1753 = vshrl.u32 %v1752, 7
      %v1754 = vsub.s32 %v1751, %v1753
      %v1755 = vrot.slane %v1741, %v1754
      %v1756 = vcombine.low %v1748, %v1755
      %v1757 = vcombine.low %v864, %v867
      %v1758 = vcombine.low %v870, %v873
      %v1760 = vunpack.c.l.s4 1983009808
      %v1761 = vunpack.c.0.s8 %v1760
      %v1762 = vlaneseq
      %v1763 = vshrl.u32 %v1762, 7
      %v1764 = vsub.s32 %v1761, %v1763
      %v1765 = vrot.slane %v1757, %v1764
      %v1767 = vunpack.c.l.s4 1983009808
      %v1768 = vunpack.c.0.s8 %v1767
      %v1769 = vlaneseq
      %v1770 = vshrl.u32 %v1769, 7
      %v1771 = vsub.s32 %v1768, %v1770
      %v1772 = vrot.slane %v1758, %v1771
      %v1773 = vcombine.low %v1765, %v1772
      %v1774 = vcombine.low %v876, %v879
      %v1775 = vcombine.low %v882, %v886
      %v1777 = vunpack.c.l.s4 1983009808
      %v1778 = vunpack.c.0.s8 %v1777
      %v1779 = vlaneseq
      %v1780 = vshrl.u32 %v1779, 7
      %v1781 = vsub.s32 %v1778, %v1780
      %v1782 = vrot.slane %v1774, %v1781
      %v1784 = vunpack.c.l.s4 1983009808
      %v1785 = vunpack.c.0.s8 %v1784
      %v1786 = vlaneseq
      %v1787 = vshrl.u32 %v1786, 7
      %v1788 = vsub.s32 %v1785, %v1787
      %v1789 = vrot.slane %v1775, %v1788
      %v1790 = vcombine.low %v1782, %v1789
      %v1791 = vcombine.low %v889, %v892
      %v1792 = vcombine.low %v895, %v898
      %v1794 = vunpack.c.l.s4 1983009808
      %v1795 = vunpack.c.0.s8 %v1794
      %v1796 = vlaneseq
      %v1797 = vshrl.u32 %v1796, 7
      %v1798 = vsub.s32 %v1795, %v1797
      %v1799 = vrot.slane %v1791, %v1798
      %v1801 = vunpack.c.l.s4 1983009808
      %v1802 = vunpack.c.0.s8 %v1801
      %v1803 = vlaneseq
      %v1804 = vshrl.u32 %v1803, 7
      %v1805 = vsub.s32 %v1802, %v1804
      %v1806 = vrot.slane %v1792, %v1805
      %v1807 = vcombine.low %v1799, %v1806
      %v1808 = vcombine.low %v901, %v904
      %v1809 = vcombine.low %v908, %v911
      %v1811 = vunpack.c.l.s4 1983009808
      %v1812 = vunpack.c.0.s8 %v1811
      %v1813 = vlaneseq
      %v1814 = vshrl.u32 %v1813, 7
      %v1815 = vsub.s32 %v1812, %v1814
      %v1816 = vrot.slane %v1808, %v1815
      %v1818 = vunpack.c.l.s4 1983009808
      %v1819 = vunpack.c.0.s8 %v1818
      %v1820 = vlaneseq
      %v1821 = vshrl.u32 %v1820, 7
      %v1822 = vsub.s32 %v1819, %v1821
      %v1823 = vrot.slane %v1809, %v1822
      %v1824 = vcombine.low %v1816, %v1823
      %v1825 = vcombine.low %v914, %v917
      %v1826 = vcombine.low %v920, %v923
      %v1828 = vunpack.c.l.s4 1983009808
      %v1829 = vunpack.c.0.s8 %v1828
      %v1830 = vlaneseq
      %v1831 = vshrl.u32 %v1830, 7
      %v1832 = vsub.s32 %v1829, %v1831
      %v1833 = vrot.slane %v1825, %v1832
      %v1835 = vunpack.c.l.s4 1983009808
      %v1836 = vunpack.c.0.s8 %v1835
      %v1837 = vlaneseq
      %v1838 = vshrl.u32 %v1837, 7
      %v1839 = vsub.s32 %v1836, %v1838
      %v1840 = vrot.slane %v1826, %v1839
      %v1841 = vcombine.low %v1833, %v1840
      %v1842 = vcombine.low %v926, %v930
      %v1843 = vcombine.low %v933, %v936
      %v1845 = vunpack.c.l.s4 1983009808
      %v1846 = vunpack.c.0.s8 %v1845
      %v1847 = vlaneseq
      %v1848 = vshrl.u32 %v1847, 7
      %v1849 = vsub.s32 %v1846, %v1848
      %v1850 = vrot.slane %v1842, %v1849
      %v1852 = vunpack.c.l.s4 1983009808
      %v1853 = vunpack.c.0.s8 %v1852
      %v1854 = vlaneseq
      %v1855 = vshrl.u32 %v1854, 7
      %v1856 = vsub.s32 %v1853, %v1855
      %v1857 = vrot.slane %v1843, %v1856
      %v1858 = vcombine.low %v1850, %v1857
      %v1859 = vcombine.low %v939, %v942
      %v1860 = vcombine.low %v945, %v948
      %v1862 = vunpack.c.l.s4 1983009808
      %v1863 = vunpack.c.0.s8 %v1862
      %v1864 = vlaneseq
      %v1865 = vshrl.u32 %v1864, 7
      %v1866 = vsub.s32 %v1863, %v1865
      %v1867 = vrot.slane %v1859, %v1866
      %v1869 = vunpack.c.l.s4 1983009808
      %v1870 = vunpack.c.0.s8 %v1869
      %v1871 = vlaneseq
      %v1872 = vshrl.u32 %v1871, 7
      %v1873 = vsub.s32 %v1870, %v1872
      %v1874 = vrot.slane %v1860, %v1873
      %v1875 = vcombine.low %v1867, %v1874
      %v1876 = vcombine.low %v952, %v955
      %v1877 = vcombine.low %v958, %v961
      %v1879 = vunpack.c.l.s4 1983009808
      %v1880 = vunpack.c.0.s8 %v1879
      %v1881 = vlaneseq
      %v1882 = vshrl.u32 %v1881, 7
      %v1883 = vsub.s32 %v1880, %v1882
      %v1884 = vrot.slane %v1876, %v1883
      %v1886 = vunpack.c.l.s4 1983009808
      %v1887 = vunpack.c.0.s8 %v1886
      %v1888 = vlaneseq
      %v1889 = vshrl.u32 %v1888, 7
      %v1890 = vsub.s32 %v1887, %v1889
      %v1891 = vrot.slane %v1877, %v1890
      %v1892 = vcombine.low %v1884, %v1891
      %v1893 = vcombine.low %v964, %v967
      %v1894 = vcombine.low %v970, %v974
      %v1896 = vunpack.c.l.s4 1983009808
      %v1897 = vunpack.c.0.s8 %v1896
      %v1898 = vlaneseq
      %v1899 = vshrl.u32 %v1898, 7
      %v1900 = vsub.s32 %v1897, %v1899
      %v1901 = vrot.slane %v1893, %v1900
      %v1903 = vunpack.c.l.s4 1983009808
      %v1904 = vunpack.c.0.s8 %v1903
      %v1905 = vlaneseq
      %v1906 = vshrl.u32 %v1905, 7
      %v1907 = vsub.s32 %v1904, %v1906
      %v1908 = vrot.slane %v1894, %v1907
      %v1909 = vcombine.low %v1901, %v1908
      %v1910 = vcombine.low %v977, %v980
      %v1911 = vcombine.low %v983, %v986
      %v1913 = vunpack.c.l.s4 1983009808
      %v1914 = vunpack.c.0.s8 %v1913
      %v1915 = vlaneseq
      %v1916 = vshrl.u32 %v1915, 7
      %v1917 = vsub.s32 %v1914, %v1916
      %v1918 = vrot.slane %v1910, %v1917
      %v1920 = vunpack.c.l.s4 1983009808
      %v1921 = vunpack.c.0.s8 %v1920
      %v1922 = vlaneseq
      %v1923 = vshrl.u32 %v1922, 7
      %v1924 = vsub.s32 %v1921, %v1923
      %v1925 = vrot.slane %v1911, %v1924
      %v1926 = vcombine.low %v1918, %v1925
      %v1927 = vcombine.low %v989, %v992
      %v1928 = vcombine.low %v996, %v999
      %v1930 = vunpack.c.l.s4 1983009808
      %v1931 = vunpack.c.0.s8 %v1930
      %v1932 = vlaneseq
      %v1933 = vshrl.u32 %v1932, 7
      %v1934 = vsub.s32 %v1931, %v1933
      %v1935 = vrot.slane %v1927, %v1934
      %v1937 = vunpack.c.l.s4 1983009808
      %v1938 = vunpack.c.0.s8 %v1937
      %v1939 = vlaneseq
      %v1940 = vshrl.u32 %v1939, 7
      %v1941 = vsub.s32 %v1938, %v1940
      %v1942 = vrot.slane %v1928, %v1941
      %v1943 = vcombine.low %v1935, %v1942
      %v1944 = vcombine.low %v1002, %v1005
      %v1945 = vcombine.low %v1008, %v1011
      %v1947 = vunpack.c.l.s4 1983009808
      %v1948 = vunpack.c.0.s8 %v1947
      %v1949 = vlaneseq
      %v1950 = vshrl.u32 %v1949, 7
      %v1951 = vsub.s32 %v1948, %v1950
      %v1952 = vrot.slane %v1944, %v1951
      %v1954 = vunpack.c.l.s4 1983009808
      %v1955 = vunpack.c.0.s8 %v1954
      %v1956 = vlaneseq
      %v1957 = vshrl.u32 %v1956, 7
      %v1958 = vsub.s32 %v1955, %v1957
      %v1959 = vrot.slane %v1945, %v1958
      %v1960 = vcombine.low %v1952, %v1959
      %v1961 = vcombine.low %v1014, %v1018
      %v1962 = vcombine.low %v1021, %v1024
      %v1964 = vunpack.c.l.s4 1983009808
      %v1965 = vunpack.c.0.s8 %v1964
      %v1966 = vlaneseq
      %v1967 = vshrl.u32 %v1966, 7
      %v1968 = vsub.s32 %v1965, %v1967
      %v1969 = vrot.slane %v1961, %v1968
      %v1971 = vunpack.c.l.s4 1983009808
      %v1972 = vunpack.c.0.s8 %v1971
      %v1973 = vlaneseq
      %v1974 = vshrl.u32 %v1973, 7
      %v1975 = vsub.s32 %v1972, %v1974
      %v1976 = vrot.slane %v1962, %v1975
      %v1977 = vcombine.low %v1969, %v1976
      %v1978 = vcombine.low %v1027, %v1030
      %v1979 = vcombine.low %v1033, %v1036
      %v1981 = vunpack.c.l.s4 1983009808
      %v1982 = vunpack.c.0.s8 %v1981
      %v1983 = vlaneseq
      %v1984 = vshrl.u32 %v1983, 7
      %v1985 = vsub.s32 %v1982, %v1984
      %v1986 = vrot.slane %v1978, %v1985
      %v1988 = vunpack.c.l.s4 1983009808
      %v1989 = vunpack.c.0.s8 %v1988
      %v1990 = vlaneseq
      %v1991 = vshrl.u32 %v1990, 7
      %v1992 = vsub.s32 %v1989, %v1991
      %v1993 = vrot.slane %v1979, %v1992
      %v1994 = vcombine.low %v1986, %v1993
      %v1995 = vcombine.low %v1040, %v1043
      %v1996 = vcombine.low %v1046, %v1049
      %v1998 = vunpack.c.l.s4 1983009808
      %v1999 = vunpack.c.0.s8 %v1998
      %v2000 = vlaneseq
      %v2001 = vshrl.u32 %v2000, 7
      %v2002 = vsub.s32 %v1999, %v2001
      %v2003 = vrot.slane %v1995, %v2002
      %v2005 = vunpack.c.l.s4 1983009808
      %v2006 = vunpack.c.0.s8 %v2005
      %v2007 = vlaneseq
      %v2008 = vshrl.u32 %v2007, 7
      %v2009 = vsub.s32 %v2006, %v2008
      %v2010 = vrot.slane %v1996, %v2009
      %v2011 = vcombine.low %v2003, %v2010
      %v2012 = vcombine.low %v1052, %v1055
      %v2013 = vcombine.low %v1058, %v1062
      %v2015 = vunpack.c.l.s4 1983009808
      %v2016 = vunpack.c.0.s8 %v2015
      %v2017 = vlaneseq
      %v2018 = vshrl.u32 %v2017, 7
      %v2019 = vsub.s32 %v2016, %v2018
      %v2020 = vrot.slane %v2012, %v2019
      %v2022 = vunpack.c.l.s4 1983009808
      %v2023 = vunpack.c.0.s8 %v2022
      %v2024 = vlaneseq
      %v2025 = vshrl.u32 %v2024, 7
      %v2026 = vsub.s32 %v2023, %v2025
      %v2027 = vrot.slane %v2013, %v2026
      %v2028 = vcombine.low %v2020, %v2027
      %v2029 = vcombine.low %v1065, %v1068
      %v2030 = vcombine.low %v1071, %v1074
      %v2032 = vunpack.c.l.s4 1983009808
      %v2033 = vunpack.c.0.s8 %v2032
      %v2034 = vlaneseq
      %v2035 = vshrl.u32 %v2034, 7
      %v2036 = vsub.s32 %v2033, %v2035
      %v2037 = vrot.slane %v2029, %v2036
      %v2039 = vunpack.c.l.s4 1983009808
      %v2040 = vunpack.c.0.s8 %v2039
      %v2041 = vlaneseq
      %v2042 = vshrl.u32 %v2041, 7
      %v2043 = vsub.s32 %v2040, %v2042
      %v2044 = vrot.slane %v2030, %v2043
      %v2045 = vcombine.low %v2037, %v2044
      %v2046 = vcombine.low %v1077, %v1080
      %v2048 = vunpack.c.l.s4 1983009808
      %v2049 = vunpack.c.0.s8 %v2048
      %v2050 = vlaneseq
      %v2051 = vshrl.u32 %v2050, 7
      %v2052 = vsub.s32 %v2049, %v2051
      %v2053 = vrot.slane %v2046, %v2052
      %2054 = vrot.lane.b32.xlu0 %v1654, 4
      %v2055 = vpop.permute.xlu0 %2054
      %2056 = vrot.lane.b32.xlu0 %v1671, 4
      %v2057 = vpop.permute.xlu0 %2056
      %2058 = vrot.lane.b32.xlu0 %v1688, 4
      %v2059 = vpop.permute.xlu0 %2058
      %2060 = vrot.lane.b32.xlu0 %v1705, 4
      %v2061 = vpop.permute.xlu0 %2060
      %2062 = vrot.lane.b32.xlu0 %v1722, 4
      %v2063 = vpop.permute.xlu0 %2062
      %2064 = vrot.lane.b32.xlu0 %v1739, 4
      %v2065 = vpop.permute.xlu0 %2064
      %2066 = vrot.lane.b32.xlu0 %v1756, 4
      %v2067 = vpop.permute.xlu0 %2066
      %2068 = vrot.lane.b32.xlu0 %v1773, 4
      %v2069 = vpop.permute.xlu0 %2068
      %2070 = vrot.lane.b32.xlu0 %v1790, 4
      %v2071 = vpop.permute.xlu0 %2070
      %2072 = vrot.lane.b32.xlu0 %v1807, 4
      %v2073 = vpop.permute.xlu0 %2072
      %2074 = vrot.lane.b32.xlu0 %v1824, 4
      %v2075 = vpop.permute.xlu0 %2074
      %2076 = vrot.lane.b32.xlu0 %v1841, 4
      %v2077 = vpop.permute.xlu0 %2076
      %2078 = vrot.lane.b32.xlu0 %v1858, 4
      %v2079 = vpop.permute.xlu0 %2078
      %2080 = vrot.lane.b32.xlu0 %v1875, 4
      %v2081 = vpop.permute.xlu0 %2080
      %2082 = vrot.lane.b32.xlu0 %v1892, 4
      %v2083 = vpop.permute.xlu0 %2082
      %2084 = vrot.lane.b32.xlu0 %v1909, 4
      %v2085 = vpop.permute.xlu0 %2084
      %2086 = vrot.lane.b32.xlu0 %v1926, 4
      %v2087 = vpop.permute.xlu0 %2086
      %2088 = vrot.lane.b32.xlu0 %v1943, 4
      %v2089 = vpop.permute.xlu0 %2088
      %2090 = vrot.lane.b32.xlu0 %v1960, 4
      %v2091 = vpop.permute.xlu0 %2090
      %2092 = vrot.lane.b32.xlu0 %v1977, 4
      %v2093 = vpop.permute.xlu0 %2092
      %2094 = vrot.lane.b32.xlu0 %v1994, 4
      %v2095 = vpop.permute.xlu0 %2094
      %2096 = vrot.lane.b32.xlu0 %v2011, 4
      %v2097 = vpop.permute.xlu0 %2096
      %2098 = vrot.lane.b32.xlu0 %v2028, 4
      %v2099 = vpop.permute.xlu0 %2098
      %2100 = vrot.lane.b32.xlu0 %v2045, 4
      %v2101 = vpop.permute.xlu0 %2100
      %2102 = vrot.lane.b32.xlu0 %v2053, 4
      %v2103 = vpop.permute.xlu0 %2102
      %v2129 = vcombine.low %v305, %v304
      %v2130 = vcombine.low %v306, %v314
      %v2132 = vunpack.c.l.s4 1983009808
      %v2133 = vunpack.c.0.s8 %v2132
      %v2134 = vlaneseq
      %v2135 = vshrl.u32 %v2134, 7
      %v2136 = vsub.s32 %v2133, %v2135
      %v2137 = vrot.slane %v2129, %v2136
      %v2139 = vunpack.c.l.s4 1983009808
      %v2140 = vunpack.c.0.s8 %v2139
      %v2141 = vlaneseq
      %v2142 = vshrl.u32 %v2141, 7
      %v2143 = vsub.s32 %v2140, %v2142
      %v2144 = vrot.slane %v2130, %v2143
      %v2145 = vcombine.low %v2137, %v2144
      %v2146 = vcombine.low %v322, %v321
      %v2147 = vcombine.low %v752, %v338
      %v2149 = vunpack.c.l.s4 1983009808
      %v2150 = vunpack.c.0.s8 %v2149
      %v2151 = vlaneseq
      %v2152 = vshrl.u32 %v2151, 7
      %v2153 = vsub.s32 %v2150, %v2152
      %v2154 = vrot.slane %v2146, %v2153
      %v2156 = vunpack.c.l.s4 1983009808
      %v2157 = vunpack.c.0.s8 %v2156
      %v2158 = vlaneseq
      %v2159 = vshrl.u32 %v2158, 7
      %v2160 = vsub.s32 %v2157, %v2159
      %v2161 = vrot.slane %v2147, %v2160
      %v2162 = vcombine.low %v2154, %v2161
      %v2163 = vcombine.low %v337, %v339
      %v2164 = vcombine.low %v347, %v355
      %v2166 = vunpack.c.l.s4 1983009808
      %v2167 = vunpack.c.0.s8 %v2166
      %v2168 = vlaneseq
      %v2169 = vshrl.u32 %v2168, 7
      %v2170 = vsub.s32 %v2167, %v2169
      %v2171 = vrot.slane %v2163, %v2170
      %v2173 = vunpack.c.l.s4 1983009808
      %v2174 = vunpack.c.0.s8 %v2173
      %v2175 = vlaneseq
      %v2176 = vshrl.u32 %v2175, 7
      %v2177 = vsub.s32 %v2174, %v2176
      %v2178 = vrot.slane %v2164, %v2177
      %v2179 = vcombine.low %v2171, %v2178
      %v2180 = vcombine.low %v354, %v753
      %v2181 = vcombine.low %v371, %v370
      %v2183 = vunpack.c.l.s4 1983009808
      %v2184 = vunpack.c.0.s8 %v2183
      %v2185 = vlaneseq
      %v2186 = vshrl.u32 %v2185, 7
      %v2187 = vsub.s32 %v2184, %v2186
      %v2188 = vrot.slane %v2180, %v2187
      %v2190 = vunpack.c.l.s4 1983009808
      %v2191 = vunpack.c.0.s8 %v2190
      %v2192 = vlaneseq
      %v2193 = vshrl.u32 %v2192, 7
      %v2194 = vsub.s32 %v2191, %v2193
      %v2195 = vrot.slane %v2181, %v2194
      %v2196 = vcombine.low %v2188, %v2195
      %v2197 = vcombine.low %v372, %v380
      %v2198 = vcombine.low %v388, %v387
      %v2200 = vunpack.c.l.s4 1983009808
      %v2201 = vunpack.c.0.s8 %v2200
      %v2202 = vlaneseq
      %v2203 = vshrl.u32 %v2202, 7
      %v2204 = vsub.s32 %v2201, %v2203
      %v2205 = vrot.slane %v2197, %v2204
      %v2207 = vunpack.c.l.s4 1983009808
      %v2208 = vunpack.c.0.s8 %v2207
      %v2209 = vlaneseq
      %v2210 = vshrl.u32 %v2209, 7
      %v2211 = vsub.s32 %v2208, %v2210
      %v2212 = vrot.slane %v2198, %v2211
      %v2213 = vcombine.low %v2205, %v2212
      %v2214 = vcombine.low %v754, %v404
      %v2215 = vcombine.low %v403, %v405
      %v2217 = vunpack.c.l.s4 1983009808
      %v2218 = vunpack.c.0.s8 %v2217
      %v2219 = vlaneseq
      %v2220 = vshrl.u32 %v2219, 7
      %v2221 = vsub.s32 %v2218, %v2220
      %v2222 = vrot.slane %v2214, %v2221
      %v2224 = vunpack.c.l.s4 1983009808
      %v2225 = vunpack.c.0.s8 %v2224
      %v2226 = vlaneseq
      %v2227 = vshrl.u32 %v2226, 7
      %v2228 = vsub.s32 %v2225, %v2227
      %v2229 = vrot.slane %v2215, %v2228
      %v2230 = vcombine.low %v2222, %v2229
      %v2231 = vcombine.low %v413, %v421
      %v2232 = vcombine.low %v420, %v755
      %v2234 = vunpack.c.l.s4 1983009808
      %v2235 = vunpack.c.0.s8 %v2234
      %v2236 = vlaneseq
      %v2237 = vshrl.u32 %v2236, 7
      %v2238 = vsub.s32 %v2235, %v2237
      %v2239 = vrot.slane %v2231, %v2238
      %v2241 = vunpack.c.l.s4 1983009808
      %v2242 = vunpack.c.0.s8 %v2241
      %v2243 = vlaneseq
      %v2244 = vshrl.u32 %v2243, 7
      %v2245 = vsub.s32 %v2242, %v2244
      %v2246 = vrot.slane %v2232, %v2245
      %v2247 = vcombine.low %v2239, %v2246
      %v2248 = vcombine.low %v437, %v436
      %v2249 = vcombine.low %v438, %v446
      %v2251 = vunpack.c.l.s4 1983009808
      %v2252 = vunpack.c.0.s8 %v2251
      %v2253 = vlaneseq
      %v2254 = vshrl.u32 %v2253, 7
      %v2255 = vsub.s32 %v2252, %v2254
      %v2256 = vrot.slane %v2248, %v2255
      %v2258 = vunpack.c.l.s4 1983009808
      %v2259 = vunpack.c.0.s8 %v2258
      %v2260 = vlaneseq
      %v2261 = vshrl.u32 %v2260, 7
      %v2262 = vsub.s32 %v2259, %v2261
      %v2263 = vrot.slane %v2249, %v2262
      %v2264 = vcombine.low %v2256, %v2263
      %v2265 = vcombine.low %v454, %v453
      %v2266 = vcombine.low %v756, %v470
      %v2268 = vunpack.c.l.s4 1983009808
      %v2269 = vunpack.c.0.s8 %v2268
      %v2270 = vlaneseq
      %v2271 = vshrl.u32 %v2270, 7
      %v2272 = vsub.s32 %v2269, %v2271
      %v2273 = vrot.slane %v2265, %v2272
      %v2275 = vunpack.c.l.s4 1983009808
      %v2276 = vunpack.c.0.s8 %v2275
      %v2277 = vlaneseq
      %v2278 = vshrl.u32 %v2277, 7
      %v2279 = vsub.s32 %v2276, %v2278
      %v2280 = vrot.slane %v2266, %v2279
      %v2281 = vcombine.low %v2273, %v2280
      %v2282 = vcombine.low %v469, %v471
      %v2283 = vcombine.low %v479, %v487
      %v2285 = vunpack.c.l.s4 1983009808
      %v2286 = vunpack.c.0.s8 %v2285
      %v2287 = vlaneseq
      %v2288 = vshrl.u32 %v2287, 7
      %v2289 = vsub.s32 %v2286, %v2288
      %v2290 = vrot.slane %v2282, %v2289
      %v2292 = vunpack.c.l.s4 1983009808
      %v2293 = vunpack.c.0.s8 %v2292
      %v2294 = vlaneseq
      %v2295 = vshrl.u32 %v2294, 7
      %v2296 = vsub.s32 %v2293, %v2295
      %v2297 = vrot.slane %v2283, %v2296
      %v2298 = vcombine.low %v2290, %v2297
      %v2299 = vcombine.low %v486, %v757
      %v2300 = vcombine.low %v503, %v502
      %v2302 = vunpack.c.l.s4 1983009808
      %v2303 = vunpack.c.0.s8 %v2302
      %v2304 = vlaneseq
      %v2305 = vshrl.u32 %v2304, 7
      %v2306 = vsub.s32 %v2303, %v2305
      %v2307 = vrot.slane %v2299, %v2306
      %v2309 = vunpack.c.l.s4 1983009808
      %v2310 = vunpack.c.0.s8 %v2309
      %v2311 = vlaneseq
      %v2312 = vshrl.u32 %v2311, 7
      %v2313 = vsub.s32 %v2310, %v2312
      %v2314 = vrot.slane %v2300, %v2313
      %v2315 = vcombine.low %v2307, %v2314
      %v2316 = vcombine.low %v504, %v512
      %v2317 = vcombine.low %v520, %v519
      %v2319 = vunpack.c.l.s4 1983009808
      %v2320 = vunpack.c.0.s8 %v2319
      %v2321 = vlaneseq
      %v2322 = vshrl.u32 %v2321, 7
      %v2323 = vsub.s32 %v2320, %v2322
      %v2324 = vrot.slane %v2316, %v2323
      %v2326 = vunpack.c.l.s4 1983009808
      %v2327 = vunpack.c.0.s8 %v2326
      %v2328 = vlaneseq
      %v2329 = vshrl.u32 %v2328, 7
      %v2330 = vsub.s32 %v2327, %v2329
      %v2331 = vrot.slane %v2317, %v2330
      %v2332 = vcombine.low %v2324, %v2331
      %v2333 = vcombine.low %v758, %v536
      %v2334 = vcombine.low %v535, %v537
      %v2336 = vunpack.c.l.s4 1983009808
      %v2337 = vunpack.c.0.s8 %v2336
      %v2338 = vlaneseq
      %v2339 = vshrl.u32 %v2338, 7
      %v2340 = vsub.s32 %v2337, %v2339
      %v2341 = vrot.slane %v2333, %v2340
      %v2343 = vunpack.c.l.s4 1983009808
      %v2344 = vunpack.c.0.s8 %v2343
      %v2345 = vlaneseq
      %v2346 = vshrl.u32 %v2345, 7
      %v2347 = vsub.s32 %v2344, %v2346
      %v2348 = vrot.slane %v2334, %v2347
      %v2349 = vcombine.low %v2341, %v2348
      %v2350 = vcombine.low %v545, %v553
      %v2351 = vcombine.low %v552, %v759
      %v2353 = vunpack.c.l.s4 1983009808
      %v2354 = vunpack.c.0.s8 %v2353
      %v2355 = vlaneseq
      %v2356 = vshrl.u32 %v2355, 7
      %v2357 = vsub.s32 %v2354, %v2356
      %v2358 = vrot.slane %v2350, %v2357
      %v2360 = vunpack.c.l.s4 1983009808
      %v2361 = vunpack.c.0.s8 %v2360
      %v2362 = vlaneseq
      %v2363 = vshrl.u32 %v2362, 7
      %v2364 = vsub.s32 %v2361, %v2363
      %v2365 = vrot.slane %v2351, %v2364
      %v2366 = vcombine.low %v2358, %v2365
      %v2367 = vcombine.low %v569, %v568
      %v2368 = vcombine.low %v570, %v578
      %v2370 = vunpack.c.l.s4 1983009808
      %v2371 = vunpack.c.0.s8 %v2370
      %v2372 = vlaneseq
      %v2373 = vshrl.u32 %v2372, 7
      %v2374 = vsub.s32 %v2371, %v2373
      %v2375 = vrot.slane %v2367, %v2374
      %v2377 = vunpack.c.l.s4 1983009808
      %v2378 = vunpack.c.0.s8 %v2377
      %v2379 = vlaneseq
      %v2380 = vshrl.u32 %v2379, 7
      %v2381 = vsub.s32 %v2378, %v2380
      %v2382 = vrot.slane %v2368, %v2381
      %v2383 = vcombine.low %v2375, %v2382
      %v2384 = vcombine.low %v586, %v585
      %v2385 = vcombine.low %v760, %v602
      %v2387 = vunpack.c.l.s4 1983009808
      %v2388 = vunpack.c.0.s8 %v2387
      %v2389 = vlaneseq
      %v2390 = vshrl.u32 %v2389, 7
      %v2391 = vsub.s32 %v2388, %v2390
      %v2392 = vrot.slane %v2384, %v2391
      %v2394 = vunpack.c.l.s4 1983009808
      %v2395 = vunpack.c.0.s8 %v2394
      %v2396 = vlaneseq
      %v2397 = vshrl.u32 %v2396, 7
      %v2398 = vsub.s32 %v2395, %v2397
      %v2399 = vrot.slane %v2385, %v2398
      %v2400 = vcombine.low %v2392, %v2399
      %v2401 = vcombine.low %v601, %v603
      %v2402 = vcombine.low %v611, %v619
      %v2404 = vunpack.c.l.s4 1983009808
      %v2405 = vunpack.c.0.s8 %v2404
      %v2406 = vlaneseq
      %v2407 = vshrl.u32 %v2406, 7
      %v2408 = vsub.s32 %v2405, %v2407
      %v2409 = vrot.slane %v2401, %v2408
      %v2411 = vunpack.c.l.s4 1983009808
      %v2412 = vunpack.c.0.s8 %v2411
      %v2413 = vlaneseq
      %v2414 = vshrl.u32 %v2413, 7
      %v2415 = vsub.s32 %v2412, %v2414
      %v2416 = vrot.slane %v2402, %v2415
      %v2417 = vcombine.low %v2409, %v2416
      %v2418 = vcombine.low %v618, %v761
      %v2419 = vcombine.low %v635, %v634
      %v2421 = vunpack.c.l.s4 1983009808
      %v2422 = vunpack.c.0.s8 %v2421
      %v2423 = vlaneseq
      %v2424 = vshrl.u32 %v2423, 7
      %v2425 = vsub.s32 %v2422, %v2424
      %v2426 = vrot.slane %v2418, %v2425
      %v2428 = vunpack.c.l.s4 1983009808
      %v2429 = vunpack.c.0.s8 %v2428
      %v2430 = vlaneseq
      %v2431 = vshrl.u32 %v2430, 7
      %v2432 = vsub.s32 %v2429, %v2431
      %v2433 = vrot.slane %v2419, %v2432
      %v2434 = vcombine.low %v2426, %v2433
      %v2435 = vcombine.low %v636, %v644
      %v2436 = vcombine.low %v652, %v651
      %v2438 = vunpack.c.l.s4 1983009808
      %v2439 = vunpack.c.0.s8 %v2438
      %v2440 = vlaneseq
      %v2441 = vshrl.u32 %v2440, 7
      %v2442 = vsub.s32 %v2439, %v2441
      %v2443 = vrot.slane %v2435, %v2442
      %v2445 = vunpack.c.l.s4 1983009808
      %v2446 = vunpack.c.0.s8 %v2445
      %v2447 = vlaneseq
      %v2448 = vshrl.u32 %v2447, 7
      %v2449 = vsub.s32 %v2446, %v2448
      %v2450 = vrot.slane %v2436, %v2449
      %v2451 = vcombine.low %v2443, %v2450
      %v2452 = vcombine.low %v762, %v668
      %v2453 = vcombine.low %v667, %v669
      %v2455 = vunpack.c.l.s4 1983009808
      %v2456 = vunpack.c.0.s8 %v2455
      %v2457 = vlaneseq
      %v2458 = vshrl.u32 %v2457, 7
      %v2459 = vsub.s32 %v2456, %v2458
      %v2460 = vrot.slane %v2452, %v2459
      %v2462 = vunpack.c.l.s4 1983009808
      %v2463 = vunpack.c.0.s8 %v2462
      %v2464 = vlaneseq
      %v2465 = vshrl.u32 %v2464, 7
      %v2466 = vsub.s32 %v2463, %v2465
      %v2467 = vrot.slane %v2453, %v2466
      %v2468 = vcombine.low %v2460, %v2467
      %v2469 = vcombine.low %v677, %v685
      %v2470 = vcombine.low %v684, %v763
      %v2472 = vunpack.c.l.s4 1983009808
      %v2473 = vunpack.c.0.s8 %v2472
      %v2474 = vlaneseq
      %v2475 = vshrl.u32 %v2474, 7
      %v2476 = vsub.s32 %v2473, %v2475
      %v2477 = vrot.slane %v2469, %v2476
      %v2479 = vunpack.c.l.s4 1983009808
      %v2480 = vunpack.c.0.s8 %v2479
      %v2481 = vlaneseq
      %v2482 = vshrl.u32 %v2481, 7
      %v2483 = vsub.s32 %v2480, %v2482
      %v2484 = vrot.slane %v2470, %v2483
      %v2485 = vcombine.low %v2477, %v2484
      %v2486 = vcombine.low %v701, %v700
      %v2487 = vcombine.low %v702, %v710
      %v2489 = vunpack.c.l.s4 1983009808
      %v2490 = vunpack.c.0.s8 %v2489
      %v2491 = vlaneseq
      %v2492 = vshrl.u32 %v2491, 7
      %v2493 = vsub.s32 %v2490, %v2492
      %v2494 = vrot.slane %v2486, %v2493
      %v2496 = vunpack.c.l.s4 1983009808
      %v2497 = vunpack.c.0.s8 %v2496
      %v2498 = vlaneseq
      %v2499 = vshrl.u32 %v2498, 7
      %v2500 = vsub.s32 %v2497, %v2499
      %v2501 = vrot.slane %v2487, %v2500
      %v2502 = vcombine.low %v2494, %v2501
      %v2503 = vcombine.low %v718, %v717
      %v2504 = vcombine.low %v764, %v734
      %v2506 = vunpack.c.l.s4 1983009808
      %v2507 = vunpack.c.0.s8 %v2506
      %v2508 = vlaneseq
      %v2509 = vshrl.u32 %v2508, 7
      %v2510 = vsub.s32 %v2507, %v2509
      %v2511 = vrot.slane %v2503, %v2510
      %v2513 = vunpack.c.l.s4 1983009808
      %v2514 = vunpack.c.0.s8 %v2513
      %v2515 = vlaneseq
      %v2516 = vshrl.u32 %v2515, 7
      %v2517 = vsub.s32 %v2514, %v2516
      %v2518 = vrot.slane %v2504, %v2517
      %v2519 = vcombine.low %v2511, %v2518
      %v2520 = vcombine.low %v733, %v735
      %v2521 = vcombine.low %v743, %v751
      %v2523 = vunpack.c.l.s4 1983009808
      %v2524 = vunpack.c.0.s8 %v2523
      %v2525 = vlaneseq
      %v2526 = vshrl.u32 %v2525, 7
      %v2527 = vsub.s32 %v2524, %v2526
      %v2528 = vrot.slane %v2520, %v2527
      %v2530 = vunpack.c.l.s4 1983009808
      %v2531 = vunpack.c.0.s8 %v2530
      %v2532 = vlaneseq
      %v2533 = vshrl.u32 %v2532, 7
      %v2534 = vsub.s32 %v2531, %v2533
      %v2535 = vrot.slane %v2521, %v2534
      %v2536 = vcombine.low %v2528, %v2535
      %v2537 = vcombine.low %v750, %v765
      %v2539 = vunpack.c.l.s4 1983009808
      %v2540 = vunpack.c.0.s8 %v2539
      %v2541 = vlaneseq
      %v2542 = vshrl.u32 %v2541, 7
      %v2543 = vsub.s32 %v2540, %v2542
      %v2544 = vrot.slane %v2537, %v2543
      %2545 = vrot.lane.b32.xlu0 %v2145, 8
      %v2546 = vpop.permute.xlu0 %2545
      %2547 = vrot.lane.b32.xlu0 %v2162, 8
      %v2548 = vpop.permute.xlu0 %2547
      %2549 = vrot.lane.b32.xlu0 %v2179, 8
      %v2550 = vpop.permute.xlu0 %2549
      %2551 = vrot.lane.b32.xlu0 %v2196, 8
      %v2552 = vpop.permute.xlu0 %2551
      %2553 = vrot.lane.b32.xlu0 %v2213, 8
      %v2554 = vpop.permute.xlu0 %2553
      %2555 = vrot.lane.b32.xlu0 %v2230, 8
      %v2556 = vpop.permute.xlu0 %2555
      %2557 = vrot.lane.b32.xlu0 %v2247, 8
      %v2558 = vpop.permute.xlu0 %2557
      %2559 = vrot.lane.b32.xlu0 %v2264, 8
      %v2560 = vpop.permute.xlu0 %2559
      %2561 = vrot.lane.b32.xlu0 %v2281, 8
      %v2562 = vpop.permute.xlu0 %2561
      %2563 = vrot.lane.b32.xlu0 %v2298, 8
      %v2564 = vpop.permute.xlu0 %2563
      %2565 = vrot.lane.b32.xlu0 %v2315, 8
      %v2566 = vpop.permute.xlu0 %2565
      %2567 = vrot.lane.b32.xlu0 %v2332, 8
      %v2568 = vpop.permute.xlu0 %2567
      %2569 = vrot.lane.b32.xlu0 %v2349, 8
      %v2570 = vpop.permute.xlu0 %2569
      %2571 = vrot.lane.b32.xlu0 %v2366, 8
      %v2572 = vpop.permute.xlu0 %2571
      %2573 = vrot.lane.b32.xlu0 %v2383, 8
      %v2574 = vpop.permute.xlu0 %2573
      %2575 = vrot.lane.b32.xlu0 %v2400, 8
      %v2576 = vpop.permute.xlu0 %2575
      %2577 = vrot.lane.b32.xlu0 %v2417, 8
      %v2578 = vpop.permute.xlu0 %2577
      %2579 = vrot.lane.b32.xlu0 %v2434, 8
      %v2580 = vpop.permute.xlu0 %2579
      %2581 = vrot.lane.b32.xlu0 %v2451, 8
      %v2582 = vpop.permute.xlu0 %2581
      %2583 = vrot.lane.b32.xlu0 %v2468, 8
      %v2584 = vpop.permute.xlu0 %2583
      %2585 = vrot.lane.b32.xlu0 %v2485, 8
      %v2586 = vpop.permute.xlu0 %2585
      %2587 = vrot.lane.b32.xlu0 %v2502, 8
      %v2588 = vpop.permute.xlu0 %2587
      %2589 = vrot.lane.b32.xlu0 %v2519, 8
      %v2590 = vpop.permute.xlu0 %2589
      %2591 = vrot.lane.b32.xlu0 %v2536, 8
      %v2592 = vpop.permute.xlu0 %2591
      %2593 = vrot.lane.b32.xlu0 %v2544, 8
      %v2594 = vpop.permute.xlu0 %2593
      %v2620 = vcombine.low %v330, %v338
      %v2622 = vunpack.c.l.s4 1983009808
      %v2623 = vunpack.c.0.s8 %v2622
      %v2624 = vlaneseq
      %v2625 = vshrl.u32 %v2624, 7
      %v2626 = vsub.s32 %v2623, %v2625
      %v2627 = vrot.slane %v2620, %v2626
      %v2628 = vcombine.low %v2627, %v2171
      %v2629 = vcombine.low %v354, %v363
      %v2631 = vunpack.c.l.s4 1983009808
      %v2632 = vunpack.c.0.s8 %v2631
      %v2633 = vlaneseq
      %v2634 = vshrl.u32 %v2633, 7
      %v2635 = vsub.s32 %v2632, %v2634
      %v2636 = vrot.slane %v2629, %v2635
      %v2637 = vcombine.low %v2178, %v2636
      %v2638 = vcombine.low %v2195, %v2205
      %v2639 = vcombine.low %v396, %v404
      %v2641 = vunpack.c.l.s4 1983009808
      %v2642 = vunpack.c.0.s8 %v2641
      %v2643 = vlaneseq
      %v2644 = vshrl.u32 %v2643, 7
      %v2645 = vsub.s32 %v2642, %v2644
      %v2646 = vrot.slane %v2639, %v2645
      %v2647 = vcombine.low %v2212, %v2646
      %v2648 = vcombine.low %v2229, %v2239
      %v2649 = vcombine.low %v420, %v429
      %v2651 = vunpack.c.l.s4 1983009808
      %v2652 = vunpack.c.0.s8 %v2651
      %v2653 = vlaneseq
      %v2654 = vshrl.u32 %v2653, 7
      %v2655 = vsub.s32 %v2652, %v2654
      %v2656 = vrot.slane %v2649, %v2655
      %v2657 = vcombine.low %v2656, %v2256
      %v2658 = vcombine.low %v2263, %v2273
      %v2659 = vcombine.low %v462, %v470
      %v2661 = vunpack.c.l.s4 1983009808
      %v2662 = vunpack.c.0.s8 %v2661
      %v2663 = vlaneseq
      %v2664 = vshrl.u32 %v2663, 7
      %v2665 = vsub.s32 %v2662, %v2664
      %v2666 = vrot.slane %v2659, %v2665
      %v2667 = vcombine.low %v2666, %v2290
      %v2668 = vcombine.low %v486, %v495
      %v2670 = vunpack.c.l.s4 1983009808
      %v2671 = vunpack.c.0.s8 %v2670
      %v2672 = vlaneseq
      %v2673 = vshrl.u32 %v2672, 7
      %v2674 = vsub.s32 %v2671, %v2673
      %v2675 = vrot.slane %v2668, %v2674
      %v2676 = vcombine.low %v2297, %v2675
      %v2677 = vcombine.low %v2314, %v2324
      %v2678 = vcombine.low %v528, %v536
      %v2680 = vunpack.c.l.s4 1983009808
      %v2681 = vunpack.c.0.s8 %v2680
      %v2682 = vlaneseq
      %v2683 = vshrl.u32 %v2682, 7
      %v2684 = vsub.s32 %v2681, %v2683
      %v2685 = vrot.slane %v2678, %v2684
      %v2686 = vcombine.low %v2331, %v2685
      %v2687 = vcombine.low %v2348, %v2358
      %v2688 = vcombine.low %v552, %v561
      %v2690 = vunpack.c.l.s4 1983009808
      %v2691 = vunpack.c.0.s8 %v2690
      %v2692 = vlaneseq
      %v2693 = vshrl.u32 %v2692, 7
      %v2694 = vsub.s32 %v2691, %v2693
      %v2695 = vrot.slane %v2688, %v2694
      %v2696 = vcombine.low %v2695, %v2375
      %v2697 = vcombine.low %v2382, %v2392
      %v2698 = vcombine.low %v594, %v602
      %v2700 = vunpack.c.l.s4 1983009808
      %v2701 = vunpack.c.0.s8 %v2700
      %v2702 = vlaneseq
      %v2703 = vshrl.u32 %v2702, 7
      %v2704 = vsub.s32 %v2701, %v2703
      %v2705 = vrot.slane %v2698, %v2704
      %v2706 = vcombine.low %v2705, %v2409
      %v2707 = vcombine.low %v618, %v627
      %v2709 = vunpack.c.l.s4 1983009808
      %v2710 = vunpack.c.0.s8 %v2709
      %v2711 = vlaneseq
      %v2712 = vshrl.u32 %v2711, 7
      %v2713 = vsub.s32 %v2710, %v2712
      %v2714 = vrot.slane %v2707, %v2713
      %v2715 = vcombine.low %v2416, %v2714
      %v2716 = vcombine.low %v2433, %v2443
      %v2717 = vcombine.low %v660, %v668
      %v2719 = vunpack.c.l.s4 1983009808
      %v2720 = vunpack.c.0.s8 %v2719
      %v2721 = vlaneseq
      %v2722 = vshrl.u32 %v2721, 7
      %v2723 = vsub.s32 %v2720, %v2722
      %v2724 = vrot.slane %v2717, %v2723
      %v2725 = vcombine.low %v2450, %v2724
      %v2726 = vcombine.low %v2467, %v2477
      %v2727 = vcombine.low %v684, %v693
      %v2729 = vunpack.c.l.s4 1983009808
      %v2730 = vunpack.c.0.s8 %v2729
      %v2731 = vlaneseq
      %v2732 = vshrl.u32 %v2731, 7
      %v2733 = vsub.s32 %v2730, %v2732
      %v2734 = vrot.slane %v2727, %v2733
      %v2735 = vcombine.low %v2734, %v2494
      %v2736 = vcombine.low %v2501, %v2511
      %v2737 = vcombine.low %v726, %v734
      %v2739 = vunpack.c.l.s4 1983009808
      %v2740 = vunpack.c.0.s8 %v2739
      %v2741 = vlaneseq
      %v2742 = vshrl.u32 %v2741, 7
      %v2743 = vsub.s32 %v2740, %v2742
      %v2744 = vrot.slane %v2737, %v2743
      %v2745 = vcombine.low %v2744, %v2528
      %v2746 = vcombine.low %v750, %v1090
      %v2748 = vunpack.c.l.s4 1983009808
      %v2749 = vunpack.c.0.s8 %v2748
      %v2750 = vlaneseq
      %v2751 = vshrl.u32 %v2750, 7
      %v2752 = vsub.s32 %v2749, %v2751
      %v2753 = vrot.slane %v2746, %v2752
      %v2754 = vcombine.low %v2535, %v2753
      %v2755 = vcombine.low %v1098, %v1097
      %v2756 = vcombine.low %v1099, %v1107
      %v2758 = vunpack.c.l.s4 1983009808
      %v2759 = vunpack.c.0.s8 %v2758
      %v2760 = vlaneseq
      %v2761 = vshrl.u32 %v2760, 7
      %v2762 = vsub.s32 %v2759, %v2761
      %v2763 = vrot.slane %v2755, %v2762
      %v2765 = vunpack.c.l.s4 1983009808
      %v2766 = vunpack.c.0.s8 %v2765
      %v2767 = vlaneseq
      %v2768 = vshrl.u32 %v2767, 7
      %v2769 = vsub.s32 %v2766, %v2768
      %v2770 = vrot.slane %v2756, %v2769
      %v2771 = vcombine.low %v2763, %v2770
      %v2772 = vcombine.low %v1115, %v1114
      %v2774 = vunpack.c.l.s4 1983009808
      %v2775 = vunpack.c.0.s8 %v2774
      %v2776 = vlaneseq
      %v2777 = vshrl.u32 %v2776, 7
      %v2778 = vsub.s32 %v2775, %v2777
      %v2779 = vrot.slane %v2772, %v2778
      %2780 = vrot.lane.b32.xlu0 %v2628, 12
      %v2781 = vpop.permute.xlu0 %2780
      %2782 = vrot.lane.b32.xlu0 %v2637, 12
      %v2783 = vpop.permute.xlu0 %2782
      %2784 = vrot.lane.b32.xlu0 %v2638, 12
      %v2785 = vpop.permute.xlu0 %2784
      %2786 = vrot.lane.b32.xlu0 %v2647, 12
      %v2787 = vpop.permute.xlu0 %2786
      %2788 = vrot.lane.b32.xlu0 %v2648, 12
      %v2789 = vpop.permute.xlu0 %2788
      %2790 = vrot.lane.b32.xlu0 %v2657, 12
      %v2791 = vpop.permute.xlu0 %2790
      %2792 = vrot.lane.b32.xlu0 %v2658, 12
      %v2793 = vpop.permute.xlu0 %2792
      %2794 = vrot.lane.b32.xlu0 %v2667, 12
      %v2795 = vpop.permute.xlu0 %2794
      %2796 = vrot.lane.b32.xlu0 %v2676, 12
      %v2797 = vpop.permute.xlu0 %2796
      %2798 = vrot.lane.b32.xlu0 %v2677, 12
      %v2799 = vpop.permute.xlu0 %2798
      %2800 = vrot.lane.b32.xlu0 %v2686, 12
      %v2801 = vpop.permute.xlu0 %2800
      %2802 = vrot.lane.b32.xlu0 %v2687, 12
      %v2803 = vpop.permute.xlu0 %2802
      %2804 = vrot.lane.b32.xlu0 %v2696, 12
      %v2805 = vpop.permute.xlu0 %2804
      %2806 = vrot.lane.b32.xlu0 %v2697, 12
      %v2807 = vpop.permute.xlu0 %2806
      %2808 = vrot.lane.b32.xlu0 %v2706, 12
      %v2809 = vpop.permute.xlu0 %2808
      %2810 = vrot.lane.b32.xlu0 %v2715, 12
      %v2811 = vpop.permute.xlu0 %2810
      %2812 = vrot.lane.b32.xlu0 %v2716, 12
      %v2813 = vpop.permute.xlu0 %2812
      %2814 = vrot.lane.b32.xlu0 %v2725, 12
      %v2815 = vpop.permute.xlu0 %2814
      %2816 = vrot.lane.b32.xlu0 %v2726, 12
      %v2817 = vpop.permute.xlu0 %2816
      %2818 = vrot.lane.b32.xlu0 %v2735, 12
      %v2819 = vpop.permute.xlu0 %2818
      %2820 = vrot.lane.b32.xlu0 %v2736, 12
      %v2821 = vpop.permute.xlu0 %2820
      %2822 = vrot.lane.b32.xlu0 %v2745, 12
      %v2823 = vpop.permute.xlu0 %2822
      %2824 = vrot.lane.b32.xlu0 %v2754, 12
      %v2825 = vpop.permute.xlu0 %2824
      %2826 = vrot.lane.b32.xlu0 %v2771, 12
      %v2827 = vpop.permute.xlu0 %2826
      %2828 = vrot.lane.b32.xlu0 %v2779, 12
      %v2829 = vpop.permute.xlu0 %2828
      %v2855 = vcombine.low %v798, %v801
      %v2856 = vcombine.low %v804, %v807
      %v2858 = vunpack.c.l.s4 1983009808
      %v2859 = vunpack.c.0.s8 %v2858
      %v2860 = vlaneseq
      %v2861 = vshrl.u32 %v2860, 7
      %v2862 = vsub.s32 %v2859, %v2861
      %v2863 = vrot.slane %v2855, %v2862
      %v2865 = vunpack.c.l.s4 1983009808
      %v2866 = vunpack.c.0.s8 %v2865
      %v2867 = vlaneseq
      %v2868 = vshrl.u32 %v2867, 7
      %v2869 = vsub.s32 %v2866, %v2868
      %v2870 = vrot.slane %v2856, %v2869
      %v2871 = vcombine.low %v2863, %v2870
      %v2872 = vcombine.low %v810, %v813
      %v2873 = vcombine.low %v816, %v820
      %v2875 = vunpack.c.l.s4 1983009808
      %v2876 = vunpack.c.0.s8 %v2875
      %v2877 = vlaneseq
      %v2878 = vshrl.u32 %v2877, 7
      %v2879 = vsub.s32 %v2876, %v2878
      %v2880 = vrot.slane %v2872, %v2879
      %v2882 = vunpack.c.l.s4 1983009808
      %v2883 = vunpack.c.0.s8 %v2882
      %v2884 = vlaneseq
      %v2885 = vshrl.u32 %v2884, 7
      %v2886 = vsub.s32 %v2883, %v2885
      %v2887 = vrot.slane %v2873, %v2886
      %v2888 = vcombine.low %v2880, %v2887
      %v2889 = vcombine.low %v823, %v826
      %v2890 = vcombine.low %v829, %v832
      %v2892 = vunpack.c.l.s4 1983009808
      %v2893 = vunpack.c.0.s8 %v2892
      %v2894 = vlaneseq
      %v2895 = vshrl.u32 %v2894, 7
      %v2896 = vsub.s32 %v2893, %v2895
      %v2897 = vrot.slane %v2889, %v2896
      %v2899 = vunpack.c.l.s4 1983009808
      %v2900 = vunpack.c.0.s8 %v2899
      %v2901 = vlaneseq
      %v2902 = vshrl.u32 %v2901, 7
      %v2903 = vsub.s32 %v2900, %v2902
      %v2904 = vrot.slane %v2890, %v2903
      %v2905 = vcombine.low %v2897, %v2904
      %v2906 = vcombine.low %v835, %v838
      %v2907 = vcombine.low %v842, %v845
      %v2909 = vunpack.c.l.s4 1983009808
      %v2910 = vunpack.c.0.s8 %v2909
      %v2911 = vlaneseq
      %v2912 = vshrl.u32 %v2911, 7
      %v2913 = vsub.s32 %v2910, %v2912
      %v2914 = vrot.slane %v2906, %v2913
      %v2916 = vunpack.c.l.s4 1983009808
      %v2917 = vunpack.c.0.s8 %v2916
      %v2918 = vlaneseq
      %v2919 = vshrl.u32 %v2918, 7
      %v2920 = vsub.s32 %v2917, %v2919
      %v2921 = vrot.slane %v2907, %v2920
      %v2922 = vcombine.low %v2914, %v2921
      %v2923 = vcombine.low %v848, %v851
      %v2924 = vcombine.low %v854, %v857
      %v2926 = vunpack.c.l.s4 1983009808
      %v2927 = vunpack.c.0.s8 %v2926
      %v2928 = vlaneseq
      %v2929 = vshrl.u32 %v2928, 7
      %v2930 = vsub.s32 %v2927, %v2929
      %v2931 = vrot.slane %v2923, %v2930
      %v2933 = vunpack.c.l.s4 1983009808
      %v2934 = vunpack.c.0.s8 %v2933
      %v2935 = vlaneseq
      %v2936 = vshrl.u32 %v2935, 7
      %v2937 = vsub.s32 %v2934, %v2936
      %v2938 = vrot.slane %v2924, %v2937
      %v2939 = vcombine.low %v2931, %v2938
      %v2940 = vcombine.low %v860, %v864
      %v2941 = vcombine.low %v867, %v870
      %v2943 = vunpack.c.l.s4 1983009808
      %v2944 = vunpack.c.0.s8 %v2943
      %v2945 = vlaneseq
      %v2946 = vshrl.u32 %v2945, 7
      %v2947 = vsub.s32 %v2944, %v2946
      %v2948 = vrot.slane %v2940, %v2947
      %v2950 = vunpack.c.l.s4 1983009808
      %v2951 = vunpack.c.0.s8 %v2950
      %v2952 = vlaneseq
      %v2953 = vshrl.u32 %v2952, 7
      %v2954 = vsub.s32 %v2951, %v2953
      %v2955 = vrot.slane %v2941, %v2954
      %v2956 = vcombine.low %v2948, %v2955
      %v2957 = vcombine.low %v873, %v876
      %v2958 = vcombine.low %v879, %v882
      %v2960 = vunpack.c.l.s4 1983009808
      %v2961 = vunpack.c.0.s8 %v2960
      %v2962 = vlaneseq
      %v2963 = vshrl.u32 %v2962, 7
      %v2964 = vsub.s32 %v2961, %v2963
      %v2965 = vrot.slane %v2957, %v2964
      %v2967 = vunpack.c.l.s4 1983009808
      %v2968 = vunpack.c.0.s8 %v2967
      %v2969 = vlaneseq
      %v2970 = vshrl.u32 %v2969, 7
      %v2971 = vsub.s32 %v2968, %v2970
      %v2972 = vrot.slane %v2958, %v2971
      %v2973 = vcombine.low %v2965, %v2972
      %v2974 = vcombine.low %v886, %v889
      %v2975 = vcombine.low %v892, %v895
      %v2977 = vunpack.c.l.s4 1983009808
      %v2978 = vunpack.c.0.s8 %v2977
      %v2979 = vlaneseq
      %v2980 = vshrl.u32 %v2979, 7
      %v2981 = vsub.s32 %v2978, %v2980
      %v2982 = vrot.slane %v2974, %v2981
      %v2984 = vunpack.c.l.s4 1983009808
      %v2985 = vunpack.c.0.s8 %v2984
      %v2986 = vlaneseq
      %v2987 = vshrl.u32 %v2986, 7
      %v2988 = vsub.s32 %v2985, %v2987
      %v2989 = vrot.slane %v2975, %v2988
      %v2990 = vcombine.low %v2982, %v2989
      %v2991 = vcombine.low %v898, %v901
      %v2992 = vcombine.low %v904, %v908
      %v2994 = vunpack.c.l.s4 1983009808
      %v2995 = vunpack.c.0.s8 %v2994
      %v2996 = vlaneseq
      %v2997 = vshrl.u32 %v2996, 7
      %v2998 = vsub.s32 %v2995, %v2997
      %v2999 = vrot.slane %v2991, %v2998
      %v3001 = vunpack.c.l.s4 1983009808
      %v3002 = vunpack.c.0.s8 %v3001
      %v3003 = vlaneseq
      %v3004 = vshrl.u32 %v3003, 7
      %v3005 = vsub.s32 %v3002, %v3004
      %v3006 = vrot.slane %v2992, %v3005
      %v3007 = vcombine.low %v2999, %v3006
      %v3008 = vcombine.low %v911, %v914
      %v3009 = vcombine.low %v917, %v920
      %v3011 = vunpack.c.l.s4 1983009808
      %v3012 = vunpack.c.0.s8 %v3011
      %v3013 = vlaneseq
      %v3014 = vshrl.u32 %v3013, 7
      %v3015 = vsub.s32 %v3012, %v3014
      %v3016 = vrot.slane %v3008, %v3015
      %v3018 = vunpack.c.l.s4 1983009808
      %v3019 = vunpack.c.0.s8 %v3018
      %v3020 = vlaneseq
      %v3021 = vshrl.u32 %v3020, 7
      %v3022 = vsub.s32 %v3019, %v3021
      %v3023 = vrot.slane %v3009, %v3022
      %v3024 = vcombine.low %v3016, %v3023
      %v3025 = vcombine.low %v923, %v926
      %v3026 = vcombine.low %v930, %v933
      %v3028 = vunpack.c.l.s4 1983009808
      %v3029 = vunpack.c.0.s8 %v3028
      %v3030 = vlaneseq
      %v3031 = vshrl.u32 %v3030, 7
      %v3032 = vsub.s32 %v3029, %v3031
      %v3033 = vrot.slane %v3025, %v3032
      %v3035 = vunpack.c.l.s4 1983009808
      %v3036 = vunpack.c.0.s8 %v3035
      %v3037 = vlaneseq
      %v3038 = vshrl.u32 %v3037, 7
      %v3039 = vsub.s32 %v3036, %v3038
      %v3040 = vrot.slane %v3026, %v3039
      %v3041 = vcombine.low %v3033, %v3040
      %v3042 = vcombine.low %v936, %v939
      %v3043 = vcombine.low %v942, %v945
      %v3045 = vunpack.c.l.s4 1983009808
      %v3046 = vunpack.c.0.s8 %v3045
      %v3047 = vlaneseq
      %v3048 = vshrl.u32 %v3047, 7
      %v3049 = vsub.s32 %v3046, %v3048
      %v3050 = vrot.slane %v3042, %v3049
      %v3052 = vunpack.c.l.s4 1983009808
      %v3053 = vunpack.c.0.s8 %v3052
      %v3054 = vlaneseq
      %v3055 = vshrl.u32 %v3054, 7
      %v3056 = vsub.s32 %v3053, %v3055
      %v3057 = vrot.slane %v3043, %v3056
      %v3058 = vcombine.low %v3050, %v3057
      %v3059 = vcombine.low %v948, %v952
      %v3060 = vcombine.low %v955, %v958
      %v3062 = vunpack.c.l.s4 1983009808
      %v3063 = vunpack.c.0.s8 %v3062
      %v3064 = vlaneseq
      %v3065 = vshrl.u32 %v3064, 7
      %v3066 = vsub.s32 %v3063, %v3065
      %v3067 = vrot.slane %v3059, %v3066
      %v3069 = vunpack.c.l.s4 1983009808
      %v3070 = vunpack.c.0.s8 %v3069
      %v3071 = vlaneseq
      %v3072 = vshrl.u32 %v3071, 7
      %v3073 = vsub.s32 %v3070, %v3072
      %v3074 = vrot.slane %v3060, %v3073
      %v3075 = vcombine.low %v3067, %v3074
      %v3076 = vcombine.low %v961, %v964
      %v3077 = vcombine.low %v967, %v970
      %v3079 = vunpack.c.l.s4 1983009808
      %v3080 = vunpack.c.0.s8 %v3079
      %v3081 = vlaneseq
      %v3082 = vshrl.u32 %v3081, 7
      %v3083 = vsub.s32 %v3080, %v3082
      %v3084 = vrot.slane %v3076, %v3083
      %v3086 = vunpack.c.l.s4 1983009808
      %v3087 = vunpack.c.0.s8 %v3086
      %v3088 = vlaneseq
      %v3089 = vshrl.u32 %v3088, 7
      %v3090 = vsub.s32 %v3087, %v3089
      %v3091 = vrot.slane %v3077, %v3090
      %v3092 = vcombine.low %v3084, %v3091
      %v3093 = vcombine.low %v974, %v977
      %v3094 = vcombine.low %v980, %v983
      %v3096 = vunpack.c.l.s4 1983009808
      %v3097 = vunpack.c.0.s8 %v3096
      %v3098 = vlaneseq
      %v3099 = vshrl.u32 %v3098, 7
      %v3100 = vsub.s32 %v3097, %v3099
      %v3101 = vrot.slane %v3093, %v3100
      %v3103 = vunpack.c.l.s4 1983009808
      %v3104 = vunpack.c.0.s8 %v3103
      %v3105 = vlaneseq
      %v3106 = vshrl.u32 %v3105, 7
      %v3107 = vsub.s32 %v3104, %v3106
      %v3108 = vrot.slane %v3094, %v3107
      %v3109 = vcombine.low %v3101, %v3108
      %v3110 = vcombine.low %v986, %v989
      %v3111 = vcombine.low %v992, %v996
      %v3113 = vunpack.c.l.s4 1983009808
      %v3114 = vunpack.c.0.s8 %v3113
      %v3115 = vlaneseq
      %v3116 = vshrl.u32 %v3115, 7
      %v3117 = vsub.s32 %v3114, %v3116
      %v3118 = vrot.slane %v3110, %v3117
      %v3120 = vunpack.c.l.s4 1983009808
      %v3121 = vunpack.c.0.s8 %v3120
      %v3122 = vlaneseq
      %v3123 = vshrl.u32 %v3122, 7
      %v3124 = vsub.s32 %v3121, %v3123
      %v3125 = vrot.slane %v3111, %v3124
      %v3126 = vcombine.low %v3118, %v3125
      %v3127 = vcombine.low %v999, %v1002
      %v3128 = vcombine.low %v1005, %v1008
      %v3130 = vunpack.c.l.s4 1983009808
      %v3131 = vunpack.c.0.s8 %v3130
      %v3132 = vlaneseq
      %v3133 = vshrl.u32 %v3132, 7
      %v3134 = vsub.s32 %v3131, %v3133
      %v3135 = vrot.slane %v3127, %v3134
      %v3137 = vunpack.c.l.s4 1983009808
      %v3138 = vunpack.c.0.s8 %v3137
      %v3139 = vlaneseq
      %v3140 = vshrl.u32 %v3139, 7
      %v3141 = vsub.s32 %v3138, %v3140
      %v3142 = vrot.slane %v3128, %v3141
      %v3143 = vcombine.low %v3135, %v3142
      %v3144 = vcombine.low %v1011, %v1014
      %v3145 = vcombine.low %v1018, %v1021
      %v3147 = vunpack.c.l.s4 1983009808
      %v3148 = vunpack.c.0.s8 %v3147
      %v3149 = vlaneseq
      %v3150 = vshrl.u32 %v3149, 7
      %v3151 = vsub.s32 %v3148, %v3150
      %v3152 = vrot.slane %v3144, %v3151
      %v3154 = vunpack.c.l.s4 1983009808
      %v3155 = vunpack.c.0.s8 %v3154
      %v3156 = vlaneseq
      %v3157 = vshrl.u32 %v3156, 7
      %v3158 = vsub.s32 %v3155, %v3157
      %v3159 = vrot.slane %v3145, %v3158
      %v3160 = vcombine.low %v3152, %v3159
      %v3161 = vcombine.low %v1024, %v1027
      %v3162 = vcombine.low %v1030, %v1033
      %v3164 = vunpack.c.l.s4 1983009808
      %v3165 = vunpack.c.0.s8 %v3164
      %v3166 = vlaneseq
      %v3167 = vshrl.u32 %v3166, 7
      %v3168 = vsub.s32 %v3165, %v3167
      %v3169 = vrot.slane %v3161, %v3168
      %v3171 = vunpack.c.l.s4 1983009808
      %v3172 = vunpack.c.0.s8 %v3171
      %v3173 = vlaneseq
      %v3174 = vshrl.u32 %v3173, 7
      %v3175 = vsub.s32 %v3172, %v3174
      %v3176 = vrot.slane %v3162, %v3175
      %v3177 = vcombine.low %v3169, %v3176
      %v3178 = vcombine.low %v1036, %v1040
      %v3179 = vcombine.low %v1043, %v1046
      %v3181 = vunpack.c.l.s4 1983009808
      %v3182 = vunpack.c.0.s8 %v3181
      %v3183 = vlaneseq
      %v3184 = vshrl.u32 %v3183, 7
      %v3185 = vsub.s32 %v3182, %v3184
      %v3186 = vrot.slane %v3178, %v3185
      %v3188 = vunpack.c.l.s4 1983009808
      %v3189 = vunpack.c.0.s8 %v3188
      %v3190 = vlaneseq
      %v3191 = vshrl.u32 %v3190, 7
      %v3192 = vsub.s32 %v3189, %v3191
      %v3193 = vrot.slane %v3179, %v3192
      %v3194 = vcombine.low %v3186, %v3193
      %v3195 = vcombine.low %v1049, %v1052
      %v3196 = vcombine.low %v1055, %v1058
      %v3198 = vunpack.c.l.s4 1983009808
      %v3199 = vunpack.c.0.s8 %v3198
      %v3200 = vlaneseq
      %v3201 = vshrl.u32 %v3200, 7
      %v3202 = vsub.s32 %v3199, %v3201
      %v3203 = vrot.slane %v3195, %v3202
      %v3205 = vunpack.c.l.s4 1983009808
      %v3206 = vunpack.c.0.s8 %v3205
      %v3207 = vlaneseq
      %v3208 = vshrl.u32 %v3207, 7
      %v3209 = vsub.s32 %v3206, %v3208
      %v3210 = vrot.slane %v3196, %v3209
      %v3211 = vcombine.low %v3203, %v3210
      %v3212 = vcombine.low %v1062, %v1065
      %v3213 = vcombine.low %v1068, %v1071
      %v3215 = vunpack.c.l.s4 1983009808
      %v3216 = vunpack.c.0.s8 %v3215
      %v3217 = vlaneseq
      %v3218 = vshrl.u32 %v3217, 7
      %v3219 = vsub.s32 %v3216, %v3218
      %v3220 = vrot.slane %v3212, %v3219
      %v3222 = vunpack.c.l.s4 1983009808
      %v3223 = vunpack.c.0.s8 %v3222
      %v3224 = vlaneseq
      %v3225 = vshrl.u32 %v3224, 7
      %v3226 = vsub.s32 %v3223, %v3225
      %v3227 = vrot.slane %v3213, %v3226
      %v3228 = vcombine.low %v3220, %v3227
      %v3229 = vcombine.low %v1074, %v1077
      %v3230 = vcombine.low %v1080, %v1120
      %v3232 = vunpack.c.l.s4 1983009808
      %v3233 = vunpack.c.0.s8 %v3232
      %v3234 = vlaneseq
      %v3235 = vshrl.u32 %v3234, 7
      %v3236 = vsub.s32 %v3233, %v3235
      %v3237 = vrot.slane %v3229, %v3236
      %v3239 = vunpack.c.l.s4 1983009808
      %v3240 = vunpack.c.0.s8 %v3239
      %v3241 = vlaneseq
      %v3242 = vshrl.u32 %v3241, 7
      %v3243 = vsub.s32 %v3240, %v3242
      %v3244 = vrot.slane %v3230, %v3243
      %v3245 = vcombine.low %v3237, %v3244
      %v3246 = vcombine.low %v1123, %v1126
      %v3247 = vcombine.low %v1129, %v1132
      %v3249 = vunpack.c.l.s4 1983009808
      %v3250 = vunpack.c.0.s8 %v3249
      %v3251 = vlaneseq
      %v3252 = vshrl.u32 %v3251, 7
      %v3253 = vsub.s32 %v3250, %v3252
      %v3254 = vrot.slane %v3246, %v3253
      %v3256 = vunpack.c.l.s4 1983009808
      %v3257 = vunpack.c.0.s8 %v3256
      %v3258 = vlaneseq
      %v3259 = vshrl.u32 %v3258, 7
      %v3260 = vsub.s32 %v3257, %v3259
      %v3261 = vrot.slane %v3247, %v3260
      %v3262 = vcombine.low %v3254, %v3261
      %v3263 = vcombine.low %v1135, %v1138
      %v3265 = vunpack.c.l.s4 1983009808
      %v3266 = vunpack.c.0.s8 %v3265
      %v3267 = vlaneseq
      %v3268 = vshrl.u32 %v3267, 7
      %v3269 = vsub.s32 %v3266, %v3268
      %v3270 = vrot.slane %v3263, %v3269
      %3271 = vrot.lane.b32.xlu0 %v2871, 16
      %v3272 = vpop.permute.xlu0 %3271
      %3273 = vrot.lane.b32.xlu0 %v2888, 16
      %v3274 = vpop.permute.xlu0 %3273
      %3275 = vrot.lane.b32.xlu0 %v2905, 16
      %v3276 = vpop.permute.xlu0 %3275
      %3277 = vrot.lane.b32.xlu0 %v2922, 16
      %v3278 = vpop.permute.xlu0 %3277
      %3279 = vrot.lane.b32.xlu0 %v2939, 16
      %v3280 = vpop.permute.xlu0 %3279
      %3281 = vrot.lane.b32.xlu0 %v2956, 16
      %v3282 = vpop.permute.xlu0 %3281
      %3283 = vrot.lane.b32.xlu0 %v2973, 16
      %v3284 = vpop.permute.xlu0 %3283
      %3285 = vrot.lane.b32.xlu0 %v2990, 16
      %v3286 = vpop.permute.xlu0 %3285
      %3287 = vrot.lane.b32.xlu0 %v3007, 16
      %v3288 = vpop.permute.xlu0 %3287
      %3289 = vrot.lane.b32.xlu0 %v3024, 16
      %v3290 = vpop.permute.xlu0 %3289
      %3291 = vrot.lane.b32.xlu0 %v3041, 16
      %v3292 = vpop.permute.xlu0 %3291
      %3293 = vrot.lane.b32.xlu0 %v3058, 16
      %v3294 = vpop.permute.xlu0 %3293
      %3295 = vrot.lane.b32.xlu0 %v3075, 16
      %v3296 = vpop.permute.xlu0 %3295
      %3297 = vrot.lane.b32.xlu0 %v3092, 16
      %v3298 = vpop.permute.xlu0 %3297
      %3299 = vrot.lane.b32.xlu0 %v3109, 16
      %v3300 = vpop.permute.xlu0 %3299
      %3301 = vrot.lane.b32.xlu0 %v3126, 16
      %v3302 = vpop.permute.xlu0 %3301
      %3303 = vrot.lane.b32.xlu0 %v3143, 16
      %v3304 = vpop.permute.xlu0 %3303
      %3305 = vrot.lane.b32.xlu0 %v3160, 16
      %v3306 = vpop.permute.xlu0 %3305
      %3307 = vrot.lane.b32.xlu0 %v3177, 16
      %v3308 = vpop.permute.xlu0 %3307
      %3309 = vrot.lane.b32.xlu0 %v3194, 16
      %v3310 = vpop.permute.xlu0 %3309
      %3311 = vrot.lane.b32.xlu0 %v3211, 16
      %v3312 = vpop.permute.xlu0 %3311
      %3313 = vrot.lane.b32.xlu0 %v3228, 16
      %v3314 = vpop.permute.xlu0 %3313
      %3315 = vrot.lane.b32.xlu0 %v3245, 16
      %v3316 = vpop.permute.xlu0 %3315
      %3317 = vrot.lane.b32.xlu0 %v3262, 16
      %v3318 = vpop.permute.xlu0 %3317
      %3319 = vrot.lane.b32.xlu0 %v3270, 16
      %v3320 = vpop.permute.xlu0 %3319
      %v3346 = vcombine.low %v753, %v371
      %v3348 = vunpack.c.l.s4 1983009808
      %v3349 = vunpack.c.0.s8 %v3348
      %v3350 = vlaneseq
      %v3351 = vshrl.u32 %v3350, 7
      %v3352 = vsub.s32 %v3349, %v3351
      %v3353 = vrot.slane %v3346, %v3352
      %v3354 = vcombine.low %v1256, %v3353
      %v3355 = vcombine.low %v387, %v754
      %v3357 = vunpack.c.l.s4 1983009808
      %v3358 = vunpack.c.0.s8 %v3357
      %v3359 = vlaneseq
      %v3360 = vshrl.u32 %v3359, 7
      %v3361 = vsub.s32 %v3358, %v3360
      %v3362 = vrot.slane %v3355, %v3361
      %v3363 = vcombine.low %v3362, %v1297
      %v3364 = vcombine.low %v755, %v437
      %v3366 = vunpack.c.l.s4 1983009808
      %v3367 = vunpack.c.0.s8 %v3366
      %v3368 = vlaneseq
      %v3369 = vshrl.u32 %v3368, 7
      %v3370 = vsub.s32 %v3367, %v3369
      %v3371 = vrot.slane %v3364, %v3370
      %v3372 = vcombine.low %v3371, %v1331
      %v3373 = vcombine.low %v453, %v756
      %v3375 = vunpack.c.l.s4 1983009808
      %v3376 = vunpack.c.0.s8 %v3375
      %v3377 = vlaneseq
      %v3378 = vshrl.u32 %v3377, 7
      %v3379 = vsub.s32 %v3376, %v3378
      %v3380 = vrot.slane %v3373, %v3379
      %v3381 = vcombine.low %v1341, %v3380
      %v3382 = vcombine.low %v757, %v503
      %v3384 = vunpack.c.l.s4 1983009808
      %v3385 = vunpack.c.0.s8 %v3384
      %v3386 = vlaneseq
      %v3387 = vshrl.u32 %v3386, 7
      %v3388 = vsub.s32 %v3385, %v3387
      %v3389 = vrot.slane %v3382, %v3388
      %v3390 = vcombine.low %v1375, %v3389
      %v3391 = vcombine.low %v519, %v758
      %v3393 = vunpack.c.l.s4 1983009808
      %v3394 = vunpack.c.0.s8 %v3393
      %v3395 = vlaneseq
      %v3396 = vshrl.u32 %v3395, 7
      %v3397 = vsub.s32 %v3394, %v3396
      %v3398 = vrot.slane %v3391, %v3397
      %v3399 = vcombine.low %v3398, %v1416
      %v3400 = vcombine.low %v759, %v569
      %v3402 = vunpack.c.l.s4 1983009808
      %v3403 = vunpack.c.0.s8 %v3402
      %v3404 = vlaneseq
      %v3405 = vshrl.u32 %v3404, 7
      %v3406 = vsub.s32 %v3403, %v3405
      %v3407 = vrot.slane %v3400, %v3406
      %v3408 = vcombine.low %v3407, %v1450
      %v3409 = vcombine.low %v585, %v760
      %v3411 = vunpack.c.l.s4 1983009808
      %v3412 = vunpack.c.0.s8 %v3411
      %v3413 = vlaneseq
      %v3414 = vshrl.u32 %v3413, 7
      %v3415 = vsub.s32 %v3412, %v3414
      %v3416 = vrot.slane %v3409, %v3415
      %v3417 = vcombine.low %v1460, %v3416
      %v3418 = vcombine.low %v761, %v635
      %v3420 = vunpack.c.l.s4 1983009808
      %v3421 = vunpack.c.0.s8 %v3420
      %v3422 = vlaneseq
      %v3423 = vshrl.u32 %v3422, 7
      %v3424 = vsub.s32 %v3421, %v3423
      %v3425 = vrot.slane %v3418, %v3424
      %v3426 = vcombine.low %v1494, %v3425
      %v3427 = vcombine.low %v651, %v762
      %v3429 = vunpack.c.l.s4 1983009808
      %v3430 = vunpack.c.0.s8 %v3429
      %v3431 = vlaneseq
      %v3432 = vshrl.u32 %v3431, 7
      %v3433 = vsub.s32 %v3430, %v3432
      %v3434 = vrot.slane %v3427, %v3433
      %v3435 = vcombine.low %v3434, %v1535
      %v3436 = vcombine.low %v763, %v701
      %v3438 = vunpack.c.l.s4 1983009808
      %v3439 = vunpack.c.0.s8 %v3438
      %v3440 = vlaneseq
      %v3441 = vshrl.u32 %v3440, 7
      %v3442 = vsub.s32 %v3439, %v3441
      %v3443 = vrot.slane %v3436, %v3442
      %v3444 = vcombine.low %v3443, %v1569
      %v3445 = vcombine.low %v717, %v764
      %v3447 = vunpack.c.l.s4 1983009808
      %v3448 = vunpack.c.0.s8 %v3447
      %v3449 = vlaneseq
      %v3450 = vshrl.u32 %v3449, 7
      %v3451 = vsub.s32 %v3448, %v3450
      %v3452 = vrot.slane %v3445, %v3451
      %v3453 = vcombine.low %v1579, %v3452
      %v3454 = vcombine.low %v765, %v1098
      %v3456 = vunpack.c.l.s4 1983009808
      %v3457 = vunpack.c.0.s8 %v3456
      %v3458 = vlaneseq
      %v3459 = vshrl.u32 %v3458, 7
      %v3460 = vsub.s32 %v3457, %v3459
      %v3461 = vrot.slane %v3454, %v3460
      %v3462 = vcombine.low %v1612, %v3461
      %v3463 = vcombine.low %v1097, %v1099
      %v3464 = vcombine.low %v1107, %v1115
      %v3466 = vunpack.c.l.s4 1983009808
      %v3467 = vunpack.c.0.s8 %v3466
      %v3468 = vlaneseq
      %v3469 = vshrl.u32 %v3468, 7
      %v3470 = vsub.s32 %v3467, %v3469
      %v3471 = vrot.slane %v3463, %v3470
      %v3473 = vunpack.c.l.s4 1983009808
      %v3474 = vunpack.c.0.s8 %v3473
      %v3475 = vlaneseq
      %v3476 = vshrl.u32 %v3475, 7
      %v3477 = vsub.s32 %v3474, %v3476
      %v3478 = vrot.slane %v3464, %v3477
      %v3479 = vcombine.low %v3471, %v3478
      %v3480 = vcombine.low %v1114, %v1116
      %v3482 = vunpack.c.l.s4 1983009808
      %v3483 = vunpack.c.0.s8 %v3482
      %v3484 = vlaneseq
      %v3485 = vshrl.u32 %v3484, 7
      %v3486 = vsub.s32 %v3483, %v3485
      %v3487 = vrot.slane %v3480, %v3486
      %3488 = vrot.lane.b32.xlu0 %v1247, 20
      %v3489 = vpop.permute.xlu0 %3488
      %3490 = vrot.lane.b32.xlu0 %v3354, 20
      %v3491 = vpop.permute.xlu0 %3490
      %3492 = vrot.lane.b32.xlu0 %v1281, 20
      %v3493 = vpop.permute.xlu0 %3492
      %3494 = vrot.lane.b32.xlu0 %v3363, 20
      %v3495 = vpop.permute.xlu0 %3494
      %3496 = vrot.lane.b32.xlu0 %v1315, 20
      %v3497 = vpop.permute.xlu0 %3496
      %3498 = vrot.lane.b32.xlu0 %v3372, 20
      %v3499 = vpop.permute.xlu0 %3498
      %3500 = vrot.lane.b32.xlu0 %v3381, 20
      %v3501 = vpop.permute.xlu0 %3500
      %3502 = vrot.lane.b32.xlu0 %v1366, 20
      %v3503 = vpop.permute.xlu0 %3502
      %3504 = vrot.lane.b32.xlu0 %v3390, 20
      %v3505 = vpop.permute.xlu0 %3504
      %3506 = vrot.lane.b32.xlu0 %v1400, 20
      %v3507 = vpop.permute.xlu0 %3506
      %3508 = vrot.lane.b32.xlu0 %v3399, 20
      %v3509 = vpop.permute.xlu0 %3508
      %3510 = vrot.lane.b32.xlu0 %v1434, 20
      %v3511 = vpop.permute.xlu0 %3510
      %3512 = vrot.lane.b32.xlu0 %v3408, 20
      %v3513 = vpop.permute.xlu0 %3512
      %3514 = vrot.lane.b32.xlu0 %v3417, 20
      %v3515 = vpop.permute.xlu0 %3514
      %3516 = vrot.lane.b32.xlu0 %v1485, 20
      %v3517 = vpop.permute.xlu0 %3516
      %3518 = vrot.lane.b32.xlu0 %v3426, 20
      %v3519 = vpop.permute.xlu0 %3518
      %3520 = vrot.lane.b32.xlu0 %v1519, 20
      %v3521 = vpop.permute.xlu0 %3520
      %3522 = vrot.lane.b32.xlu0 %v3435, 20
      %v3523 = vpop.permute.xlu0 %3522
      %3524 = vrot.lane.b32.xlu0 %v1553, 20
      %v3525 = vpop.permute.xlu0 %3524
      %3526 = vrot.lane.b32.xlu0 %v3444, 20
      %v3527 = vpop.permute.xlu0 %3526
      %3528 = vrot.lane.b32.xlu0 %v3453, 20
      %v3529 = vpop.permute.xlu0 %3528
      %3530 = vrot.lane.b32.xlu0 %v1604, 20
      %v3531 = vpop.permute.xlu0 %3530
      %3532 = vrot.lane.b32.xlu0 %v3462, 20
      %v3533 = vpop.permute.xlu0 %3532
      %3534 = vrot.lane.b32.xlu0 %v3479, 20
      %v3535 = vpop.permute.xlu0 %3534
      %3536 = vrot.lane.b32.xlu0 %v3487, 20
      %v3537 = vpop.permute.xlu0 %3536
      %v3563 = vcombine.low %v1263, %v1273
      %v3564 = vcombine.low %v1280, %v1290
      %v3565 = vcombine.low %v1297, %v1307
      %v3566 = vcombine.low %v1314, %v1324
      %v3567 = vcombine.low %v1331, %v1341
      %v3568 = vcombine.low %v1348, %v1358
      %v3569 = vcombine.low %v1365, %v1375
      %v3570 = vcombine.low %v1382, %v1392
      %v3571 = vcombine.low %v1399, %v1409
      %v3572 = vcombine.low %v1416, %v1426
      %v3573 = vcombine.low %v1433, %v1443
      %v3574 = vcombine.low %v1450, %v1460
      %v3575 = vcombine.low %v1467, %v1477
      %v3576 = vcombine.low %v1484, %v1494
      %v3577 = vcombine.low %v1501, %v1511
      %v3578 = vcombine.low %v1518, %v1528
      %v3579 = vcombine.low %v1535, %v1545
      %v3580 = vcombine.low %v1552, %v1562
      %v3581 = vcombine.low %v1569, %v1579
      %v3582 = vcombine.low %v1586, %v1596
      %v3583 = vcombine.low %v1603, %v1612
      %v3584 = vcombine.low %v1090, %v1098
      %v3586 = vunpack.c.l.s4 1983009808
      %v3587 = vunpack.c.0.s8 %v3586
      %v3588 = vlaneseq
      %v3589 = vshrl.u32 %v3588, 7
      %v3590 = vsub.s32 %v3587, %v3589
      %v3591 = vrot.slane %v3584, %v3590
      %v3592 = vcombine.low %v3591, %v3471
      %v3593 = vcombine.low %v1114, %v1148
      %v3595 = vunpack.c.l.s4 1983009808
      %v3596 = vunpack.c.0.s8 %v3595
      %v3597 = vlaneseq
      %v3598 = vshrl.u32 %v3597, 7
      %v3599 = vsub.s32 %v3596, %v3598
      %v3600 = vrot.slane %v3593, %v3599
      %v3601 = vcombine.low %v3478, %v3600
      %v3602 = vcombine.low %v1156, %v1155
      %v3603 = vcombine.low %v1157, %v1165
      %v3605 = vunpack.c.l.s4 1983009808
      %v3606 = vunpack.c.0.s8 %v3605
      %v3607 = vlaneseq
      %v3608 = vshrl.u32 %v3607, 7
      %v3609 = vsub.s32 %v3606, %v3608
      %v3610 = vrot.slane %v3602, %v3609
      %v3612 = vunpack.c.l.s4 1983009808
      %v3613 = vunpack.c.0.s8 %v3612
      %v3614 = vlaneseq
      %v3615 = vshrl.u32 %v3614, 7
      %v3616 = vsub.s32 %v3613, %v3615
      %v3617 = vrot.slane %v3603, %v3616
      %v3618 = vcombine.low %v3610, %v3617
      %v3619 = vcombine.low %v1173, %v1172
      %v3621 = vunpack.c.l.s4 1983009808
      %v3622 = vunpack.c.0.s8 %v3621
      %v3623 = vlaneseq
      %v3624 = vshrl.u32 %v3623, 7
      %v3625 = vsub.s32 %v3622, %v3624
      %v3626 = vrot.slane %v3619, %v3625
      %3627 = vrot.lane.b32.xlu0 %v3563, 24
      %v3628 = vpop.permute.xlu0 %3627
      %3629 = vrot.lane.b32.xlu0 %v3564, 24
      %v3630 = vpop.permute.xlu0 %3629
      %3631 = vrot.lane.b32.xlu0 %v3565, 24
      %v3632 = vpop.permute.xlu0 %3631
      %3633 = vrot.lane.b32.xlu0 %v3566, 24
      %v3634 = vpop.permute.xlu0 %3633
      %3635 = vrot.lane.b32.xlu0 %v3567, 24
      %v3636 = vpop.permute.xlu0 %3635
      %3637 = vrot.lane.b32.xlu0 %v3568, 24
      %v3638 = vpop.permute.xlu0 %3637
      %3639 = vrot.lane.b32.xlu0 %v3569, 24
      %v3640 = vpop.permute.xlu0 %3639
      %3641 = vrot.lane.b32.xlu0 %v3570, 24
      %v3642 = vpop.permute.xlu0 %3641
      %3643 = vrot.lane.b32.xlu0 %v3571, 24
      %v3644 = vpop.permute.xlu0 %3643
      %3645 = vrot.lane.b32.xlu0 %v3572, 24
      %v3646 = vpop.permute.xlu0 %3645
      %3647 = vrot.lane.b32.xlu0 %v3573, 24
      %v3648 = vpop.permute.xlu0 %3647
      %3649 = vrot.lane.b32.xlu0 %v3574, 24
      %v3650 = vpop.permute.xlu0 %3649
      %3651 = vrot.lane.b32.xlu0 %v3575, 24
      %v3652 = vpop.permute.xlu0 %3651
      %3653 = vrot.lane.b32.xlu0 %v3576, 24
      %v3654 = vpop.permute.xlu0 %3653
      %3655 = vrot.lane.b32.xlu0 %v3577, 24
      %v3656 = vpop.permute.xlu0 %3655
      %3657 = vrot.lane.b32.xlu0 %v3578, 24
      %v3658 = vpop.permute.xlu0 %3657
      %3659 = vrot.lane.b32.xlu0 %v3579, 24
      %v3660 = vpop.permute.xlu0 %3659
      %3661 = vrot.lane.b32.xlu0 %v3580, 24
      %v3662 = vpop.permute.xlu0 %3661
      %3663 = vrot.lane.b32.xlu0 %v3581, 24
      %v3664 = vpop.permute.xlu0 %3663
      %3665 = vrot.lane.b32.xlu0 %v3582, 24
      %v3666 = vpop.permute.xlu0 %3665
      %3667 = vrot.lane.b32.xlu0 %v3583, 24
      %v3668 = vpop.permute.xlu0 %3667
      %3669 = vrot.lane.b32.xlu0 %v3592, 24
      %v3670 = vpop.permute.xlu0 %3669
      %3671 = vrot.lane.b32.xlu0 %v3601, 24
      %v3672 = vpop.permute.xlu0 %3671
      %3673 = vrot.lane.b32.xlu0 %v3618, 24
      %v3674 = vpop.permute.xlu0 %3673
      %3675 = vrot.lane.b32.xlu0 %v3626, 24
      %v3676 = vpop.permute.xlu0 %3675
      %v3702 = vcombine.low %v1704, %v1714
      %v3703 = vcombine.low %v1721, %v1731
      %v3704 = vcombine.low %v1738, %v1748
      %v3705 = vcombine.low %v1755, %v1765
      %v3706 = vcombine.low %v1772, %v1782
      %v3707 = vcombine.low %v1789, %v1799
      %v3708 = vcombine.low %v1806, %v1816
      %v3709 = vcombine.low %v1823, %v1833
      %v3710 = vcombine.low %v1840, %v1850
      %v3711 = vcombine.low %v1857, %v1867
      %v3712 = vcombine.low %v1874, %v1884
      %v3713 = vcombine.low %v1891, %v1901
      %v3714 = vcombine.low %v1908, %v1918
      %v3715 = vcombine.low %v1925, %v1935
      %v3716 = vcombine.low %v1942, %v1952
      %v3717 = vcombine.low %v1959, %v1969
      %v3718 = vcombine.low %v1976, %v1986
      %v3719 = vcombine.low %v1993, %v2003
      %v3720 = vcombine.low %v2010, %v2020
      %v3721 = vcombine.low %v2027, %v2037
      %v3722 = vcombine.low %v2044, %v2053
      %v3723 = vcombine.low %v1120, %v1123
      %v3724 = vcombine.low %v1126, %v1129
      %v3726 = vunpack.c.l.s4 1983009808
      %v3727 = vunpack.c.0.s8 %v3726
      %v3728 = vlaneseq
      %v3729 = vshrl.u32 %v3728, 7
      %v3730 = vsub.s32 %v3727, %v3729
      %v3731 = vrot.slane %v3723, %v3730
      %v3733 = vunpack.c.l.s4 1983009808
      %v3734 = vunpack.c.0.s8 %v3733
      %v3735 = vlaneseq
      %v3736 = vshrl.u32 %v3735, 7
      %v3737 = vsub.s32 %v3734, %v3736
      %v3738 = vrot.slane %v3724, %v3737
      %v3739 = vcombine.low %v3731, %v3738
      %v3740 = vcombine.low %v1132, %v1135
      %v3741 = vcombine.low %v1138, %v1178
      %v3743 = vunpack.c.l.s4 1983009808
      %v3744 = vunpack.c.0.s8 %v3743
      %v3745 = vlaneseq
      %v3746 = vshrl.u32 %v3745, 7
      %v3747 = vsub.s32 %v3744, %v3746
      %v3748 = vrot.slane %v3740, %v3747
      %v3750 = vunpack.c.l.s4 1983009808
      %v3751 = vunpack.c.0.s8 %v3750
      %v3752 = vlaneseq
      %v3753 = vshrl.u32 %v3752, 7
      %v3754 = vsub.s32 %v3751, %v3753
      %v3755 = vrot.slane %v3741, %v3754
      %v3756 = vcombine.low %v3748, %v3755
      %v3757 = vcombine.low %v1181, %v1184
      %v3758 = vcombine.low %v1187, %v1190
      %v3760 = vunpack.c.l.s4 1983009808
      %v3761 = vunpack.c.0.s8 %v3760
      %v3762 = vlaneseq
      %v3763 = vshrl.u32 %v3762, 7
      %v3764 = vsub.s32 %v3761, %v3763
      %v3765 = vrot.slane %v3757, %v3764
      %v3767 = vunpack.c.l.s4 1983009808
      %v3768 = vunpack.c.0.s8 %v3767
      %v3769 = vlaneseq
      %v3770 = vshrl.u32 %v3769, 7
      %v3771 = vsub.s32 %v3768, %v3770
      %v3772 = vrot.slane %v3758, %v3771
      %v3773 = vcombine.low %v3765, %v3772
      %v3774 = vcombine.low %v1193, %v1196
      %v3776 = vunpack.c.l.s4 1983009808
      %v3777 = vunpack.c.0.s8 %v3776
      %v3778 = vlaneseq
      %v3779 = vshrl.u32 %v3778, 7
      %v3780 = vsub.s32 %v3777, %v3779
      %v3781 = vrot.slane %v3774, %v3780
      %3782 = vrot.lane.b32.xlu0 %v3702, 28
      %v3783 = vpop.permute.xlu0 %3782
      %3784 = vrot.lane.b32.xlu0 %v3703, 28
      %v3785 = vpop.permute.xlu0 %3784
      %3786 = vrot.lane.b32.xlu0 %v3704, 28
      %v3787 = vpop.permute.xlu0 %3786
      %3788 = vrot.lane.b32.xlu0 %v3705, 28
      %v3789 = vpop.permute.xlu0 %3788
      %3790 = vrot.lane.b32.xlu0 %v3706, 28
      %v3791 = vpop.permute.xlu0 %3790
      %3792 = vrot.lane.b32.xlu0 %v3707, 28
      %v3793 = vpop.permute.xlu0 %3792
      %3794 = vrot.lane.b32.xlu0 %v3708, 28
      %v3795 = vpop.permute.xlu0 %3794
      %3796 = vrot.lane.b32.xlu0 %v3709, 28
      %v3797 = vpop.permute.xlu0 %3796
      %3798 = vrot.lane.b32.xlu0 %v3710, 28
      %v3799 = vpop.permute.xlu0 %3798
      %3800 = vrot.lane.b32.xlu0 %v3711, 28
      %v3801 = vpop.permute.xlu0 %3800
      %3802 = vrot.lane.b32.xlu0 %v3712, 28
      %v3803 = vpop.permute.xlu0 %3802
      %3804 = vrot.lane.b32.xlu0 %v3713, 28
      %v3805 = vpop.permute.xlu0 %3804
      %3806 = vrot.lane.b32.xlu0 %v3714, 28
      %v3807 = vpop.permute.xlu0 %3806
      %3808 = vrot.lane.b32.xlu0 %v3715, 28
      %v3809 = vpop.permute.xlu0 %3808
      %3810 = vrot.lane.b32.xlu0 %v3716, 28
      %v3811 = vpop.permute.xlu0 %3810
      %3812 = vrot.lane.b32.xlu0 %v3717, 28
      %v3813 = vpop.permute.xlu0 %3812
      %3814 = vrot.lane.b32.xlu0 %v3718, 28
      %v3815 = vpop.permute.xlu0 %3814
      %3816 = vrot.lane.b32.xlu0 %v3719, 28
      %v3817 = vpop.permute.xlu0 %3816
      %3818 = vrot.lane.b32.xlu0 %v3720, 28
      %v3819 = vpop.permute.xlu0 %3818
      %3820 = vrot.lane.b32.xlu0 %v3721, 28
      %v3821 = vpop.permute.xlu0 %3820
      %3822 = vrot.lane.b32.xlu0 %v3722, 28
      %v3823 = vpop.permute.xlu0 %3822
      %3824 = vrot.lane.b32.xlu0 %v3739, 28
      %v3825 = vpop.permute.xlu0 %3824
      %3826 = vrot.lane.b32.xlu0 %v3756, 28
      %v3827 = vpop.permute.xlu0 %3826
      %3828 = vrot.lane.b32.xlu0 %v3773, 28
      %v3829 = vpop.permute.xlu0 %3828
      %3830 = vrot.lane.b32.xlu0 %v3781, 28
      %v3831 = vpop.permute.xlu0 %3830
      %v3857 = vcombine.low %v2212, %v2222
      %v3858 = vcombine.low %v2246, %v2256
      %v3859 = vcombine.low %v2280, %v2290
      %v3860 = vcombine.low %v2297, %v2307
      %v3861 = vcombine.low %v2331, %v2341
      %v3862 = vcombine.low %v2365, %v2375
      %v3863 = vcombine.low %v2399, %v2409
      %v3864 = vcombine.low %v2416, %v2426
      %v3865 = vcombine.low %v2450, %v2460
      %v3866 = vcombine.low %v2484, %v2494
      %v3867 = vcombine.low %v2518, %v2528
      %v3868 = vcombine.low %v2535, %v2544
      %v3869 = vcombine.low %v1116, %v1156
      %v3871 = vunpack.c.l.s4 1983009808
      %v3872 = vunpack.c.0.s8 %v3871
      %v3873 = vlaneseq
      %v3874 = vshrl.u32 %v3873, 7
      %v3875 = vsub.s32 %v3872, %v3874
      %v3876 = vrot.slane %v3869, %v3875
      %v3877 = vcombine.low %v2779, %v3876
      %v3878 = vcombine.low %v1155, %v1157
      %v3879 = vcombine.low %v1165, %v1173
      %v3881 = vunpack.c.l.s4 1983009808
      %v3882 = vunpack.c.0.s8 %v3881
      %v3883 = vlaneseq
      %v3884 = vshrl.u32 %v3883, 7
      %v3885 = vsub.s32 %v3882, %v3884
      %v3886 = vrot.slane %v3878, %v3885
      %v3888 = vunpack.c.l.s4 1983009808
      %v3889 = vunpack.c.0.s8 %v3888
      %v3890 = vlaneseq
      %v3891 = vshrl.u32 %v3890, 7
      %v3892 = vsub.s32 %v3889, %v3891
      %v3893 = vrot.slane %v3879, %v3892
      %v3894 = vcombine.low %v3886, %v3893
      %v3895 = vcombine.low %v1172, %v1174
      %v3897 = vunpack.c.l.s4 1983009808
      %v3898 = vunpack.c.0.s8 %v3897
      %v3899 = vlaneseq
      %v3900 = vshrl.u32 %v3899, 7
      %v3901 = vsub.s32 %v3898, %v3900
      %v3902 = vrot.slane %v3895, %v3901
      %3903 = vrot.lane.b32.xlu0 %v2638, 32
      %v3904 = vpop.permute.xlu0 %3903
      %3905 = vrot.lane.b32.xlu0 %v3857, 32
      %v3906 = vpop.permute.xlu0 %3905
      %3907 = vrot.lane.b32.xlu0 %v2648, 32
      %v3908 = vpop.permute.xlu0 %3907
      %3909 = vrot.lane.b32.xlu0 %v3858, 32
      %v3910 = vpop.permute.xlu0 %3909
      %3911 = vrot.lane.b32.xlu0 %v2658, 32
      %v3912 = vpop.permute.xlu0 %3911
      %3913 = vrot.lane.b32.xlu0 %v3859, 32
      %v3914 = vpop.permute.xlu0 %3913
      %3915 = vrot.lane.b32.xlu0 %v3860, 32
      %v3916 = vpop.permute.xlu0 %3915
      %3917 = vrot.lane.b32.xlu0 %v2677, 32
      %v3918 = vpop.permute.xlu0 %3917
      %3919 = vrot.lane.b32.xlu0 %v3861, 32
      %v3920 = vpop.permute.xlu0 %3919
      %3921 = vrot.lane.b32.xlu0 %v2687, 32
      %v3922 = vpop.permute.xlu0 %3921
      %3923 = vrot.lane.b32.xlu0 %v3862, 32
      %v3924 = vpop.permute.xlu0 %3923
      %3925 = vrot.lane.b32.xlu0 %v2697, 32
      %v3926 = vpop.permute.xlu0 %3925
      %3927 = vrot.lane.b32.xlu0 %v3863, 32
      %v3928 = vpop.permute.xlu0 %3927
      %3929 = vrot.lane.b32.xlu0 %v3864, 32
      %v3930 = vpop.permute.xlu0 %3929
      %3931 = vrot.lane.b32.xlu0 %v2716, 32
      %v3932 = vpop.permute.xlu0 %3931
      %3933 = vrot.lane.b32.xlu0 %v3865, 32
      %v3934 = vpop.permute.xlu0 %3933
      %3935 = vrot.lane.b32.xlu0 %v2726, 32
      %v3936 = vpop.permute.xlu0 %3935
      %3937 = vrot.lane.b32.xlu0 %v3866, 32
      %v3938 = vpop.permute.xlu0 %3937
      %3939 = vrot.lane.b32.xlu0 %v2736, 32
      %v3940 = vpop.permute.xlu0 %3939
      %3941 = vrot.lane.b32.xlu0 %v3867, 32
      %v3942 = vpop.permute.xlu0 %3941
      %3943 = vrot.lane.b32.xlu0 %v3868, 32
      %v3944 = vpop.permute.xlu0 %3943
      %3945 = vrot.lane.b32.xlu0 %v2771, 32
      %v3946 = vpop.permute.xlu0 %3945
      %3947 = vrot.lane.b32.xlu0 %v3877, 32
      %v3948 = vpop.permute.xlu0 %3947
      %3949 = vrot.lane.b32.xlu0 %v3894, 32
      %v3950 = vpop.permute.xlu0 %3949
      %3951 = vrot.lane.b32.xlu0 %v3902, 32
      %v3952 = vpop.permute.xlu0 %3951
      %vm3978 = vcmask 31744
      %v3979 = vsel %vm3978, %v1213, %v2055
      %v3980 = vsel %vm3978, %v1230, %v2057
      %v3981 = vsel %vm3978, %v1247, %v2059
      %v3982 = vsel %vm3978, %v1264, %v2061
      %v3983 = vsel %vm3978, %v1281, %v2063
      %v3984 = vsel %vm3978, %v1298, %v2065
      %v3985 = vsel %vm3978, %v1315, %v2067
      %v3986 = vsel %vm3978, %v1332, %v2069
      %v3987 = vsel %vm3978, %v1349, %v2071
      %v3988 = vsel %vm3978, %v1366, %v2073
      %v3989 = vsel %vm3978, %v1383, %v2075
      %v3990 = vsel %vm3978, %v1400, %v2077
      %v3991 = vsel %vm3978, %v1417, %v2079
      %v3992 = vsel %vm3978, %v1434, %v2081
      %v3993 = vsel %vm3978, %v1451, %v2083
      %v3994 = vsel %vm3978, %v1468, %v2085
      %v3995 = vsel %vm3978, %v1485, %v2087
      %v3996 = vsel %vm3978, %v1502, %v2089
      %v3997 = vsel %vm3978, %v1519, %v2091
      %v3998 = vsel %vm3978, %v1536, %v2093
      %v3999 = vsel %vm3978, %v1553, %v2095
      %v4000 = vsel %vm3978, %v1570, %v2097
      %v4001 = vsel %vm3978, %v1587, %v2099
      %v4002 = vsel %vm3978, %v1604, %v2101
      %v4003 = vsel %vm3978, %v1612, %v2103
      %vm4004 = vcmask 64512
      %v4005 = vsel %vm4004, %v3979, %v2546
      %v4006 = vsel %vm4004, %v3980, %v2548
      %v4007 = vsel %vm4004, %v3981, %v2550
      %v4008 = vsel %vm4004, %v3982, %v2552
      %v4009 = vsel %vm4004, %v3983, %v2554
      %v4010 = vsel %vm4004, %v3984, %v2556
      %v4011 = vsel %vm4004, %v3985, %v2558
      %v4012 = vsel %vm4004, %v3986, %v2560
      %v4013 = vsel %vm4004, %v3987, %v2562
      %v4014 = vsel %vm4004, %v3988, %v2564
      %v4015 = vsel %vm4004, %v3989, %v2566
      %v4016 = vsel %vm4004, %v3990, %v2568
      %v4017 = vsel %vm4004, %v3991, %v2570
      %v4018 = vsel %vm4004, %v3992, %v2572
      %v4019 = vsel %vm4004, %v3993, %v2574
      %v4020 = vsel %vm4004, %v3994, %v2576
      %v4021 = vsel %vm4004, %v3995, %v2578
      %v4022 = vsel %vm4004, %v3996, %v2580
      %v4023 = vsel %vm4004, %v3997, %v2582
      %v4024 = vsel %vm4004, %v3998, %v2584
      %v4025 = vsel %vm4004, %v3999, %v2586
      %v4026 = vsel %vm4004, %v4000, %v2588
      %v4027 = vsel %vm4004, %v4001, %v2590
      %v4028 = vsel %vm4004, %v4002, %v2592
      %v4029 = vsel %vm4004, %v4003, %v2594
      %vm4030 = vcmask 97280
      %v4031 = vsel %vm4030, %v4005, %v2781
      %v4032 = vsel %vm4030, %v4006, %v2783
      %v4033 = vsel %vm4030, %v4007, %v2785
      %v4034 = vsel %vm4030, %v4008, %v2787
      %v4035 = vsel %vm4030, %v4009, %v2789
      %v4036 = vsel %vm4030, %v4010, %v2791
      %v4037 = vsel %vm4030, %v4011, %v2793
      %v4038 = vsel %vm4030, %v4012, %v2795
      %v4039 = vsel %vm4030, %v4013, %v2797
      %v4040 = vsel %vm4030, %v4014, %v2799
      %v4041 = vsel %vm4030, %v4015, %v2801
      %v4042 = vsel %vm4030, %v4016, %v2803
      %v4043 = vsel %vm4030, %v4017, %v2805
      %v4044 = vsel %vm4030, %v4018, %v2807
      %v4045 = vsel %vm4030, %v4019, %v2809
      %v4046 = vsel %vm4030, %v4020, %v2811
      %v4047 = vsel %vm4030, %v4021, %v2813
      %v4048 = vsel %vm4030, %v4022, %v2815
      %v4049 = vsel %vm4030, %v4023, %v2817
      %v4050 = vsel %vm4030, %v4024, %v2819
      %v4051 = vsel %vm4030, %v4025, %v2821
      %v4052 = vsel %vm4030, %v4026, %v2823
      %v4053 = vsel %vm4030, %v4027, %v2825
      %v4054 = vsel %vm4030, %v4028, %v2827
      %v4055 = vsel %vm4030, %v4029, %v2829
      %vm4056 = vcmask 130048
      %v4057 = vsel %vm4056, %v4031, %v3272
      %v4058 = vsel %vm4056, %v4032, %v3274
      %v4059 = vsel %vm4056, %v4033, %v3276
      %v4060 = vsel %vm4056, %v4034, %v3278
      %v4061 = vsel %vm4056, %v4035, %v3280
      %v4062 = vsel %vm4056, %v4036, %v3282
      %v4063 = vsel %vm4056, %v4037, %v3284
      %v4064 = vsel %vm4056, %v4038, %v3286
      %v4065 = vsel %vm4056, %v4039, %v3288
      %v4066 = vsel %vm4056, %v4040, %v3290
      %v4067 = vsel %vm4056, %v4041, %v3292
      %v4068 = vsel %vm4056, %v4042, %v3294
      %v4069 = vsel %vm4056, %v4043, %v3296
      %v4070 = vsel %vm4056, %v4044, %v3298
      %v4071 = vsel %vm4056, %v4045, %v3300
      %v4072 = vsel %vm4056, %v4046, %v3302
      %v4073 = vsel %vm4056, %v4047, %v3304
      %v4074 = vsel %vm4056, %v4048, %v3306
      %v4075 = vsel %vm4056, %v4049, %v3308
      %v4076 = vsel %vm4056, %v4050, %v3310
      %v4077 = vsel %vm4056, %v4051, %v3312
      %v4078 = vsel %vm4056, %v4052, %v3314
      %v4079 = vsel %vm4056, %v4053, %v3316
      %v4080 = vsel %vm4056, %v4054, %v3318
      %v4081 = vsel %vm4056, %v4055, %v3320
      %vm4082 = vcmask 162816
      %v4083 = vsel %vm4082, %v4057, %v3489
      %v4084 = vsel %vm4082, %v4058, %v3491
      %v4085 = vsel %vm4082, %v4059, %v3493
      %v4086 = vsel %vm4082, %v4060, %v3495
      %v4087 = vsel %vm4082, %v4061, %v3497
      %v4088 = vsel %vm4082, %v4062, %v3499
      %v4089 = vsel %vm4082, %v4063, %v3501
      %v4090 = vsel %vm4082, %v4064, %v3503
      %v4091 = vsel %vm4082, %v4065, %v3505
      %v4092 = vsel %vm4082, %v4066, %v3507
      %v4093 = vsel %vm4082, %v4067, %v3509
      %v4094 = vsel %vm4082, %v4068, %v3511
      %v4095 = vsel %vm4082, %v4069, %v3513
      %v4096 = vsel %vm4082, %v4070, %v3515
      %v4097 = vsel %vm4082, %v4071, %v3517
      %v4098 = vsel %vm4082, %v4072, %v3519
      %v4099 = vsel %vm4082, %v4073, %v3521
      %v4100 = vsel %vm4082, %v4074, %v3523
      %v4101 = vsel %vm4082, %v4075, %v3525
      %v4102 = vsel %vm4082, %v4076, %v3527
      %v4103 = vsel %vm4082, %v4077, %v3529
      %v4104 = vsel %vm4082, %v4078, %v3531
      %v4105 = vsel %vm4082, %v4079, %v3533
      %v4106 = vsel %vm4082, %v4080, %v3535
      %v4107 = vsel %vm4082, %v4081, %v3537
      %vm4108 = vcmask 195584
      %v4109 = vsel %vm4108, %v4083, %v3628
      %v4110 = vsel %vm4108, %v4084, %v3630
      %v4111 = vsel %vm4108, %v4085, %v3632
      %v4112 = vsel %vm4108, %v4086, %v3634
      %v4113 = vsel %vm4108, %v4087, %v3636
      %v4114 = vsel %vm4108, %v4088, %v3638
      %v4115 = vsel %vm4108, %v4089, %v3640
      %v4116 = vsel %vm4108, %v4090, %v3642
      %v4117 = vsel %vm4108, %v4091, %v3644
      %v4118 = vsel %vm4108, %v4092, %v3646
      %v4119 = vsel %vm4108, %v4093, %v3648
      %v4120 = vsel %vm4108, %v4094, %v3650
      %v4121 = vsel %vm4108, %v4095, %v3652
      %v4122 = vsel %vm4108, %v4096, %v3654
      %v4123 = vsel %vm4108, %v4097, %v3656
      %v4124 = vsel %vm4108, %v4098, %v3658
      %v4125 = vsel %vm4108, %v4099, %v3660
      %v4126 = vsel %vm4108, %v4100, %v3662
      %v4127 = vsel %vm4108, %v4101, %v3664
      %v4128 = vsel %vm4108, %v4102, %v3666
      %v4129 = vsel %vm4108, %v4103, %v3668
      %v4130 = vsel %vm4108, %v4104, %v3670
      %v4131 = vsel %vm4108, %v4105, %v3672
      %v4132 = vsel %vm4108, %v4106, %v3674
      %v4133 = vsel %vm4108, %v4107, %v3676
      %vm4134 = vcmask 228352
      %v4135 = vsel %vm4134, %v4109, %v3783
      %v4136 = vsel %vm4134, %v4110, %v3785
      %v4137 = vsel %vm4134, %v4111, %v3787
      %v4138 = vsel %vm4134, %v4112, %v3789
      %v4139 = vsel %vm4134, %v4113, %v3791
      %v4140 = vsel %vm4134, %v4114, %v3793
      %v4141 = vsel %vm4134, %v4115, %v3795
      %v4142 = vsel %vm4134, %v4116, %v3797
      %v4143 = vsel %vm4134, %v4117, %v3799
      %v4144 = vsel %vm4134, %v4118, %v3801
      %v4145 = vsel %vm4134, %v4119, %v3803
      %v4146 = vsel %vm4134, %v4120, %v3805
      %v4147 = vsel %vm4134, %v4121, %v3807
      %v4148 = vsel %vm4134, %v4122, %v3809
      %v4149 = vsel %vm4134, %v4123, %v3811
      %v4150 = vsel %vm4134, %v4124, %v3813
      %v4151 = vsel %vm4134, %v4125, %v3815
      %v4152 = vsel %vm4134, %v4126, %v3817
      %v4153 = vsel %vm4134, %v4127, %v3819
      %v4154 = vsel %vm4134, %v4128, %v3821
      %v4155 = vsel %vm4134, %v4129, %v3823
      %v4156 = vsel %vm4134, %v4130, %v3825
      %v4157 = vsel %vm4134, %v4131, %v3827
      %v4158 = vsel %vm4134, %v4132, %v3829
      %v4159 = vsel %vm4134, %v4133, %v3831
      %vm4160 = vcmask 261120
      %v4161 = vsel %vm4160, %v4135, %v3904
      %v4162 = vsel %vm4160, %v4136, %v3906
      %v4163 = vsel %vm4160, %v4137, %v3908
      %v4164 = vsel %vm4160, %v4138, %v3910
      %v4165 = vsel %vm4160, %v4139, %v3912
      %v4166 = vsel %vm4160, %v4140, %v3914
      %v4167 = vsel %vm4160, %v4141, %v3916
      %v4168 = vsel %vm4160, %v4142, %v3918
      %v4169 = vsel %vm4160, %v4143, %v3920
      %v4170 = vsel %vm4160, %v4144, %v3922
      %v4171 = vsel %vm4160, %v4145, %v3924
      %v4172 = vsel %vm4160, %v4146, %v3926
      %v4173 = vsel %vm4160, %v4147, %v3928
      %v4174 = vsel %vm4160, %v4148, %v3930
      %v4175 = vsel %vm4160, %v4149, %v3932
      %v4176 = vsel %vm4160, %v4150, %v3934
      %v4177 = vsel %vm4160, %v4151, %v3936
      %v4178 = vsel %vm4160, %v4152, %v3938
      %v4179 = vsel %vm4160, %v4153, %v3940
      %v4180 = vsel %vm4160, %v4154, %v3942
      %v4181 = vsel %vm4160, %v4155, %v3944
      %v4182 = vsel %vm4160, %v4156, %v3946
      %v4183 = vsel %vm4160, %v4157, %v3948
      %v4184 = vsel %vm4160, %v4158, %v3950
      %v4185 = vsel %vm4160, %v4159, %v3952
      %v4186 = vld [vmem:[%s2] sm:$0x1]
      %v4188 = vlaneseq
      %v4189 = vshrl.u32 %v4188, 7
      %v4190 = vsub.s32 0, %v4189
      %v4191 = vrot.slane %v4186, %v4190
      %vm4193 = vcmask 293888
      %v4195 = vsel %vm4193, %v4161, 0
      %v4198 = vsel %vm4193, %v4162, 0
      %v4201 = vsel %vm4193, %v4163, 0
      %v4204 = vsel %vm4193, %v4164, 0
      %v4207 = vsel %vm4193, %v4165, 0
      %v4210 = vsel %vm4193, %v4166, 0
      %v4213 = vsel %vm4193, %v4167, 0
      %v4216 = vsel %vm4193, %v4168, 0
      %v4219 = vsel %vm4193, %v4169, 0
      %v4222 = vsel %vm4193, %v4170, 0
      %v4225 = vsel %vm4193, %v4171, 0
      %v4228 = vsel %vm4193, %v4172, 0
      %v4231 = vsel %vm4193, %v4173, 0
      %v4234 = vsel %vm4193, %v4174, 0
      %v4237 = vsel %vm4193, %v4175, 0
      %v4240 = vsel %vm4193, %v4176, 0
      %v4243 = vsel %vm4193, %v4177, 0
      %v4246 = vsel %vm4193, %v4178, 0
      %v4249 = vsel %vm4193, %v4179, 0
      %v4252 = vsel %vm4193, %v4180, 0
      %v4255 = vsel %vm4193, %v4181, 0
      %v4258 = vsel %vm4193, %v4182, 0
      %v4261 = vsel %vm4193, %v4183, 0
      %v4264 = vsel %vm4193, %v4184, 0
      %v4267 = vsel %vm4193, %v4185, 0
      %vm4269 = vcmask 1043456
      %v4271 = vsel %vm4269, %v261, 0
      %4273 = vmatprep.subr.mxu0 0.0
      %4274 = vmatpush1.msra.mxu0 0.0
      %4275 = vmatprep.subr.mxu0 0.0
      %4276 = vmatpush1.msra.mxu0 0.0
      %4277 = vmatprep.subr.mxu0 0.0
      %4278 = vmatpush1.msra.mxu0 0.0
      %4279 = vmatprep.subr.mxu0 0.0
      %4280 = vmatpush1.msra.mxu0 0.0
      %4281 = vmatprep.subr.mxu0 0.0
      %4282 = vmatpush1.msra.mxu0 0.0
      %4283 = vmatprep.subr.mxu0 0.0
      %4284 = vmatpush1.msra.mxu0 0.0
      %4285 = vmatprep.subr.mxu0 0.0
      %4286 = vmatpush1.msra.mxu0 0.0
      %4287 = vmatprep.subr.mxu0 0.0
      %4288 = vmatpush1.msra.mxu0 0.0
      %4289 = vmatprep.subr.mxu0 0.0
      %4290 = vmatpush1.msra.mxu0 0.0
      %4291 = vmatprep.subr.mxu0 0.0
      %4292 = vmatpush1.msra.mxu0 0.0
      %4293 = vmatprep.subr.mxu0 0.0
      %4294 = vmatpush1.msra.mxu0 0.0
      %4295 = vmatprep.subr.mxu0 0.0
      %4296 = vmatpush1.msra.mxu0 %v4271
      %4297 = vmatprep.subr.mxu0 0.0
      %4298 = vmatpush1.msra.mxu0 %v260
      %4299 = vmatprep.subr.mxu0 0.0
      %4300 = vmatpush1.msra.mxu0 %v259
      %4301 = vmatprep.subr.mxu0 0.0
      %4302 = vmatpush1.msra.mxu0 %v258
      %4303 = vmatprep.subr.mxu0 0.0
      %4304 = vmatpush1.msra.mxu0 %v257
      %4305 = vmatprep.subr.mxu0 0.0
      %4306 = vmatpush2.msra.mxu0 0.0
      %4307 = vmatprep.subr.mxu0 0.0
      %4308 = vmatpush2.msra.mxu0 0.0
      %4309 = vmatprep.subr.mxu0 0.0
      %4310 = vmatpush2.msra.mxu0 0.0
      %4311 = vmatprep.subr.mxu0 0.0
      %4312 = vmatpush2.msra.mxu0 0.0
      %4313 = vmatprep.subr.mxu0 0.0
      %4314 = vmatpush2.msra.mxu0 0.0
      %4315 = vmatprep.subr.mxu0 0.0
      %4316 = vmatpush2.msra.mxu0 0.0
      %4317 = vmatprep.subr.mxu0 0.0
      %4318 = vmatpush2.msra.mxu0 0.0
      %4319 = vmatprep.subr.mxu0 0.0
      %4320 = vmatpush2.msra.mxu0 0.0
      %4321 = vmatprep.subr.mxu0 0.0
      %4322 = vmatpush2.msra.mxu0 0.0
      %4323 = vmatprep.subr.mxu0 0.0
      %4324 = vmatpush2.msra.mxu0 0.0
      %4325 = vmatprep.subr.mxu0 0.0
      %4326 = vmatpush2.msra.mxu0 0.0
      %4327 = vmatprep.subr.mxu0 0.0
      %4328 = vmatpush2.msra.mxu0 0.0
      %4329 = vmatprep.subr.mxu0 0.0
      %4330 = vmatpush2.msra.mxu0 0.0
      %4331 = vmatprep.subr.mxu0 0.0
      %4332 = vmatpush2.msra.mxu0 0.0
      %4333 = vmatprep.subr.mxu0 0.0
      %4334 = vmatpush2.msra.mxu0 0.0
      %4335 = vmatprep.subr.mxu0 0.0
      %4336 = vmatpush2.msra.mxu0 0.0
      %4337 = vmatprep.mubr.f32.mxu0 0.0
      %4338 = vmatmul.mubr.f32.gmra.mxu0 %v4195
      %v4339 = vpop.f32.mrf.mxu0
      %v4340 = vadd.f32 %v4191, %v4339
      %v4341 = vpop.f32.mrf.mxu0
      %4342 = vmatprep.mubr.f32.mxu0 0.0
      %4343 = vmatmul.mubr.f32.gmra.mxu0 %v4198
      %v4344 = vpop.f32.mrf.mxu0
      %v4345 = vadd.f32 %v4191, %v4344
      %v4346 = vpop.f32.mrf.mxu0
      %4347 = vmatprep.mubr.f32.mxu0 0.0
      %4348 = vmatmul.mubr.f32.gmra.mxu0 %v4201
      %v4349 = vpop.f32.mrf.mxu0
      %v4350 = vadd.f32 %v4191, %v4349
      %v4351 = vpop.f32.mrf.mxu0
      %4352 = vmatprep.mubr.f32.mxu0 0.0
      %4353 = vmatmul.mubr.f32.gmra.mxu0 %v4204
      %v4354 = vpop.f32.mrf.mxu0
      %v4355 = vadd.f32 %v4191, %v4354
      %v4356 = vpop.f32.mrf.mxu0
      %4357 = vmatprep.mubr.f32.mxu0 0.0
      %4358 = vmatmul.mubr.f32.gmra.mxu0 %v4207
      %v4359 = vpop.f32.mrf.mxu0
      %v4360 = vadd.f32 %v4191, %v4359
      %v4361 = vpop.f32.mrf.mxu0
      %4362 = vmatprep.mubr.f32.mxu0 0.0
      %4363 = vmatmul.mubr.f32.gmra.mxu0 %v4210
      %v4364 = vpop.f32.mrf.mxu0
      %v4365 = vadd.f32 %v4191, %v4364
      %v4366 = vpop.f32.mrf.mxu0
      %4367 = vmatprep.mubr.f32.mxu0 0.0
      %4368 = vmatmul.mubr.f32.gmra.mxu0 %v4213
      %v4369 = vpop.f32.mrf.mxu0
      %v4370 = vadd.f32 %v4191, %v4369
      %v4371 = vpop.f32.mrf.mxu0
      %4372 = vmatprep.mubr.f32.mxu0 0.0
      %4373 = vmatmul.mubr.f32.gmra.mxu0 %v4216
      %v4374 = vpop.f32.mrf.mxu0
      %v4375 = vadd.f32 %v4191, %v4374
      %v4376 = vpop.f32.mrf.mxu0
      %4377 = vmatprep.mubr.f32.mxu0 0.0
      %4378 = vmatmul.mubr.f32.gmra.mxu0 %v4219
      %v4379 = vpop.f32.mrf.mxu0
      %v4380 = vadd.f32 %v4191, %v4379
      %v4381 = vpop.f32.mrf.mxu0
      %4382 = vmatprep.mubr.f32.mxu0 0.0
      %4383 = vmatmul.mubr.f32.gmra.mxu0 %v4222
      %v4384 = vpop.f32.mrf.mxu0
      %v4385 = vadd.f32 %v4191, %v4384
      %v4386 = vpop.f32.mrf.mxu0
      %4387 = vmatprep.mubr.f32.mxu0 0.0
      %4388 = vmatmul.mubr.f32.gmra.mxu0 %v4225
      %v4389 = vpop.f32.mrf.mxu0
      %v4390 = vadd.f32 %v4191, %v4389
      %v4391 = vpop.f32.mrf.mxu0
      %4392 = vmatprep.mubr.f32.mxu0 0.0
      %4393 = vmatmul.mubr.f32.gmra.mxu0 %v4228
      %v4394 = vpop.f32.mrf.mxu0
      %v4395 = vadd.f32 %v4191, %v4394
      %v4396 = vpop.f32.mrf.mxu0
      %4397 = vmatprep.mubr.f32.mxu0 0.0
      %4398 = vmatmul.mubr.f32.gmra.mxu0 %v4231
      %v4399 = vpop.f32.mrf.mxu0
      %v4400 = vadd.f32 %v4191, %v4399
      %v4401 = vpop.f32.mrf.mxu0
      %4402 = vmatprep.mubr.f32.mxu0 0.0
      %4403 = vmatmul.mubr.f32.gmra.mxu0 %v4234
      %v4404 = vpop.f32.mrf.mxu0
      %v4405 = vadd.f32 %v4191, %v4404
      %v4406 = vpop.f32.mrf.mxu0
      %4407 = vmatprep.mubr.f32.mxu0 0.0
      %4408 = vmatmul.mubr.f32.gmra.mxu0 %v4237
      %v4409 = vpop.f32.mrf.mxu0
      %v4410 = vadd.f32 %v4191, %v4409
      %v4411 = vpop.f32.mrf.mxu0
      %4412 = vmatprep.mubr.f32.mxu0 0.0
      %4413 = vmatmul.mubr.f32.gmra.mxu0 %v4240
      %v4414 = vpop.f32.mrf.mxu0
      %v4415 = vadd.f32 %v4191, %v4414
      %v4416 = vpop.f32.mrf.mxu0
      %4417 = vmatprep.mubr.f32.mxu0 0.0
      %4418 = vmatmul.mubr.f32.gmra.mxu0 %v4243
      %v4419 = vpop.f32.mrf.mxu0
      %v4420 = vadd.f32 %v4191, %v4419
      %v4421 = vpop.f32.mrf.mxu0
      %4422 = vmatprep.mubr.f32.mxu0 0.0
      %4423 = vmatmul.mubr.f32.gmra.mxu0 %v4246
      %v4424 = vpop.f32.mrf.mxu0
      %v4425 = vadd.f32 %v4191, %v4424
      %v4426 = vpop.f32.mrf.mxu0
      %4427 = vmatprep.mubr.f32.mxu0 0.0
      %4428 = vmatmul.mubr.f32.gmra.mxu0 %v4249
      %v4429 = vpop.f32.mrf.mxu0
      %v4430 = vadd.f32 %v4191, %v4429
      %v4431 = vpop.f32.mrf.mxu0
      %4432 = vmatprep.mubr.f32.mxu0 0.0
      %4433 = vmatmul.mubr.f32.gmra.mxu0 %v4252
      %v4434 = vpop.f32.mrf.mxu0
      %v4435 = vadd.f32 %v4191, %v4434
      %v4436 = vpop.f32.mrf.mxu0
      %4437 = vmatprep.mubr.f32.mxu0 0.0
      %4438 = vmatmul.mubr.f32.gmra.mxu0 %v4255
      %v4439 = vpop.f32.mrf.mxu0
      %v4440 = vadd.f32 %v4191, %v4439
      %v4441 = vpop.f32.mrf.mxu0
      %4442 = vmatprep.mubr.f32.mxu0 0.0
      %4443 = vmatmul.mubr.f32.gmra.mxu0 %v4258
      %v4444 = vpop.f32.mrf.mxu0
      %v4445 = vadd.f32 %v4191, %v4444
      %v4446 = vpop.f32.mrf.mxu0
      %4447 = vmatprep.mubr.f32.mxu0 0.0
      %4448 = vmatmul.mubr.f32.gmra.mxu0 %v4261
      %v4449 = vpop.f32.mrf.mxu0
      %v4450 = vadd.f32 %v4191, %v4449
      %v4451 = vpop.f32.mrf.mxu0
      %4452 = vmatprep.mubr.f32.mxu0 0.0
      %4453 = vmatmul.mubr.f32.gmra.mxu0 %v4264
      %v4454 = vpop.f32.mrf.mxu0
      %v4455 = vadd.f32 %v4191, %v4454
      %v4456 = vpop.f32.mrf.mxu0
      %4457 = vmatprep.mubr.f32.mxu0 0.0
      %4458 = vmatmul.mubr.f32.gmra.mxu0 %v4267
      %v4459 = vpop.f32.mrf.mxu0
      %v4460 = vadd.f32 %v4191, %v4459
      %v4461 = vpop.f32.mrf.mxu0
      %4462 = vdwg.mxu0
      %vm4463 = vcmp.gt.f32.partialorder %v4340, 0.0
      %vm4464 = vcmp.gt.f32.partialorder %v4345, 0.0
      %vm4465 = vcmp.gt.f32.partialorder %v4350, 0.0
      %vm4466 = vcmp.gt.f32.partialorder %v4355, 0.0
      %vm4467 = vcmp.gt.f32.partialorder %v4360, 0.0
      %vm4468 = vcmp.gt.f32.partialorder %v4365, 0.0
      %vm4469 = vcmp.gt.f32.partialorder %v4370, 0.0
      %vm4470 = vcmp.gt.f32.partialorder %v4375, 0.0
      %vm4471 = vcmp.gt.f32.partialorder %v4380, 0.0
      %vm4472 = vcmp.gt.f32.partialorder %v4385, 0.0
      %vm4473 = vcmp.gt.f32.partialorder %v4390, 0.0
      %vm4474 = vcmp.gt.f32.partialorder %v4395, 0.0
      %vm4475 = vcmp.gt.f32.partialorder %v4400, 0.0
      %vm4476 = vcmp.gt.f32.partialorder %v4405, 0.0
      %vm4477 = vcmp.gt.f32.partialorder %v4410, 0.0
      %vm4478 = vcmp.gt.f32.partialorder %v4415, 0.0
      %vm4479 = vcmp.gt.f32.partialorder %v4420, 0.0
      %vm4480 = vcmp.gt.f32.partialorder %v4425, 0.0
      %vm4481 = vcmp.gt.f32.partialorder %v4430, 0.0
      %vm4482 = vcmp.gt.f32.partialorder %v4435, 0.0
      %vm4483 = vcmp.gt.f32.partialorder %v4440, 0.0
      %vm4484 = vcmp.gt.f32.partialorder %v4445, 0.0
      %vm4485 = vcmp.gt.f32.partialorder %v4450, 0.0
      %vm4486 = vcmp.gt.f32.partialorder %v4455, 0.0
      %vm4487 = vcmp.gt.f32.partialorder %v4460, 0.0
      %v4488 = vmul.f32 %v4340, 0.01
      %v4489 = vmul.f32 %v4345, 0.01
      %v4490 = vmul.f32 %v4350, 0.01
      %v4491 = vmul.f32 %v4355, 0.01
      %v4492 = vmul.f32 %v4360, 0.01
      %v4493 = vmul.f32 %v4365, 0.01
      %v4494 = vmul.f32 %v4370, 0.01
      %v4495 = vmul.f32 %v4375, 0.01
      %v4496 = vmul.f32 %v4380, 0.01
      %v4497 = vmul.f32 %v4385, 0.01
      %v4498 = vmul.f32 %v4390, 0.01
      %v4499 = vmul.f32 %v4395, 0.01
      %v4500 = vmul.f32 %v4400, 0.01
      %v4501 = vmul.f32 %v4405, 0.01
      %v4502 = vmul.f32 %v4410, 0.01
      %v4503 = vmul.f32 %v4415, 0.01
      %v4504 = vmul.f32 %v4420, 0.01
      %v4505 = vmul.f32 %v4425, 0.01
      %v4506 = vmul.f32 %v4430, 0.01
      %v4507 = vmul.f32 %v4435, 0.01
      %v4508 = vmul.f32 %v4440, 0.01
      %v4509 = vmul.f32 %v4445, 0.01
      %v4510 = vmul.f32 %v4450, 0.01
      %v4511 = vmul.f32 %v4455, 0.01
      %v4512 = vmul.f32 %v4460, 0.01
      %v4513 = vsel %vm4463, %v4340, %v4488
      %v4514 = vsel %vm4464, %v4345, %v4489
      %v4515 = vsel %vm4465, %v4350, %v4490
      %v4516 = vsel %vm4466, %v4355, %v4491
      %v4517 = vsel %vm4467, %v4360, %v4492
      %v4518 = vsel %vm4468, %v4365, %v4493
      %v4519 = vsel %vm4469, %v4370, %v4494
      %v4520 = vsel %vm4470, %v4375, %v4495
      %v4521 = vsel %vm4471, %v4380, %v4496
      %v4522 = vsel %vm4472, %v4385, %v4497
      %v4523 = vsel %vm4473, %v4390, %v4498
      %v4524 = vsel %vm4474, %v4395, %v4499
      %v4525 = vsel %vm4475, %v4400, %v4500
      %v4526 = vsel %vm4476, %v4405, %v4501
      %v4527 = vsel %vm4477, %v4410, %v4502
      %v4528 = vsel %vm4478, %v4415, %v4503
      %v4529 = vsel %vm4479, %v4420, %v4504
      %v4530 = vsel %vm4480, %v4425, %v4505
      %v4531 = vsel %vm4481, %v4430, %v4506
      %v4532 = vsel %vm4482, %v4435, %v4507
      %v4533 = vsel %vm4483, %v4440, %v4508
      %v4534 = vsel %vm4484, %v4445, %v4509
      %v4535 = vsel %vm4485, %v4450, %v4510
      %v4536 = vsel %vm4486, %v4455, %v4511
      %v4537 = vsel %vm4487, %v4460, %v4512
      %v4563 = vcombine.high %v4513, %v4513
      %v4565 = vunpack.c.l.s4 1983009808
      %v4566 = vunpack.c.0.s8 %v4565
      %v4567 = vlaneseq
      %v4568 = vshrl.u32 %v4567, 7
      %v4569 = vsub.s32 %v4566, %v4568
      %v4570 = vrot.slane %v4513, %v4569
      %v4572 = vunpack.c.l.s4 1983009808
      %v4573 = vunpack.c.0.s8 %v4572
      %v4574 = vlaneseq
      %v4575 = vshrl.u32 %v4574, 7
      %v4576 = vsub.s32 %v4573, %v4575
      %v4577 = vrot.slane %v4563, %v4576
      %v4578 = vcombine.high %v4570, %v4570
      %v4579 = vcombine.high %v4577, %v4577
      %v4580 = vcombine.high %v4514, %v4514
      %v4582 = vunpack.c.l.s4 1983009808
      %v4583 = vunpack.c.0.s8 %v4582
      %v4584 = vlaneseq
      %v4585 = vshrl.u32 %v4584, 7
      %v4586 = vsub.s32 %v4583, %v4585
      %v4587 = vrot.slane %v4514, %v4586
      %v4589 = vunpack.c.l.s4 1983009808
      %v4590 = vunpack.c.0.s8 %v4589
      %v4591 = vlaneseq
      %v4592 = vshrl.u32 %v4591, 7
      %v4593 = vsub.s32 %v4590, %v4592
      %v4594 = vrot.slane %v4580, %v4593
      %v4595 = vcombine.high %v4587, %v4587
      %v4596 = vcombine.high %v4594, %v4594
      %v4597 = vcombine.high %v4515, %v4515
      %v4599 = vunpack.c.l.s4 1983009808
      %v4600 = vunpack.c.0.s8 %v4599
      %v4601 = vlaneseq
      %v4602 = vshrl.u32 %v4601, 7
      %v4603 = vsub.s32 %v4600, %v4602
      %v4604 = vrot.slane %v4515, %v4603
      %v4606 = vunpack.c.l.s4 1983009808
      %v4607 = vunpack.c.0.s8 %v4606
      %v4608 = vlaneseq
      %v4609 = vshrl.u32 %v4608, 7
      %v4610 = vsub.s32 %v4607, %v4609
      %v4611 = vrot.slane %v4597, %v4610
      %v4612 = vcombine.high %v4604, %v4604
      %v4613 = vcombine.high %v4611, %v4611
      %v4614 = vcombine.high %v4516, %v4516
      %v4616 = vunpack.c.l.s4 1983009808
      %v4617 = vunpack.c.0.s8 %v4616
      %v4618 = vlaneseq
      %v4619 = vshrl.u32 %v4618, 7
      %v4620 = vsub.s32 %v4617, %v4619
      %v4621 = vrot.slane %v4516, %v4620
      %v4623 = vunpack.c.l.s4 1983009808
      %v4624 = vunpack.c.0.s8 %v4623
      %v4625 = vlaneseq
      %v4626 = vshrl.u32 %v4625, 7
      %v4627 = vsub.s32 %v4624, %v4626
      %v4628 = vrot.slane %v4614, %v4627
      %v4629 = vcombine.high %v4621, %v4621
      %v4630 = vcombine.high %v4628, %v4628
      %v4631 = vcombine.high %v4517, %v4517
      %v4633 = vunpack.c.l.s4 1983009808
      %v4634 = vunpack.c.0.s8 %v4633
      %v4635 = vlaneseq
      %v4636 = vshrl.u32 %v4635, 7
      %v4637 = vsub.s32 %v4634, %v4636
      %v4638 = vrot.slane %v4517, %v4637
      %v4640 = vunpack.c.l.s4 1983009808
      %v4641 = vunpack.c.0.s8 %v4640
      %v4642 = vlaneseq
      %v4643 = vshrl.u32 %v4642, 7
      %v4644 = vsub.s32 %v4641, %v4643
      %v4645 = vrot.slane %v4631, %v4644
      %v4646 = vcombine.high %v4638, %v4638
      %v4647 = vcombine.high %v4645, %v4645
      %v4648 = vcombine.high %v4518, %v4518
      %v4650 = vunpack.c.l.s4 1983009808
      %v4651 = vunpack.c.0.s8 %v4650
      %v4652 = vlaneseq
      %v4653 = vshrl.u32 %v4652, 7
      %v4654 = vsub.s32 %v4651, %v4653
      %v4655 = vrot.slane %v4518, %v4654
      %v4657 = vunpack.c.l.s4 1983009808
      %v4658 = vunpack.c.0.s8 %v4657
      %v4659 = vlaneseq
      %v4660 = vshrl.u32 %v4659, 7
      %v4661 = vsub.s32 %v4658, %v4660
      %v4662 = vrot.slane %v4648, %v4661
      %v4663 = vcombine.high %v4655, %v4655
      %v4664 = vcombine.high %v4662, %v4662
      %v4665 = vcombine.high %v4519, %v4519
      %v4667 = vunpack.c.l.s4 1983009808
      %v4668 = vunpack.c.0.s8 %v4667
      %v4669 = vlaneseq
      %v4670 = vshrl.u32 %v4669, 7
      %v4671 = vsub.s32 %v4668, %v4670
      %v4672 = vrot.slane %v4519, %v4671
      %v4674 = vunpack.c.l.s4 1983009808
      %v4675 = vunpack.c.0.s8 %v4674
      %v4676 = vlaneseq
      %v4677 = vshrl.u32 %v4676, 7
      %v4678 = vsub.s32 %v4675, %v4677
      %v4679 = vrot.slane %v4665, %v4678
      %v4680 = vcombine.high %v4672, %v4672
      %v4681 = vcombine.high %v4679, %v4679
      %v4682 = vcombine.high %v4520, %v4520
      %v4684 = vunpack.c.l.s4 1983009808
      %v4685 = vunpack.c.0.s8 %v4684
      %v4686 = vlaneseq
      %v4687 = vshrl.u32 %v4686, 7
      %v4688 = vsub.s32 %v4685, %v4687
      %v4689 = vrot.slane %v4520, %v4688
      %v4691 = vunpack.c.l.s4 1983009808
      %v4692 = vunpack.c.0.s8 %v4691
      %v4693 = vlaneseq
      %v4694 = vshrl.u32 %v4693, 7
      %v4695 = vsub.s32 %v4692, %v4694
      %v4696 = vrot.slane %v4682, %v4695
      %v4697 = vcombine.high %v4689, %v4689
      %v4698 = vcombine.high %v4696, %v4696
      %v4699 = vcombine.high %v4521, %v4521
      %v4701 = vunpack.c.l.s4 1983009808
      %v4702 = vunpack.c.0.s8 %v4701
      %v4703 = vlaneseq
      %v4704 = vshrl.u32 %v4703, 7
      %v4705 = vsub.s32 %v4702, %v4704
      %v4706 = vrot.slane %v4521, %v4705
      %v4708 = vunpack.c.l.s4 1983009808
      %v4709 = vunpack.c.0.s8 %v4708
      %v4710 = vlaneseq
      %v4711 = vshrl.u32 %v4710, 7
      %v4712 = vsub.s32 %v4709, %v4711
      %v4713 = vrot.slane %v4699, %v4712
      %v4714 = vcombine.high %v4706, %v4706
      %v4715 = vcombine.high %v4713, %v4713
      %v4716 = vcombine.high %v4522, %v4522
      %v4718 = vunpack.c.l.s4 1983009808
      %v4719 = vunpack.c.0.s8 %v4718
      %v4720 = vlaneseq
      %v4721 = vshrl.u32 %v4720, 7
      %v4722 = vsub.s32 %v4719, %v4721
      %v4723 = vrot.slane %v4522, %v4722
      %v4725 = vunpack.c.l.s4 1983009808
      %v4726 = vunpack.c.0.s8 %v4725
      %v4727 = vlaneseq
      %v4728 = vshrl.u32 %v4727, 7
      %v4729 = vsub.s32 %v4726, %v4728
      %v4730 = vrot.slane %v4716, %v4729
      %v4731 = vcombine.high %v4723, %v4723
      %v4732 = vcombine.high %v4730, %v4730
      %v4733 = vcombine.high %v4523, %v4523
      %v4735 = vunpack.c.l.s4 1983009808
      %v4736 = vunpack.c.0.s8 %v4735
      %v4737 = vlaneseq
      %v4738 = vshrl.u32 %v4737, 7
      %v4739 = vsub.s32 %v4736, %v4738
      %v4740 = vrot.slane %v4523, %v4739
      %v4742 = vunpack.c.l.s4 1983009808
      %v4743 = vunpack.c.0.s8 %v4742
      %v4744 = vlaneseq
      %v4745 = vshrl.u32 %v4744, 7
      %v4746 = vsub.s32 %v4743, %v4745
      %v4747 = vrot.slane %v4733, %v4746
      %v4748 = vcombine.high %v4740, %v4740
      %v4749 = vcombine.high %v4747, %v4747
      %v4750 = vcombine.high %v4524, %v4524
      %v4752 = vunpack.c.l.s4 1983009808
      %v4753 = vunpack.c.0.s8 %v4752
      %v4754 = vlaneseq
      %v4755 = vshrl.u32 %v4754, 7
      %v4756 = vsub.s32 %v4753, %v4755
      %v4757 = vrot.slane %v4524, %v4756
      %v4759 = vunpack.c.l.s4 1983009808
      %v4760 = vunpack.c.0.s8 %v4759
      %v4761 = vlaneseq
      %v4762 = vshrl.u32 %v4761, 7
      %v4763 = vsub.s32 %v4760, %v4762
      %v4764 = vrot.slane %v4750, %v4763
      %v4765 = vcombine.high %v4757, %v4757
      %v4766 = vcombine.high %v4764, %v4764
      %v4767 = vcombine.high %v4525, %v4525
      %v4769 = vunpack.c.l.s4 1983009808
      %v4770 = vunpack.c.0.s8 %v4769
      %v4771 = vlaneseq
      %v4772 = vshrl.u32 %v4771, 7
      %v4773 = vsub.s32 %v4770, %v4772
      %v4774 = vrot.slane %v4525, %v4773
      %v4776 = vunpack.c.l.s4 1983009808
      %v4777 = vunpack.c.0.s8 %v4776
      %v4778 = vlaneseq
      %v4779 = vshrl.u32 %v4778, 7
      %v4780 = vsub.s32 %v4777, %v4779
      %v4781 = vrot.slane %v4767, %v4780
      %v4782 = vcombine.high %v4774, %v4774
      %v4783 = vcombine.high %v4781, %v4781
      %v4784 = vcombine.high %v4526, %v4526
      %v4786 = vunpack.c.l.s4 1983009808
      %v4787 = vunpack.c.0.s8 %v4786
      %v4788 = vlaneseq
      %v4789 = vshrl.u32 %v4788, 7
      %v4790 = vsub.s32 %v4787, %v4789
      %v4791 = vrot.slane %v4526, %v4790
      %v4793 = vunpack.c.l.s4 1983009808
      %v4794 = vunpack.c.0.s8 %v4793
      %v4795 = vlaneseq
      %v4796 = vshrl.u32 %v4795, 7
      %v4797 = vsub.s32 %v4794, %v4796
      %v4798 = vrot.slane %v4784, %v4797
      %v4799 = vcombine.high %v4791, %v4791
      %v4800 = vcombine.high %v4798, %v4798
      %v4801 = vcombine.high %v4527, %v4527
      %v4803 = vunpack.c.l.s4 1983009808
      %v4804 = vunpack.c.0.s8 %v4803
      %v4805 = vlaneseq
      %v4806 = vshrl.u32 %v4805, 7
      %v4807 = vsub.s32 %v4804, %v4806
      %v4808 = vrot.slane %v4527, %v4807
      %v4810 = vunpack.c.l.s4 1983009808
      %v4811 = vunpack.c.0.s8 %v4810
      %v4812 = vlaneseq
      %v4813 = vshrl.u32 %v4812, 7
      %v4814 = vsub.s32 %v4811, %v4813
      %v4815 = vrot.slane %v4801, %v4814
      %v4816 = vcombine.high %v4808, %v4808
      %v4817 = vcombine.high %v4815, %v4815
      %v4818 = vcombine.high %v4528, %v4528
      %v4820 = vunpack.c.l.s4 1983009808
      %v4821 = vunpack.c.0.s8 %v4820
      %v4822 = vlaneseq
      %v4823 = vshrl.u32 %v4822, 7
      %v4824 = vsub.s32 %v4821, %v4823
      %v4825 = vrot.slane %v4528, %v4824
      %v4827 = vunpack.c.l.s4 1983009808
      %v4828 = vunpack.c.0.s8 %v4827
      %v4829 = vlaneseq
      %v4830 = vshrl.u32 %v4829, 7
      %v4831 = vsub.s32 %v4828, %v4830
      %v4832 = vrot.slane %v4818, %v4831
      %v4833 = vcombine.high %v4825, %v4825
      %v4834 = vcombine.high %v4832, %v4832
      %v4835 = vcombine.high %v4529, %v4529
      %v4837 = vunpack.c.l.s4 1983009808
      %v4838 = vunpack.c.0.s8 %v4837
      %v4839 = vlaneseq
      %v4840 = vshrl.u32 %v4839, 7
      %v4841 = vsub.s32 %v4838, %v4840
      %v4842 = vrot.slane %v4529, %v4841
      %v4844 = vunpack.c.l.s4 1983009808
      %v4845 = vunpack.c.0.s8 %v4844
      %v4846 = vlaneseq
      %v4847 = vshrl.u32 %v4846, 7
      %v4848 = vsub.s32 %v4845, %v4847
      %v4849 = vrot.slane %v4835, %v4848
      %v4850 = vcombine.high %v4842, %v4842
      %v4851 = vcombine.high %v4849, %v4849
      %v4852 = vcombine.high %v4530, %v4530
      %v4854 = vunpack.c.l.s4 1983009808
      %v4855 = vunpack.c.0.s8 %v4854
      %v4856 = vlaneseq
      %v4857 = vshrl.u32 %v4856, 7
      %v4858 = vsub.s32 %v4855, %v4857
      %v4859 = vrot.slane %v4530, %v4858
      %v4861 = vunpack.c.l.s4 1983009808
      %v4862 = vunpack.c.0.s8 %v4861
      %v4863 = vlaneseq
      %v4864 = vshrl.u32 %v4863, 7
      %v4865 = vsub.s32 %v4862, %v4864
      %v4866 = vrot.slane %v4852, %v4865
      %v4867 = vcombine.high %v4859, %v4859
      %v4868 = vcombine.high %v4866, %v4866
      %v4869 = vcombine.high %v4531, %v4531
      %v4871 = vunpack.c.l.s4 1983009808
      %v4872 = vunpack.c.0.s8 %v4871
      %v4873 = vlaneseq
      %v4874 = vshrl.u32 %v4873, 7
      %v4875 = vsub.s32 %v4872, %v4874
      %v4876 = vrot.slane %v4531, %v4875
      %v4878 = vunpack.c.l.s4 1983009808
      %v4879 = vunpack.c.0.s8 %v4878
      %v4880 = vlaneseq
      %v4881 = vshrl.u32 %v4880, 7
      %v4882 = vsub.s32 %v4879, %v4881
      %v4883 = vrot.slane %v4869, %v4882
      %v4884 = vcombine.high %v4876, %v4876
      %v4885 = vcombine.high %v4883, %v4883
      %v4886 = vcombine.high %v4532, %v4532
      %v4888 = vunpack.c.l.s4 1983009808
      %v4889 = vunpack.c.0.s8 %v4888
      %v4890 = vlaneseq
      %v4891 = vshrl.u32 %v4890, 7
      %v4892 = vsub.s32 %v4889, %v4891
      %v4893 = vrot.slane %v4532, %v4892
      %v4895 = vunpack.c.l.s4 1983009808
      %v4896 = vunpack.c.0.s8 %v4895
      %v4897 = vlaneseq
      %v4898 = vshrl.u32 %v4897, 7
      %v4899 = vsub.s32 %v4896, %v4898
      %v4900 = vrot.slane %v4886, %v4899
      %v4901 = vcombine.high %v4893, %v4893
      %v4902 = vcombine.high %v4900, %v4900
      %v4903 = vcombine.high %v4533, %v4533
      %v4905 = vunpack.c.l.s4 1983009808
      %v4906 = vunpack.c.0.s8 %v4905
      %v4907 = vlaneseq
      %v4908 = vshrl.u32 %v4907, 7
      %v4909 = vsub.s32 %v4906, %v4908
      %v4910 = vrot.slane %v4533, %v4909
      %v4912 = vunpack.c.l.s4 1983009808
      %v4913 = vunpack.c.0.s8 %v4912
      %v4914 = vlaneseq
      %v4915 = vshrl.u32 %v4914, 7
      %v4916 = vsub.s32 %v4913, %v4915
      %v4917 = vrot.slane %v4903, %v4916
      %v4918 = vcombine.high %v4910, %v4910
      %v4919 = vcombine.high %v4917, %v4917
      %v4920 = vcombine.high %v4534, %v4534
      %v4922 = vunpack.c.l.s4 1983009808
      %v4923 = vunpack.c.0.s8 %v4922
      %v4924 = vlaneseq
      %v4925 = vshrl.u32 %v4924, 7
      %v4926 = vsub.s32 %v4923, %v4925
      %v4927 = vrot.slane %v4534, %v4926
      %v4929 = vunpack.c.l.s4 1983009808
      %v4930 = vunpack.c.0.s8 %v4929
      %v4931 = vlaneseq
      %v4932 = vshrl.u32 %v4931, 7
      %v4933 = vsub.s32 %v4930, %v4932
      %v4934 = vrot.slane %v4920, %v4933
      %v4935 = vcombine.high %v4927, %v4927
      %v4936 = vcombine.high %v4934, %v4934
      %v4937 = vcombine.high %v4535, %v4535
      %v4939 = vunpack.c.l.s4 1983009808
      %v4940 = vunpack.c.0.s8 %v4939
      %v4941 = vlaneseq
      %v4942 = vshrl.u32 %v4941, 7
      %v4943 = vsub.s32 %v4940, %v4942
      %v4944 = vrot.slane %v4535, %v4943
      %v4946 = vunpack.c.l.s4 1983009808
      %v4947 = vunpack.c.0.s8 %v4946
      %v4948 = vlaneseq
      %v4949 = vshrl.u32 %v4948, 7
      %v4950 = vsub.s32 %v4947, %v4949
      %v4951 = vrot.slane %v4937, %v4950
      %v4952 = vcombine.high %v4944, %v4944
      %v4953 = vcombine.high %v4951, %v4951
      %v4954 = vcombine.high %v4536, %v4536
      %v4956 = vunpack.c.l.s4 1983009808
      %v4957 = vunpack.c.0.s8 %v4956
      %v4958 = vlaneseq
      %v4959 = vshrl.u32 %v4958, 7
      %v4960 = vsub.s32 %v4957, %v4959
      %v4961 = vrot.slane %v4536, %v4960
      %v4963 = vunpack.c.l.s4 1983009808
      %v4964 = vunpack.c.0.s8 %v4963
      %v4965 = vlaneseq
      %v4966 = vshrl.u32 %v4965, 7
      %v4967 = vsub.s32 %v4964, %v4966
      %v4968 = vrot.slane %v4954, %v4967
      %v4969 = vcombine.high %v4961, %v4961
      %v4970 = vcombine.high %v4968, %v4968
      %v4972 = vunpack.c.l.s4 1983009808
      %v4973 = vunpack.c.0.s8 %v4972
      %v4974 = vlaneseq
      %v4975 = vshrl.u32 %v4974, 7
      %v4976 = vsub.s32 %v4973, %v4975
      %v4977 = vrot.slane %v4537, %v4976
      %v4978 = vcombine.high %v4977, %v4977
      %v4979 = vld [vmem:[%s3] sm:$0xff]
      %v4980 = vld [vmem:[%s3 + $0x8] sm:$0xff]
      %v4981 = vld [vmem:[%s3 + $0x10] sm:$0xff]
      %v4982 = vld [vmem:[%s3 + $0x18] sm:$0xff]
      %v4983 = vld [vmem:[%s3 + $0x20] sm:$0xf]
      %v4984 = vrot.slane %v4570, 7
      %v4985 = vrot.slane %v4984, 2
      %v4986 = vrot.slane %v4578, 7
      %v4987 = vsel %vm772, %v4985, %v4986
      %v4988 = vrot.slane %v4986, 2
      %v4989 = vrot.slane %v4577, 7
      %v4990 = vsel %vm772, %v4988, %v4989
      %v4991 = vrot.slane %v4989, 2
      %v4992 = vrot.slane %v4579, 7
      %v4993 = vsel %vm772, %v4991, %v4992
      %v4994 = vrot.slane %v4992, 2
      %v4995 = vrot.slane %v4587, 7
      %v4996 = vsel %vm772, %v4994, %v4995
      %v4997 = vrot.slane %v4995, 2
      %v4998 = vrot.slane %v4595, 7
      %v4999 = vsel %vm772, %v4997, %v4998
      %v5000 = vrot.slane %v4998, 2
      %v5001 = vrot.slane %v4594, 7
      %v5002 = vsel %vm772, %v5000, %v5001
      %v5003 = vrot.slane %v4596, 7
      %v5004 = vrot.slane %v5003, 2
      %v5005 = vrot.slane %v4604, 7
      %v5006 = vsel %vm772, %v5004, %v5005
      %v5007 = vrot.slane %v5005, 2
      %v5008 = vrot.slane %v4612, 7
      %v5009 = vsel %vm772, %v5007, %v5008
      %v5010 = vrot.slane %v5008, 2
      %v5011 = vrot.slane %v4611, 7
      %v5012 = vsel %vm772, %v5010, %v5011
      %v5013 = vrot.slane %v5011, 2
      %v5014 = vrot.slane %v4613, 7
      %v5015 = vsel %vm772, %v5013, %v5014
      %v5016 = vrot.slane %v5014, 2
      %v5017 = vrot.slane %v4621, 7
      %v5018 = vsel %vm772, %v5016, %v5017
      %v5019 = vrot.slane %v5017, 2
      %v5020 = vrot.slane %v4629, 7
      %v5021 = vsel %vm772, %v5019, %v5020
      %v5022 = vrot.slane %v4628, 7
      %v5023 = vrot.slane %v5022, 2
      %v5024 = vrot.slane %v4630, 7
      %v5025 = vsel %vm772, %v5023, %v5024
      %v5026 = vrot.slane %v5024, 2
      %v5027 = vrot.slane %v4638, 7
      %v5028 = vsel %vm772, %v5026, %v5027
      %v5029 = vrot.slane %v5027, 2
      %v5030 = vrot.slane %v4646, 7
      %v5031 = vsel %vm772, %v5029, %v5030
      %v5032 = vrot.slane %v5030, 2
      %v5033 = vrot.slane %v4645, 7
      %v5034 = vsel %vm772, %v5032, %v5033
      %v5035 = vrot.slane %v5033, 2
      %v5036 = vrot.slane %v4647, 7
      %v5037 = vsel %vm772, %v5035, %v5036
      %v5038 = vrot.slane %v5036, 2
      %v5039 = vrot.slane %v4655, 7
      %v5040 = vsel %vm772, %v5038, %v5039
      %v5041 = vrot.slane %v4663, 7
      %v5042 = vrot.slane %v5041, 2
      %v5043 = vrot.slane %v4662, 7
      %v5044 = vsel %vm772, %v5042, %v5043
      %v5045 = vrot.slane %v5043, 2
      %v5046 = vrot.slane %v4664, 7
      %v5047 = vsel %vm772, %v5045, %v5046
      %v5048 = vrot.slane %v5046, 2
      %v5049 = vrot.slane %v4672, 7
      %v5050 = vsel %vm772, %v5048, %v5049
      %v5051 = vrot.slane %v5049, 2
      %v5052 = vrot.slane %v4680, 7
      %v5053 = vsel %vm772, %v5051, %v5052
      %v5054 = vrot.slane %v5052, 2
      %v5055 = vrot.slane %v4679, 7
      %v5056 = vsel %vm772, %v5054, %v5055
      %v5057 = vrot.slane %v5055, 2
      %v5058 = vrot.slane %v4681, 7
      %v5059 = vsel %vm772, %v5057, %v5058
      %v5060 = vrot.slane %v4689, 7
      %v5061 = vrot.slane %v5060, 2
      %v5062 = vrot.slane %v4697, 7
      %v5063 = vsel %vm772, %v5061, %v5062
      %v5064 = vrot.slane %v5062, 2
      %v5065 = vrot.slane %v4696, 7
      %v5066 = vsel %vm772, %v5064, %v5065
      %v5067 = vrot.slane %v5065, 2
      %v5068 = vrot.slane %v4698, 7
      %v5069 = vsel %vm772, %v5067, %v5068
      %v5070 = vrot.slane %v5068, 2
      %v5071 = vrot.slane %v4706, 7
      %v5072 = vsel %vm772, %v5070, %v5071
      %v5073 = vrot.slane %v5071, 2
      %v5074 = vrot.slane %v4714, 7
      %v5075 = vsel %vm772, %v5073, %v5074
      %v5076 = vrot.slane %v5074, 2
      %v5077 = vrot.slane %v4713, 7
      %v5078 = vsel %vm772, %v5076, %v5077
      %v5079 = vrot.slane %v4715, 7
      %v5080 = vrot.slane %v5079, 2
      %v5081 = vrot.slane %v4723, 7
      %v5082 = vsel %vm772, %v5080, %v5081
      %v5083 = vrot.slane %v5081, 2
      %v5084 = vrot.slane %v4731, 7
      %v5085 = vsel %vm772, %v5083, %v5084
      %v5086 = vrot.slane %v5084, 2
      %v5087 = vrot.slane %v4730, 7
      %v5088 = vsel %vm772, %v5086, %v5087
      %v5089 = vrot.slane %v5087, 2
      %v5090 = vrot.slane %v4732, 7
      %v5091 = vsel %vm772, %v5089, %v5090
      %v5092 = vrot.slane %v5090, 2
      %v5093 = vrot.slane %v4740, 7
      %v5094 = vsel %vm772, %v5092, %v5093
      %v5095 = vrot.slane %v5093, 2
      %v5096 = vrot.slane %v4748, 7
      %v5097 = vsel %vm772, %v5095, %v5096
      %v5098 = vrot.slane %v4747, 7
      %v5099 = vrot.slane %v5098, 2
      %v5100 = vrot.slane %v4749, 7
      %v5101 = vsel %vm772, %v5099, %v5100
      %v5102 = vrot.slane %v5100, 2
      %v5103 = vrot.slane %v4757, 7
      %v5104 = vsel %vm772, %v5102, %v5103
      %v5105 = vrot.slane %v5103, 2
      %v5106 = vrot.slane %v4765, 7
      %v5107 = vsel %vm772, %v5105, %v5106
      %v5108 = vrot.slane %v5106, 2
      %v5109 = vrot.slane %v4764, 7
      %v5110 = vsel %vm772, %v5108, %v5109
      %v5111 = vrot.slane %v5109, 2
      %v5112 = vrot.slane %v4766, 7
      %v5113 = vsel %vm772, %v5111, %v5112
      %v5114 = vrot.slane %v5112, 2
      %v5115 = vrot.slane %v4774, 7
      %v5116 = vsel %vm772, %v5114, %v5115
      %v5117 = vrot.slane %v4782, 7
      %v5118 = vrot.slane %v5117, 2
      %v5119 = vrot.slane %v4781, 7
      %v5120 = vsel %vm772, %v5118, %v5119
      %v5121 = vrot.slane %v5119, 2
      %v5122 = vrot.slane %v4783, 7
      %v5123 = vsel %vm772, %v5121, %v5122
      %v5124 = vrot.slane %v5122, 2
      %v5125 = vrot.slane %v4791, 7
      %v5126 = vsel %vm772, %v5124, %v5125
      %v5127 = vrot.slane %v5125, 2
      %v5128 = vrot.slane %v4799, 7
      %v5129 = vsel %vm772, %v5127, %v5128
      %v5130 = vrot.slane %v5128, 2
      %v5131 = vrot.slane %v4798, 7
      %v5132 = vsel %vm772, %v5130, %v5131
      %v5133 = vrot.slane %v5131, 2
      %v5134 = vrot.slane %v4800, 7
      %v5135 = vsel %vm772, %v5133, %v5134
      %v5136 = vrot.slane %v4808, 7
      %v5137 = vrot.slane %v5136, 2
      %v5138 = vrot.slane %v4816, 7
      %v5139 = vsel %vm772, %v5137, %v5138
      %v5140 = vrot.slane %v5138, 2
      %v5141 = vrot.slane %v4815, 7
      %v5142 = vsel %vm772, %v5140, %v5141
      %v5143 = vrot.slane %v5141, 2
      %v5144 = vrot.slane %v4817, 7
      %v5145 = vsel %vm772, %v5143, %v5144
      %v5146 = vrot.slane %v5144, 2
      %v5147 = vrot.slane %v4825, 7
      %v5148 = vsel %vm772, %v5146, %v5147
      %v5149 = vrot.slane %v5147, 2
      %v5150 = vrot.slane %v4833, 7
      %v5151 = vsel %vm772, %v5149, %v5150
      %v5152 = vrot.slane %v5150, 2
      %v5153 = vrot.slane %v4832, 7
      %v5154 = vsel %vm772, %v5152, %v5153
      %v5155 = vrot.slane %v4834, 7
      %v5156 = vrot.slane %v5155, 2
      %v5157 = vrot.slane %v4842, 7
      %v5158 = vsel %vm772, %v5156, %v5157
      %v5159 = vrot.slane %v5157, 2
      %v5160 = vrot.slane %v4850, 7
      %v5161 = vsel %vm772, %v5159, %v5160
      %v5162 = vrot.slane %v5160, 2
      %v5163 = vrot.slane %v4849, 7
      %v5164 = vsel %vm772, %v5162, %v5163
      %v5165 = vrot.slane %v5163, 2
      %v5166 = vrot.slane %v4851, 7
      %v5167 = vsel %vm772, %v5165, %v5166
      %v5168 = vrot.slane %v5166, 2
      %v5169 = vrot.slane %v4859, 7
      %v5170 = vsel %vm772, %v5168, %v5169
      %v5171 = vrot.slane %v5169, 2
      %v5172 = vrot.slane %v4867, 7
      %v5173 = vsel %vm772, %v5171, %v5172
      %v5174 = vrot.slane %v4866, 7
      %v5175 = vrot.slane %v5174, 2
      %v5176 = vrot.slane %v4868, 7
      %v5177 = vsel %vm772, %v5175, %v5176
      %v5178 = vrot.slane %v5176, 2
      %v5179 = vrot.slane %v4876, 7
      %v5180 = vsel %vm772, %v5178, %v5179
      %v5181 = vrot.slane %v5179, 2
      %v5182 = vrot.slane %v4884, 7
      %v5183 = vsel %vm772, %v5181, %v5182
      %v5184 = vrot.slane %v5182, 2
      %v5185 = vrot.slane %v4883, 7
      %v5186 = vsel %vm772, %v5184, %v5185
      %v5187 = vrot.slane %v5185, 2
      %v5188 = vrot.slane %v4885, 7
      %v5189 = vsel %vm772, %v5187, %v5188
      %v5190 = vrot.slane %v5188, 2
      %v5191 = vrot.slane %v4893, 7
      %v5192 = vsel %vm772, %v5190, %v5191
      %v5193 = vrot.slane %v4901, 7
      %v5194 = vrot.slane %v5193, 2
      %v5195 = vrot.slane %v4900, 7
      %v5196 = vsel %vm772, %v5194, %v5195
      %v5197 = vrot.slane %v5195, 2
      %v5198 = vrot.slane %v4902, 7
      %v5199 = vsel %vm772, %v5197, %v5198
      %v5200 = vrot.slane %v5198, 2
      %v5201 = vrot.slane %v4910, 7
      %v5202 = vsel %vm772, %v5200, %v5201
      %v5203 = vrot.slane %v5201, 2
      %v5204 = vrot.slane %v4918, 7
      %v5205 = vsel %vm772, %v5203, %v5204
      %v5206 = vrot.slane %v5204, 2
      %v5207 = vrot.slane %v4917, 7
      %v5208 = vsel %vm772, %v5206, %v5207
      %v5209 = vrot.slane %v5207, 2
      %v5210 = vrot.slane %v4919, 7
      %v5211 = vsel %vm772, %v5209, %v5210
      %v5212 = vrot.slane %v4927, 7
      %v5213 = vrot.slane %v5212, 2
      %v5214 = vrot.slane %v4935, 7
      %v5215 = vsel %vm772, %v5213, %v5214
      %v5216 = vrot.slane %v5214, 2
      %v5217 = vrot.slane %v4934, 7
      %v5218 = vsel %vm772, %v5216, %v5217
      %v5219 = vrot.slane %v5217, 2
      %v5220 = vrot.slane %v4936, 7
      %v5221 = vsel %vm772, %v5219, %v5220
      %v5222 = vrot.slane %v5220, 2
      %v5223 = vrot.slane %v4944, 7
      %v5224 = vsel %vm772, %v5222, %v5223
      %v5225 = vrot.slane %v5223, 2
      %v5226 = vrot.slane %v4952, 7
      %v5227 = vsel %vm772, %v5225, %v5226
      %v5228 = vrot.slane %v5226, 2
      %v5229 = vrot.slane %v4951, 7
      %v5230 = vsel %vm772, %v5228, %v5229
      %v5231 = vrot.slane %v4953, 7
      %v5232 = vrot.slane %v5231, 2
      %v5233 = vrot.slane %v4961, 7
      %v5234 = vsel %vm772, %v5232, %v5233
      %v5235 = vrot.slane %v5233, 2
      %v5236 = vrot.slane %v4969, 7
      %v5237 = vsel %vm772, %v5235, %v5236
      %v5238 = vrot.slane %v5236, 2
      %v5239 = vrot.slane %v4968, 7
      %v5240 = vsel %vm772, %v5238, %v5239
      %v5241 = vrot.slane %v5239, 2
      %v5242 = vrot.slane %v4970, 7
      %v5243 = vsel %vm772, %v5241, %v5242
      %v5244 = vrot.slane %v5242, 2
      %v5245 = vrot.slane %v4977, 7
      %v5246 = vsel %vm772, %v5244, %v5245
      %v5247 = vrot.slane %v5245, 2
      %v5248 = vrot.slane %v4978, 7
      %v5249 = vsel %vm772, %v5247, %v5248
      %v5250 = vcombine.low %v4570, %v4578
      %v5251 = vcombine.low %v4577, %v4579
      %v5253 = vunpack.c.l.s4 1983009808
      %v5254 = vunpack.c.0.s8 %v5253
      %v5255 = vlaneseq
      %v5256 = vshrl.u32 %v5255, 7
      %v5257 = vsub.s32 %v5254, %v5256
      %v5258 = vrot.slane %v5250, %v5257
      %v5260 = vunpack.c.l.s4 1983009808
      %v5261 = vunpack.c.0.s8 %v5260
      %v5262 = vlaneseq
      %v5263 = vshrl.u32 %v5262, 7
      %v5264 = vsub.s32 %v5261, %v5263
      %v5265 = vrot.slane %v5251, %v5264
      %v5266 = vcombine.low %v5258, %v5265
      %v5267 = vcombine.low %v4587, %v4595
      %v5268 = vcombine.low %v4596, %v4604
      %v5270 = vunpack.c.l.s4 1983009808
      %v5271 = vunpack.c.0.s8 %v5270
      %v5272 = vlaneseq
      %v5273 = vshrl.u32 %v5272, 7
      %v5274 = vsub.s32 %v5271, %v5273
      %v5275 = vrot.slane %v5267, %v5274
      %v5277 = vunpack.c.l.s4 1983009808
      %v5278 = vunpack.c.0.s8 %v5277
      %v5279 = vlaneseq
      %v5280 = vshrl.u32 %v5279, 7
      %v5281 = vsub.s32 %v5278, %v5280
      %v5282 = vrot.slane %v5268, %v5281
      %v5283 = vcombine.low %v5275, %v5282
      %v5284 = vcombine.low %v4612, %v4611
      %v5285 = vcombine.low %v4613, %v4621
      %v5287 = vunpack.c.l.s4 1983009808
      %v5288 = vunpack.c.0.s8 %v5287
      %v5289 = vlaneseq
      %v5290 = vshrl.u32 %v5289, 7
      %v5291 = vsub.s32 %v5288, %v5290
      %v5292 = vrot.slane %v5284, %v5291
      %v5294 = vunpack.c.l.s4 1983009808
      %v5295 = vunpack.c.0.s8 %v5294
      %v5296 = vlaneseq
      %v5297 = vshrl.u32 %v5296, 7
      %v5298 = vsub.s32 %v5295, %v5297
      %v5299 = vrot.slane %v5285, %v5298
      %v5300 = vcombine.low %v5292, %v5299
      %v5301 = vcombine.low %v4628, %v4630
      %v5302 = vcombine.low %v4638, %v4646
      %v5304 = vunpack.c.l.s4 1983009808
      %v5305 = vunpack.c.0.s8 %v5304
      %v5306 = vlaneseq
      %v5307 = vshrl.u32 %v5306, 7
      %v5308 = vsub.s32 %v5305, %v5307
      %v5309 = vrot.slane %v5301, %v5308
      %v5311 = vunpack.c.l.s4 1983009808
      %v5312 = vunpack.c.0.s8 %v5311
      %v5313 = vlaneseq
      %v5314 = vshrl.u32 %v5313, 7
      %v5315 = vsub.s32 %v5312, %v5314
      %v5316 = vrot.slane %v5302, %v5315
      %v5317 = vcombine.low %v5309, %v5316
      %v5318 = vcombine.low %v4645, %v4647
      %v5319 = vcombine.low %v4663, %v4662
      %v5321 = vunpack.c.l.s4 1983009808
      %v5322 = vunpack.c.0.s8 %v5321
      %v5323 = vlaneseq
      %v5324 = vshrl.u32 %v5323, 7
      %v5325 = vsub.s32 %v5322, %v5324
      %v5326 = vrot.slane %v5318, %v5325
      %v5328 = vunpack.c.l.s4 1983009808
      %v5329 = vunpack.c.0.s8 %v5328
      %v5330 = vlaneseq
      %v5331 = vshrl.u32 %v5330, 7
      %v5332 = vsub.s32 %v5329, %v5331
      %v5333 = vrot.slane %v5319, %v5332
      %v5334 = vcombine.low %v5326, %v5333
      %v5335 = vcombine.low %v4664, %v4672
      %v5336 = vcombine.low %v4680, %v4679
      %v5338 = vunpack.c.l.s4 1983009808
      %v5339 = vunpack.c.0.s8 %v5338
      %v5340 = vlaneseq
      %v5341 = vshrl.u32 %v5340, 7
      %v5342 = vsub.s32 %v5339, %v5341
      %v5343 = vrot.slane %v5335, %v5342
      %v5345 = vunpack.c.l.s4 1983009808
      %v5346 = vunpack.c.0.s8 %v5345
      %v5347 = vlaneseq
      %v5348 = vshrl.u32 %v5347, 7
      %v5349 = vsub.s32 %v5346, %v5348
      %v5350 = vrot.slane %v5336, %v5349
      %v5351 = vcombine.low %v5343, %v5350
      %v5352 = vcombine.low %v4689, %v4697
      %v5353 = vcombine.low %v4696, %v4698
      %v5355 = vunpack.c.l.s4 1983009808
      %v5356 = vunpack.c.0.s8 %v5355
      %v5357 = vlaneseq
      %v5358 = vshrl.u32 %v5357, 7
      %v5359 = vsub.s32 %v5356, %v5358
      %v5360 = vrot.slane %v5352, %v5359
      %v5362 = vunpack.c.l.s4 1983009808
      %v5363 = vunpack.c.0.s8 %v5362
      %v5364 = vlaneseq
      %v5365 = vshrl.u32 %v5364, 7
      %v5366 = vsub.s32 %v5363, %v5365
      %v5367 = vrot.slane %v5353, %v5366
      %v5368 = vcombine.low %v5360, %v5367
      %v5369 = vcombine.low %v4706, %v4714
      %v5370 = vcombine.low %v4715, %v4723
      %v5372 = vunpack.c.l.s4 1983009808
      %v5373 = vunpack.c.0.s8 %v5372
      %v5374 = vlaneseq
      %v5375 = vshrl.u32 %v5374, 7
      %v5376 = vsub.s32 %v5373, %v5375
      %v5377 = vrot.slane %v5369, %v5376
      %v5379 = vunpack.c.l.s4 1983009808
      %v5380 = vunpack.c.0.s8 %v5379
      %v5381 = vlaneseq
      %v5382 = vshrl.u32 %v5381, 7
      %v5383 = vsub.s32 %v5380, %v5382
      %v5384 = vrot.slane %v5370, %v5383
      %v5385 = vcombine.low %v5377, %v5384
      %v5386 = vcombine.low %v4731, %v4730
      %v5387 = vcombine.low %v4732, %v4740
      %v5389 = vunpack.c.l.s4 1983009808
      %v5390 = vunpack.c.0.s8 %v5389
      %v5391 = vlaneseq
      %v5392 = vshrl.u32 %v5391, 7
      %v5393 = vsub.s32 %v5390, %v5392
      %v5394 = vrot.slane %v5386, %v5393
      %v5396 = vunpack.c.l.s4 1983009808
      %v5397 = vunpack.c.0.s8 %v5396
      %v5398 = vlaneseq
      %v5399 = vshrl.u32 %v5398, 7
      %v5400 = vsub.s32 %v5397, %v5399
      %v5401 = vrot.slane %v5387, %v5400
      %v5402 = vcombine.low %v5394, %v5401
      %v5403 = vcombine.low %v4747, %v4749
      %v5404 = vcombine.low %v4757, %v4765
      %v5406 = vunpack.c.l.s4 1983009808
      %v5407 = vunpack.c.0.s8 %v5406
      %v5408 = vlaneseq
      %v5409 = vshrl.u32 %v5408, 7
      %v5410 = vsub.s32 %v5407, %v5409
      %v5411 = vrot.slane %v5403, %v5410
      %v5413 = vunpack.c.l.s4 1983009808
      %v5414 = vunpack.c.0.s8 %v5413
      %v5415 = vlaneseq
      %v5416 = vshrl.u32 %v5415, 7
      %v5417 = vsub.s32 %v5414, %v5416
      %v5418 = vrot.slane %v5404, %v5417
      %v5419 = vcombine.low %v5411, %v5418
      %v5420 = vcombine.low %v4764, %v4766
      %v5421 = vcombine.low %v4782, %v4781
      %v5423 = vunpack.c.l.s4 1983009808
      %v5424 = vunpack.c.0.s8 %v5423
      %v5425 = vlaneseq
      %v5426 = vshrl.u32 %v5425, 7
      %v5427 = vsub.s32 %v5424, %v5426
      %v5428 = vrot.slane %v5420, %v5427
      %v5430 = vunpack.c.l.s4 1983009808
      %v5431 = vunpack.c.0.s8 %v5430
      %v5432 = vlaneseq
      %v5433 = vshrl.u32 %v5432, 7
      %v5434 = vsub.s32 %v5431, %v5433
      %v5435 = vrot.slane %v5421, %v5434
      %v5436 = vcombine.low %v5428, %v5435
      %v5437 = vcombine.low %v4783, %v4791
      %v5438 = vcombine.low %v4799, %v4798
      %v5440 = vunpack.c.l.s4 1983009808
      %v5441 = vunpack.c.0.s8 %v5440
      %v5442 = vlaneseq
      %v5443 = vshrl.u32 %v5442, 7
      %v5444 = vsub.s32 %v5441, %v5443
      %v5445 = vrot.slane %v5437, %v5444
      %v5447 = vunpack.c.l.s4 1983009808
      %v5448 = vunpack.c.0.s8 %v5447
      %v5449 = vlaneseq
      %v5450 = vshrl.u32 %v5449, 7
      %v5451 = vsub.s32 %v5448, %v5450
      %v5452 = vrot.slane %v5438, %v5451
      %v5453 = vcombine.low %v5445, %v5452
      %v5454 = vcombine.low %v4808, %v4816
      %v5455 = vcombine.low %v4815, %v4817
      %v5457 = vunpack.c.l.s4 1983009808
      %v5458 = vunpack.c.0.s8 %v5457
      %v5459 = vlaneseq
      %v5460 = vshrl.u32 %v5459, 7
      %v5461 = vsub.s32 %v5458, %v5460
      %v5462 = vrot.slane %v5454, %v5461
      %v5464 = vunpack.c.l.s4 1983009808
      %v5465 = vunpack.c.0.s8 %v5464
      %v5466 = vlaneseq
      %v5467 = vshrl.u32 %v5466, 7
      %v5468 = vsub.s32 %v5465, %v5467
      %v5469 = vrot.slane %v5455, %v5468
      %v5470 = vcombine.low %v5462, %v5469
      %v5471 = vcombine.low %v4825, %v4833
      %v5472 = vcombine.low %v4834, %v4842
      %v5474 = vunpack.c.l.s4 1983009808
      %v5475 = vunpack.c.0.s8 %v5474
      %v5476 = vlaneseq
      %v5477 = vshrl.u32 %v5476, 7
      %v5478 = vsub.s32 %v5475, %v5477
      %v5479 = vrot.slane %v5471, %v5478
      %v5481 = vunpack.c.l.s4 1983009808
      %v5482 = vunpack.c.0.s8 %v5481
      %v5483 = vlaneseq
      %v5484 = vshrl.u32 %v5483, 7
      %v5485 = vsub.s32 %v5482, %v5484
      %v5486 = vrot.slane %v5472, %v5485
      %v5487 = vcombine.low %v5479, %v5486
      %v5488 = vcombine.low %v4850, %v4849
      %v5489 = vcombine.low %v4851, %v4859
      %v5491 = vunpack.c.l.s4 1983009808
      %v5492 = vunpack.c.0.s8 %v5491
      %v5493 = vlaneseq
      %v5494 = vshrl.u32 %v5493, 7
      %v5495 = vsub.s32 %v5492, %v5494
      %v5496 = vrot.slane %v5488, %v5495
      %v5498 = vunpack.c.l.s4 1983009808
      %v5499 = vunpack.c.0.s8 %v5498
      %v5500 = vlaneseq
      %v5501 = vshrl.u32 %v5500, 7
      %v5502 = vsub.s32 %v5499, %v5501
      %v5503 = vrot.slane %v5489, %v5502
      %v5504 = vcombine.low %v5496, %v5503
      %v5505 = vcombine.low %v4866, %v4868
      %v5506 = vcombine.low %v4876, %v4884
      %v5508 = vunpack.c.l.s4 1983009808
      %v5509 = vunpack.c.0.s8 %v5508
      %v5510 = vlaneseq
      %v5511 = vshrl.u32 %v5510, 7
      %v5512 = vsub.s32 %v5509, %v5511
      %v5513 = vrot.slane %v5505, %v5512
      %v5515 = vunpack.c.l.s4 1983009808
      %v5516 = vunpack.c.0.s8 %v5515
      %v5517 = vlaneseq
      %v5518 = vshrl.u32 %v5517, 7
      %v5519 = vsub.s32 %v5516, %v5518
      %v5520 = vrot.slane %v5506, %v5519
      %v5521 = vcombine.low %v5513, %v5520
      %v5522 = vcombine.low %v4883, %v4885
      %v5523 = vcombine.low %v4901, %v4900
      %v5525 = vunpack.c.l.s4 1983009808
      %v5526 = vunpack.c.0.s8 %v5525
      %v5527 = vlaneseq
      %v5528 = vshrl.u32 %v5527, 7
      %v5529 = vsub.s32 %v5526, %v5528
      %v5530 = vrot.slane %v5522, %v5529
      %v5532 = vunpack.c.l.s4 1983009808
      %v5533 = vunpack.c.0.s8 %v5532
      %v5534 = vlaneseq
      %v5535 = vshrl.u32 %v5534, 7
      %v5536 = vsub.s32 %v5533, %v5535
      %v5537 = vrot.slane %v5523, %v5536
      %v5538 = vcombine.low %v5530, %v5537
      %v5539 = vcombine.low %v4902, %v4910
      %v5540 = vcombine.low %v4918, %v4917
      %v5542 = vunpack.c.l.s4 1983009808
      %v5543 = vunpack.c.0.s8 %v5542
      %v5544 = vlaneseq
      %v5545 = vshrl.u32 %v5544, 7
      %v5546 = vsub.s32 %v5543, %v5545
      %v5547 = vrot.slane %v5539, %v5546
      %v5549 = vunpack.c.l.s4 1983009808
      %v5550 = vunpack.c.0.s8 %v5549
      %v5551 = vlaneseq
      %v5552 = vshrl.u32 %v5551, 7
      %v5553 = vsub.s32 %v5550, %v5552
      %v5554 = vrot.slane %v5540, %v5553
      %v5555 = vcombine.low %v5547, %v5554
      %v5574 = vcombine.low %v4987, %v4990
      %v5575 = vcombine.low %v4993, %v4996
      %v5577 = vunpack.c.l.s4 1983009808
      %v5578 = vunpack.c.0.s8 %v5577
      %v5579 = vlaneseq
      %v5580 = vshrl.u32 %v5579, 7
      %v5581 = vsub.s32 %v5578, %v5580
      %v5582 = vrot.slane %v5574, %v5581
      %v5584 = vunpack.c.l.s4 1983009808
      %v5585 = vunpack.c.0.s8 %v5584
      %v5586 = vlaneseq
      %v5587 = vshrl.u32 %v5586, 7
      %v5588 = vsub.s32 %v5585, %v5587
      %v5589 = vrot.slane %v5575, %v5588
      %v5590 = vcombine.low %v5582, %v5589
      %v5591 = vcombine.low %v4999, %v5002
      %v5592 = vcombine.low %v5006, %v5009
      %v5594 = vunpack.c.l.s4 1983009808
      %v5595 = vunpack.c.0.s8 %v5594
      %v5596 = vlaneseq
      %v5597 = vshrl.u32 %v5596, 7
      %v5598 = vsub.s32 %v5595, %v5597
      %v5599 = vrot.slane %v5591, %v5598
      %v5601 = vunpack.c.l.s4 1983009808
      %v5602 = vunpack.c.0.s8 %v5601
      %v5603 = vlaneseq
      %v5604 = vshrl.u32 %v5603, 7
      %v5605 = vsub.s32 %v5602, %v5604
      %v5606 = vrot.slane %v5592, %v5605
      %v5607 = vcombine.low %v5599, %v5606
      %v5608 = vcombine.low %v5012, %v5015
      %v5609 = vcombine.low %v5018, %v5021
      %v5611 = vunpack.c.l.s4 1983009808
      %v5612 = vunpack.c.0.s8 %v5611
      %v5613 = vlaneseq
      %v5614 = vshrl.u32 %v5613, 7
      %v5615 = vsub.s32 %v5612, %v5614
      %v5616 = vrot.slane %v5608, %v5615
      %v5618 = vunpack.c.l.s4 1983009808
      %v5619 = vunpack.c.0.s8 %v5618
      %v5620 = vlaneseq
      %v5621 = vshrl.u32 %v5620, 7
      %v5622 = vsub.s32 %v5619, %v5621
      %v5623 = vrot.slane %v5609, %v5622
      %v5624 = vcombine.low %v5616, %v5623
      %v5625 = vcombine.low %v5025, %v5028
      %v5626 = vcombine.low %v5031, %v5034
      %v5628 = vunpack.c.l.s4 1983009808
      %v5629 = vunpack.c.0.s8 %v5628
      %v5630 = vlaneseq
      %v5631 = vshrl.u32 %v5630, 7
      %v5632 = vsub.s32 %v5629, %v5631
      %v5633 = vrot.slane %v5625, %v5632
      %v5635 = vunpack.c.l.s4 1983009808
      %v5636 = vunpack.c.0.s8 %v5635
      %v5637 = vlaneseq
      %v5638 = vshrl.u32 %v5637, 7
      %v5639 = vsub.s32 %v5636, %v5638
      %v5640 = vrot.slane %v5626, %v5639
      %v5641 = vcombine.low %v5633, %v5640
      %v5642 = vcombine.low %v5037, %v5040
      %v5643 = vcombine.low %v5044, %v5047
      %v5645 = vunpack.c.l.s4 1983009808
      %v5646 = vunpack.c.0.s8 %v5645
      %v5647 = vlaneseq
      %v5648 = vshrl.u32 %v5647, 7
      %v5649 = vsub.s32 %v5646, %v5648
      %v5650 = vrot.slane %v5642, %v5649
      %v5652 = vunpack.c.l.s4 1983009808
      %v5653 = vunpack.c.0.s8 %v5652
      %v5654 = vlaneseq
      %v5655 = vshrl.u32 %v5654, 7
      %v5656 = vsub.s32 %v5653, %v5655
      %v5657 = vrot.slane %v5643, %v5656
      %v5658 = vcombine.low %v5650, %v5657
      %v5659 = vcombine.low %v5050, %v5053
      %v5660 = vcombine.low %v5056, %v5059
      %v5662 = vunpack.c.l.s4 1983009808
      %v5663 = vunpack.c.0.s8 %v5662
      %v5664 = vlaneseq
      %v5665 = vshrl.u32 %v5664, 7
      %v5666 = vsub.s32 %v5663, %v5665
      %v5667 = vrot.slane %v5659, %v5666
      %v5669 = vunpack.c.l.s4 1983009808
      %v5670 = vunpack.c.0.s8 %v5669
      %v5671 = vlaneseq
      %v5672 = vshrl.u32 %v5671, 7
      %v5673 = vsub.s32 %v5670, %v5672
      %v5674 = vrot.slane %v5660, %v5673
      %v5675 = vcombine.low %v5667, %v5674
      %v5676 = vcombine.low %v5063, %v5066
      %v5677 = vcombine.low %v5069, %v5072
      %v5679 = vunpack.c.l.s4 1983009808
      %v5680 = vunpack.c.0.s8 %v5679
      %v5681 = vlaneseq
      %v5682 = vshrl.u32 %v5681, 7
      %v5683 = vsub.s32 %v5680, %v5682
      %v5684 = vrot.slane %v5676, %v5683
      %v5686 = vunpack.c.l.s4 1983009808
      %v5687 = vunpack.c.0.s8 %v5686
      %v5688 = vlaneseq
      %v5689 = vshrl.u32 %v5688, 7
      %v5690 = vsub.s32 %v5687, %v5689
      %v5691 = vrot.slane %v5677, %v5690
      %v5692 = vcombine.low %v5684, %v5691
      %v5693 = vcombine.low %v5075, %v5078
      %v5694 = vcombine.low %v5082, %v5085
      %v5696 = vunpack.c.l.s4 1983009808
      %v5697 = vunpack.c.0.s8 %v5696
      %v5698 = vlaneseq
      %v5699 = vshrl.u32 %v5698, 7
      %v5700 = vsub.s32 %v5697, %v5699
      %v5701 = vrot.slane %v5693, %v5700
      %v5703 = vunpack.c.l.s4 1983009808
      %v5704 = vunpack.c.0.s8 %v5703
      %v5705 = vlaneseq
      %v5706 = vshrl.u32 %v5705, 7
      %v5707 = vsub.s32 %v5704, %v5706
      %v5708 = vrot.slane %v5694, %v5707
      %v5709 = vcombine.low %v5701, %v5708
      %v5710 = vcombine.low %v5088, %v5091
      %v5711 = vcombine.low %v5094, %v5097
      %v5713 = vunpack.c.l.s4 1983009808
      %v5714 = vunpack.c.0.s8 %v5713
      %v5715 = vlaneseq
      %v5716 = vshrl.u32 %v5715, 7
      %v5717 = vsub.s32 %v5714, %v5716
      %v5718 = vrot.slane %v5710, %v5717
      %v5720 = vunpack.c.l.s4 1983009808
      %v5721 = vunpack.c.0.s8 %v5720
      %v5722 = vlaneseq
      %v5723 = vshrl.u32 %v5722, 7
      %v5724 = vsub.s32 %v5721, %v5723
      %v5725 = vrot.slane %v5711, %v5724
      %v5726 = vcombine.low %v5718, %v5725
      %v5727 = vcombine.low %v5101, %v5104
      %v5728 = vcombine.low %v5107, %v5110
      %v5730 = vunpack.c.l.s4 1983009808
      %v5731 = vunpack.c.0.s8 %v5730
      %v5732 = vlaneseq
      %v5733 = vshrl.u32 %v5732, 7
      %v5734 = vsub.s32 %v5731, %v5733
      %v5735 = vrot.slane %v5727, %v5734
      %v5737 = vunpack.c.l.s4 1983009808
      %v5738 = vunpack.c.0.s8 %v5737
      %v5739 = vlaneseq
      %v5740 = vshrl.u32 %v5739, 7
      %v5741 = vsub.s32 %v5738, %v5740
      %v5742 = vrot.slane %v5728, %v5741
      %v5743 = vcombine.low %v5735, %v5742
      %v5744 = vcombine.low %v5113, %v5116
      %v5745 = vcombine.low %v5120, %v5123
      %v5747 = vunpack.c.l.s4 1983009808
      %v5748 = vunpack.c.0.s8 %v5747
      %v5749 = vlaneseq
      %v5750 = vshrl.u32 %v5749, 7
      %v5751 = vsub.s32 %v5748, %v5750
      %v5752 = vrot.slane %v5744, %v5751
      %v5754 = vunpack.c.l.s4 1983009808
      %v5755 = vunpack.c.0.s8 %v5754
      %v5756 = vlaneseq
      %v5757 = vshrl.u32 %v5756, 7
      %v5758 = vsub.s32 %v5755, %v5757
      %v5759 = vrot.slane %v5745, %v5758
      %v5760 = vcombine.low %v5752, %v5759
      %v5761 = vcombine.low %v5126, %v5129
      %v5762 = vcombine.low %v5132, %v5135
      %v5764 = vunpack.c.l.s4 1983009808
      %v5765 = vunpack.c.0.s8 %v5764
      %v5766 = vlaneseq
      %v5767 = vshrl.u32 %v5766, 7
      %v5768 = vsub.s32 %v5765, %v5767
      %v5769 = vrot.slane %v5761, %v5768
      %v5771 = vunpack.c.l.s4 1983009808
      %v5772 = vunpack.c.0.s8 %v5771
      %v5773 = vlaneseq
      %v5774 = vshrl.u32 %v5773, 7
      %v5775 = vsub.s32 %v5772, %v5774
      %v5776 = vrot.slane %v5762, %v5775
      %v5777 = vcombine.low %v5769, %v5776
      %v5778 = vcombine.low %v5139, %v5142
      %v5779 = vcombine.low %v5145, %v5148
      %v5781 = vunpack.c.l.s4 1983009808
      %v5782 = vunpack.c.0.s8 %v5781
      %v5783 = vlaneseq
      %v5784 = vshrl.u32 %v5783, 7
      %v5785 = vsub.s32 %v5782, %v5784
      %v5786 = vrot.slane %v5778, %v5785
      %v5788 = vunpack.c.l.s4 1983009808
      %v5789 = vunpack.c.0.s8 %v5788
      %v5790 = vlaneseq
      %v5791 = vshrl.u32 %v5790, 7
      %v5792 = vsub.s32 %v5789, %v5791
      %v5793 = vrot.slane %v5779, %v5792
      %v5794 = vcombine.low %v5786, %v5793
      %v5795 = vcombine.low %v5151, %v5154
      %v5796 = vcombine.low %v5158, %v5161
      %v5798 = vunpack.c.l.s4 1983009808
      %v5799 = vunpack.c.0.s8 %v5798
      %v5800 = vlaneseq
      %v5801 = vshrl.u32 %v5800, 7
      %v5802 = vsub.s32 %v5799, %v5801
      %v5803 = vrot.slane %v5795, %v5802
      %v5805 = vunpack.c.l.s4 1983009808
      %v5806 = vunpack.c.0.s8 %v5805
      %v5807 = vlaneseq
      %v5808 = vshrl.u32 %v5807, 7
      %v5809 = vsub.s32 %v5806, %v5808
      %v5810 = vrot.slane %v5796, %v5809
      %v5811 = vcombine.low %v5803, %v5810
      %v5812 = vcombine.low %v5164, %v5167
      %v5813 = vcombine.low %v5170, %v5173
      %v5815 = vunpack.c.l.s4 1983009808
      %v5816 = vunpack.c.0.s8 %v5815
      %v5817 = vlaneseq
      %v5818 = vshrl.u32 %v5817, 7
      %v5819 = vsub.s32 %v5816, %v5818
      %v5820 = vrot.slane %v5812, %v5819
      %v5822 = vunpack.c.l.s4 1983009808
      %v5823 = vunpack.c.0.s8 %v5822
      %v5824 = vlaneseq
      %v5825 = vshrl.u32 %v5824, 7
      %v5826 = vsub.s32 %v5823, %v5825
      %v5827 = vrot.slane %v5813, %v5826
      %v5828 = vcombine.low %v5820, %v5827
      %v5829 = vcombine.low %v5177, %v5180
      %v5830 = vcombine.low %v5183, %v5186
      %v5832 = vunpack.c.l.s4 1983009808
      %v5833 = vunpack.c.0.s8 %v5832
      %v5834 = vlaneseq
      %v5835 = vshrl.u32 %v5834, 7
      %v5836 = vsub.s32 %v5833, %v5835
      %v5837 = vrot.slane %v5829, %v5836
      %v5839 = vunpack.c.l.s4 1983009808
      %v5840 = vunpack.c.0.s8 %v5839
      %v5841 = vlaneseq
      %v5842 = vshrl.u32 %v5841, 7
      %v5843 = vsub.s32 %v5840, %v5842
      %v5844 = vrot.slane %v5830, %v5843
      %v5845 = vcombine.low %v5837, %v5844
      %v5846 = vcombine.low %v5189, %v5192
      %v5847 = vcombine.low %v5196, %v5199
      %v5849 = vunpack.c.l.s4 1983009808
      %v5850 = vunpack.c.0.s8 %v5849
      %v5851 = vlaneseq
      %v5852 = vshrl.u32 %v5851, 7
      %v5853 = vsub.s32 %v5850, %v5852
      %v5854 = vrot.slane %v5846, %v5853
      %v5856 = vunpack.c.l.s4 1983009808
      %v5857 = vunpack.c.0.s8 %v5856
      %v5858 = vlaneseq
      %v5859 = vshrl.u32 %v5858, 7
      %v5860 = vsub.s32 %v5857, %v5859
      %v5861 = vrot.slane %v5847, %v5860
      %v5862 = vcombine.low %v5854, %v5861
      %v5863 = vcombine.low %v5202, %v5205
      %v5864 = vcombine.low %v5208, %v5211
      %v5866 = vunpack.c.l.s4 1983009808
      %v5867 = vunpack.c.0.s8 %v5866
      %v5868 = vlaneseq
      %v5869 = vshrl.u32 %v5868, 7
      %v5870 = vsub.s32 %v5867, %v5869
      %v5871 = vrot.slane %v5863, %v5870
      %v5873 = vunpack.c.l.s4 1983009808
      %v5874 = vunpack.c.0.s8 %v5873
      %v5875 = vlaneseq
      %v5876 = vshrl.u32 %v5875, 7
      %v5877 = vsub.s32 %v5874, %v5876
      %v5878 = vrot.slane %v5864, %v5877
      %v5879 = vcombine.low %v5871, %v5878
      %5880 = vrot.lane.b32.xlu0 %v5590, 4
      %v5881 = vpop.permute.xlu0 %5880
      %5882 = vrot.lane.b32.xlu0 %v5607, 4
      %v5883 = vpop.permute.xlu0 %5882
      %5884 = vrot.lane.b32.xlu0 %v5624, 4
      %v5885 = vpop.permute.xlu0 %5884
      %5886 = vrot.lane.b32.xlu0 %v5641, 4
      %v5887 = vpop.permute.xlu0 %5886
      %5888 = vrot.lane.b32.xlu0 %v5658, 4
      %v5889 = vpop.permute.xlu0 %5888
      %5890 = vrot.lane.b32.xlu0 %v5675, 4
      %v5891 = vpop.permute.xlu0 %5890
      %5892 = vrot.lane.b32.xlu0 %v5692, 4
      %v5893 = vpop.permute.xlu0 %5892
      %5894 = vrot.lane.b32.xlu0 %v5709, 4
      %v5895 = vpop.permute.xlu0 %5894
      %5896 = vrot.lane.b32.xlu0 %v5726, 4
      %v5897 = vpop.permute.xlu0 %5896
      %5898 = vrot.lane.b32.xlu0 %v5743, 4
      %v5899 = vpop.permute.xlu0 %5898
      %5900 = vrot.lane.b32.xlu0 %v5760, 4
      %v5901 = vpop.permute.xlu0 %5900
      %5902 = vrot.lane.b32.xlu0 %v5777, 4
      %v5903 = vpop.permute.xlu0 %5902
      %5904 = vrot.lane.b32.xlu0 %v5794, 4
      %v5905 = vpop.permute.xlu0 %5904
      %5906 = vrot.lane.b32.xlu0 %v5811, 4
      %v5907 = vpop.permute.xlu0 %5906
      %5908 = vrot.lane.b32.xlu0 %v5828, 4
      %v5909 = vpop.permute.xlu0 %5908
      %5910 = vrot.lane.b32.xlu0 %v5845, 4
      %v5911 = vpop.permute.xlu0 %5910
      %5912 = vrot.lane.b32.xlu0 %v5862, 4
      %v5913 = vpop.permute.xlu0 %5912
      %5914 = vrot.lane.b32.xlu0 %v5879, 4
      %v5915 = vpop.permute.xlu0 %5914
      %v5934 = vcombine.low %v4578, %v4577
      %v5935 = vcombine.low %v4579, %v4587
      %v5937 = vunpack.c.l.s4 1983009808
      %v5938 = vunpack.c.0.s8 %v5937
      %v5939 = vlaneseq
      %v5940 = vshrl.u32 %v5939, 7
      %v5941 = vsub.s32 %v5938, %v5940
      %v5942 = vrot.slane %v5934, %v5941
      %v5944 = vunpack.c.l.s4 1983009808
      %v5945 = vunpack.c.0.s8 %v5944
      %v5946 = vlaneseq
      %v5947 = vshrl.u32 %v5946, 7
      %v5948 = vsub.s32 %v5945, %v5947
      %v5949 = vrot.slane %v5935, %v5948
      %v5950 = vcombine.low %v5942, %v5949
      %v5951 = vcombine.low %v4595, %v4594
      %v5952 = vcombine.low %v4604, %v4612
      %v5954 = vunpack.c.l.s4 1983009808
      %v5955 = vunpack.c.0.s8 %v5954
      %v5956 = vlaneseq
      %v5957 = vshrl.u32 %v5956, 7
      %v5958 = vsub.s32 %v5955, %v5957
      %v5959 = vrot.slane %v5951, %v5958
      %v5961 = vunpack.c.l.s4 1983009808
      %v5962 = vunpack.c.0.s8 %v5961
      %v5963 = vlaneseq
      %v5964 = vshrl.u32 %v5963, 7
      %v5965 = vsub.s32 %v5962, %v5964
      %v5966 = vrot.slane %v5952, %v5965
      %v5967 = vcombine.low %v5959, %v5966
      %v5968 = vcombine.low %v4611, %v4613
      %v5969 = vcombine.low %v4621, %v4629
      %v5971 = vunpack.c.l.s4 1983009808
      %v5972 = vunpack.c.0.s8 %v5971
      %v5973 = vlaneseq
      %v5974 = vshrl.u32 %v5973, 7
      %v5975 = vsub.s32 %v5972, %v5974
      %v5976 = vrot.slane %v5968, %v5975
      %v5978 = vunpack.c.l.s4 1983009808
      %v5979 = vunpack.c.0.s8 %v5978
      %v5980 = vlaneseq
      %v5981 = vshrl.u32 %v5980, 7
      %v5982 = vsub.s32 %v5979, %v5981
      %v5983 = vrot.slane %v5969, %v5982
      %v5984 = vcombine.low %v5976, %v5983
      %v5985 = vcombine.low %v4630, %v4638
      %v5986 = vcombine.low %v4646, %v4645
      %v5988 = vunpack.c.l.s4 1983009808
      %v5989 = vunpack.c.0.s8 %v5988
      %v5990 = vlaneseq
      %v5991 = vshrl.u32 %v5990, 7
      %v5992 = vsub.s32 %v5989, %v5991
      %v5993 = vrot.slane %v5985, %v5992
      %v5995 = vunpack.c.l.s4 1983009808
      %v5996 = vunpack.c.0.s8 %v5995
      %v5997 = vlaneseq
      %v5998 = vshrl.u32 %v5997, 7
      %v5999 = vsub.s32 %v5996, %v5998
      %v6000 = vrot.slane %v5986, %v5999
      %v6001 = vcombine.low %v5993, %v6000
      %v6002 = vcombine.low %v4647, %v4655
      %v6003 = vcombine.low %v4662, %v4664
      %v6005 = vunpack.c.l.s4 1983009808
      %v6006 = vunpack.c.0.s8 %v6005
      %v6007 = vlaneseq
      %v6008 = vshrl.u32 %v6007, 7
      %v6009 = vsub.s32 %v6006, %v6008
      %v6010 = vrot.slane %v6002, %v6009
      %v6012 = vunpack.c.l.s4 1983009808
      %v6013 = vunpack.c.0.s8 %v6012
      %v6014 = vlaneseq
      %v6015 = vshrl.u32 %v6014, 7
      %v6016 = vsub.s32 %v6013, %v6015
      %v6017 = vrot.slane %v6003, %v6016
      %v6018 = vcombine.low %v6010, %v6017
      %v6019 = vcombine.low %v4672, %v4680
      %v6020 = vcombine.low %v4679, %v4681
      %v6022 = vunpack.c.l.s4 1983009808
      %v6023 = vunpack.c.0.s8 %v6022
      %v6024 = vlaneseq
      %v6025 = vshrl.u32 %v6024, 7
      %v6026 = vsub.s32 %v6023, %v6025
      %v6027 = vrot.slane %v6019, %v6026
      %v6029 = vunpack.c.l.s4 1983009808
      %v6030 = vunpack.c.0.s8 %v6029
      %v6031 = vlaneseq
      %v6032 = vshrl.u32 %v6031, 7
      %v6033 = vsub.s32 %v6030, %v6032
      %v6034 = vrot.slane %v6020, %v6033
      %v6035 = vcombine.low %v6027, %v6034
      %v6036 = vcombine.low %v4697, %v4696
      %v6037 = vcombine.low %v4698, %v4706
      %v6039 = vunpack.c.l.s4 1983009808
      %v6040 = vunpack.c.0.s8 %v6039
      %v6041 = vlaneseq
      %v6042 = vshrl.u32 %v6041, 7
      %v6043 = vsub.s32 %v6040, %v6042
      %v6044 = vrot.slane %v6036, %v6043
      %v6046 = vunpack.c.l.s4 1983009808
      %v6047 = vunpack.c.0.s8 %v6046
      %v6048 = vlaneseq
      %v6049 = vshrl.u32 %v6048, 7
      %v6050 = vsub.s32 %v6047, %v6049
      %v6051 = vrot.slane %v6037, %v6050
      %v6052 = vcombine.low %v6044, %v6051
      %v6053 = vcombine.low %v4714, %v4713
      %v6054 = vcombine.low %v4723, %v4731
      %v6056 = vunpack.c.l.s4 1983009808
      %v6057 = vunpack.c.0.s8 %v6056
      %v6058 = vlaneseq
      %v6059 = vshrl.u32 %v6058, 7
      %v6060 = vsub.s32 %v6057, %v6059
      %v6061 = vrot.slane %v6053, %v6060
      %v6063 = vunpack.c.l.s4 1983009808
      %v6064 = vunpack.c.0.s8 %v6063
      %v6065 = vlaneseq
      %v6066 = vshrl.u32 %v6065, 7
      %v6067 = vsub.s32 %v6064, %v6066
      %v6068 = vrot.slane %v6054, %v6067
      %v6069 = vcombine.low %v6061, %v6068
      %v6070 = vcombine.low %v4730, %v4732
      %v6071 = vcombine.low %v4740, %v4748
      %v6073 = vunpack.c.l.s4 1983009808
      %v6074 = vunpack.c.0.s8 %v6073
      %v6075 = vlaneseq
      %v6076 = vshrl.u32 %v6075, 7
      %v6077 = vsub.s32 %v6074, %v6076
      %v6078 = vrot.slane %v6070, %v6077
      %v6080 = vunpack.c.l.s4 1983009808
      %v6081 = vunpack.c.0.s8 %v6080
      %v6082 = vlaneseq
      %v6083 = vshrl.u32 %v6082, 7
      %v6084 = vsub.s32 %v6081, %v6083
      %v6085 = vrot.slane %v6071, %v6084
      %v6086 = vcombine.low %v6078, %v6085
      %v6087 = vcombine.low %v4749, %v4757
      %v6088 = vcombine.low %v4765, %v4764
      %v6090 = vunpack.c.l.s4 1983009808
      %v6091 = vunpack.c.0.s8 %v6090
      %v6092 = vlaneseq
      %v6093 = vshrl.u32 %v6092, 7
      %v6094 = vsub.s32 %v6091, %v6093
      %v6095 = vrot.slane %v6087, %v6094
      %v6097 = vunpack.c.l.s4 1983009808
      %v6098 = vunpack.c.0.s8 %v6097
      %v6099 = vlaneseq
      %v6100 = vshrl.u32 %v6099, 7
      %v6101 = vsub.s32 %v6098, %v6100
      %v6102 = vrot.slane %v6088, %v6101
      %v6103 = vcombine.low %v6095, %v6102
      %v6104 = vcombine.low %v4766, %v4774
      %v6105 = vcombine.low %v4781, %v4783
      %v6107 = vunpack.c.l.s4 1983009808
      %v6108 = vunpack.c.0.s8 %v6107
      %v6109 = vlaneseq
      %v6110 = vshrl.u32 %v6109, 7
      %v6111 = vsub.s32 %v6108, %v6110
      %v6112 = vrot.slane %v6104, %v6111
      %v6114 = vunpack.c.l.s4 1983009808
      %v6115 = vunpack.c.0.s8 %v6114
      %v6116 = vlaneseq
      %v6117 = vshrl.u32 %v6116, 7
      %v6118 = vsub.s32 %v6115, %v6117
      %v6119 = vrot.slane %v6105, %v6118
      %v6120 = vcombine.low %v6112, %v6119
      %v6121 = vcombine.low %v4791, %v4799
      %v6122 = vcombine.low %v4798, %v4800
      %v6124 = vunpack.c.l.s4 1983009808
      %v6125 = vunpack.c.0.s8 %v6124
      %v6126 = vlaneseq
      %v6127 = vshrl.u32 %v6126, 7
      %v6128 = vsub.s32 %v6125, %v6127
      %v6129 = vrot.slane %v6121, %v6128
      %v6131 = vunpack.c.l.s4 1983009808
      %v6132 = vunpack.c.0.s8 %v6131
      %v6133 = vlaneseq
      %v6134 = vshrl.u32 %v6133, 7
      %v6135 = vsub.s32 %v6132, %v6134
      %v6136 = vrot.slane %v6122, %v6135
      %v6137 = vcombine.low %v6129, %v6136
      %v6138 = vcombine.low %v4816, %v4815
      %v6139 = vcombine.low %v4817, %v4825
      %v6141 = vunpack.c.l.s4 1983009808
      %v6142 = vunpack.c.0.s8 %v6141
      %v6143 = vlaneseq
      %v6144 = vshrl.u32 %v6143, 7
      %v6145 = vsub.s32 %v6142, %v6144
      %v6146 = vrot.slane %v6138, %v6145
      %v6148 = vunpack.c.l.s4 1983009808
      %v6149 = vunpack.c.0.s8 %v6148
      %v6150 = vlaneseq
      %v6151 = vshrl.u32 %v6150, 7
      %v6152 = vsub.s32 %v6149, %v6151
      %v6153 = vrot.slane %v6139, %v6152
      %v6154 = vcombine.low %v6146, %v6153
      %v6155 = vcombine.low %v4833, %v4832
      %v6156 = vcombine.low %v4842, %v4850
      %v6158 = vunpack.c.l.s4 1983009808
      %v6159 = vunpack.c.0.s8 %v6158
      %v6160 = vlaneseq
      %v6161 = vshrl.u32 %v6160, 7
      %v6162 = vsub.s32 %v6159, %v6161
      %v6163 = vrot.slane %v6155, %v6162
      %v6165 = vunpack.c.l.s4 1983009808
      %v6166 = vunpack.c.0.s8 %v6165
      %v6167 = vlaneseq
      %v6168 = vshrl.u32 %v6167, 7
      %v6169 = vsub.s32 %v6166, %v6168
      %v6170 = vrot.slane %v6156, %v6169
      %v6171 = vcombine.low %v6163, %v6170
      %v6172 = vcombine.low %v4849, %v4851
      %v6173 = vcombine.low %v4859, %v4867
      %v6175 = vunpack.c.l.s4 1983009808
      %v6176 = vunpack.c.0.s8 %v6175
      %v6177 = vlaneseq
      %v6178 = vshrl.u32 %v6177, 7
      %v6179 = vsub.s32 %v6176, %v6178
      %v6180 = vrot.slane %v6172, %v6179
      %v6182 = vunpack.c.l.s4 1983009808
      %v6183 = vunpack.c.0.s8 %v6182
      %v6184 = vlaneseq
      %v6185 = vshrl.u32 %v6184, 7
      %v6186 = vsub.s32 %v6183, %v6185
      %v6187 = vrot.slane %v6173, %v6186
      %v6188 = vcombine.low %v6180, %v6187
      %v6189 = vcombine.low %v4868, %v4876
      %v6190 = vcombine.low %v4884, %v4883
      %v6192 = vunpack.c.l.s4 1983009808
      %v6193 = vunpack.c.0.s8 %v6192
      %v6194 = vlaneseq
      %v6195 = vshrl.u32 %v6194, 7
      %v6196 = vsub.s32 %v6193, %v6195
      %v6197 = vrot.slane %v6189, %v6196
      %v6199 = vunpack.c.l.s4 1983009808
      %v6200 = vunpack.c.0.s8 %v6199
      %v6201 = vlaneseq
      %v6202 = vshrl.u32 %v6201, 7
      %v6203 = vsub.s32 %v6200, %v6202
      %v6204 = vrot.slane %v6190, %v6203
      %v6205 = vcombine.low %v6197, %v6204
      %v6206 = vcombine.low %v4885, %v4893
      %v6207 = vcombine.low %v4900, %v4902
      %v6209 = vunpack.c.l.s4 1983009808
      %v6210 = vunpack.c.0.s8 %v6209
      %v6211 = vlaneseq
      %v6212 = vshrl.u32 %v6211, 7
      %v6213 = vsub.s32 %v6210, %v6212
      %v6214 = vrot.slane %v6206, %v6213
      %v6216 = vunpack.c.l.s4 1983009808
      %v6217 = vunpack.c.0.s8 %v6216
      %v6218 = vlaneseq
      %v6219 = vshrl.u32 %v6218, 7
      %v6220 = vsub.s32 %v6217, %v6219
      %v6221 = vrot.slane %v6207, %v6220
      %v6222 = vcombine.low %v6214, %v6221
      %v6223 = vcombine.low %v4910, %v4918
      %v6224 = vcombine.low %v4917, %v4919
      %v6226 = vunpack.c.l.s4 1983009808
      %v6227 = vunpack.c.0.s8 %v6226
      %v6228 = vlaneseq
      %v6229 = vshrl.u32 %v6228, 7
      %v6230 = vsub.s32 %v6227, %v6229
      %v6231 = vrot.slane %v6223, %v6230
      %v6233 = vunpack.c.l.s4 1983009808
      %v6234 = vunpack.c.0.s8 %v6233
      %v6235 = vlaneseq
      %v6236 = vshrl.u32 %v6235, 7
      %v6237 = vsub.s32 %v6234, %v6236
      %v6238 = vrot.slane %v6224, %v6237
      %v6239 = vcombine.low %v6231, %v6238
      %6240 = vrot.lane.b32.xlu0 %v5950, 8
      %v6241 = vpop.permute.xlu0 %6240
      %6242 = vrot.lane.b32.xlu0 %v5967, 8
      %v6243 = vpop.permute.xlu0 %6242
      %6244 = vrot.lane.b32.xlu0 %v5984, 8
      %v6245 = vpop.permute.xlu0 %6244
      %6246 = vrot.lane.b32.xlu0 %v6001, 8
      %v6247 = vpop.permute.xlu0 %6246
      %6248 = vrot.lane.b32.xlu0 %v6018, 8
      %v6249 = vpop.permute.xlu0 %6248
      %6250 = vrot.lane.b32.xlu0 %v6035, 8
      %v6251 = vpop.permute.xlu0 %6250
      %6252 = vrot.lane.b32.xlu0 %v6052, 8
      %v6253 = vpop.permute.xlu0 %6252
      %6254 = vrot.lane.b32.xlu0 %v6069, 8
      %v6255 = vpop.permute.xlu0 %6254
      %6256 = vrot.lane.b32.xlu0 %v6086, 8
      %v6257 = vpop.permute.xlu0 %6256
      %6258 = vrot.lane.b32.xlu0 %v6103, 8
      %v6259 = vpop.permute.xlu0 %6258
      %6260 = vrot.lane.b32.xlu0 %v6120, 8
      %v6261 = vpop.permute.xlu0 %6260
      %6262 = vrot.lane.b32.xlu0 %v6137, 8
      %v6263 = vpop.permute.xlu0 %6262
      %6264 = vrot.lane.b32.xlu0 %v6154, 8
      %v6265 = vpop.permute.xlu0 %6264
      %6266 = vrot.lane.b32.xlu0 %v6171, 8
      %v6267 = vpop.permute.xlu0 %6266
      %6268 = vrot.lane.b32.xlu0 %v6188, 8
      %v6269 = vpop.permute.xlu0 %6268
      %6270 = vrot.lane.b32.xlu0 %v6205, 8
      %v6271 = vpop.permute.xlu0 %6270
      %6272 = vrot.lane.b32.xlu0 %v6222, 8
      %v6273 = vpop.permute.xlu0 %6272
      %6274 = vrot.lane.b32.xlu0 %v6239, 8
      %v6275 = vpop.permute.xlu0 %6274
      %v6294 = vcombine.low %v5282, %v5292
      %v6295 = vcombine.low %v5299, %v5309
      %v6296 = vcombine.low %v5316, %v5326
      %v6297 = vcombine.low %v5333, %v5343
      %v6298 = vcombine.low %v5350, %v5360
      %v6299 = vcombine.low %v5367, %v5377
      %v6300 = vcombine.low %v5384, %v5394
      %v6301 = vcombine.low %v5401, %v5411
      %v6302 = vcombine.low %v5418, %v5428
      %v6303 = vcombine.low %v5435, %v5445
      %v6304 = vcombine.low %v5452, %v5462
      %v6305 = vcombine.low %v5469, %v5479
      %v6306 = vcombine.low %v5486, %v5496
      %v6307 = vcombine.low %v5503, %v5513
      %v6308 = vcombine.low %v5520, %v5530
      %v6309 = vcombine.low %v5537, %v5547
      %v6310 = vcombine.low %v4927, %v4935
      %v6312 = vunpack.c.l.s4 1983009808
      %v6313 = vunpack.c.0.s8 %v6312
      %v6314 = vlaneseq
      %v6315 = vshrl.u32 %v6314, 7
      %v6316 = vsub.s32 %v6313, %v6315
      %v6317 = vrot.slane %v6310, %v6316
      %v6318 = vcombine.low %v5554, %v6317
      %v6319 = vcombine.low %v4934, %v4936
      %v6320 = vcombine.low %v4944, %v4952
      %v6322 = vunpack.c.l.s4 1983009808
      %v6323 = vunpack.c.0.s8 %v6322
      %v6324 = vlaneseq
      %v6325 = vshrl.u32 %v6324, 7
      %v6326 = vsub.s32 %v6323, %v6325
      %v6327 = vrot.slane %v6319, %v6326
      %v6329 = vunpack.c.l.s4 1983009808
      %v6330 = vunpack.c.0.s8 %v6329
      %v6331 = vlaneseq
      %v6332 = vshrl.u32 %v6331, 7
      %v6333 = vsub.s32 %v6330, %v6332
      %v6334 = vrot.slane %v6320, %v6333
      %v6335 = vcombine.low %v6327, %v6334
      %6336 = vrot.lane.b32.xlu0 %v6294, 12
      %v6337 = vpop.permute.xlu0 %6336
      %6338 = vrot.lane.b32.xlu0 %v6295, 12
      %v6339 = vpop.permute.xlu0 %6338
      %6340 = vrot.lane.b32.xlu0 %v6296, 12
      %v6341 = vpop.permute.xlu0 %6340
      %6342 = vrot.lane.b32.xlu0 %v6297, 12
      %v6343 = vpop.permute.xlu0 %6342
      %6344 = vrot.lane.b32.xlu0 %v6298, 12
      %v6345 = vpop.permute.xlu0 %6344
      %6346 = vrot.lane.b32.xlu0 %v6299, 12
      %v6347 = vpop.permute.xlu0 %6346
      %6348 = vrot.lane.b32.xlu0 %v6300, 12
      %v6349 = vpop.permute.xlu0 %6348
      %6350 = vrot.lane.b32.xlu0 %v6301, 12
      %v6351 = vpop.permute.xlu0 %6350
      %6352 = vrot.lane.b32.xlu0 %v6302, 12
      %v6353 = vpop.permute.xlu0 %6352
      %6354 = vrot.lane.b32.xlu0 %v6303, 12
      %v6355 = vpop.permute.xlu0 %6354
      %6356 = vrot.lane.b32.xlu0 %v6304, 12
      %v6357 = vpop.permute.xlu0 %6356
      %6358 = vrot.lane.b32.xlu0 %v6305, 12
      %v6359 = vpop.permute.xlu0 %6358
      %6360 = vrot.lane.b32.xlu0 %v6306, 12
      %v6361 = vpop.permute.xlu0 %6360
      %6362 = vrot.lane.b32.xlu0 %v6307, 12
      %v6363 = vpop.permute.xlu0 %6362
      %6364 = vrot.lane.b32.xlu0 %v6308, 12
      %v6365 = vpop.permute.xlu0 %6364
      %6366 = vrot.lane.b32.xlu0 %v6309, 12
      %v6367 = vpop.permute.xlu0 %6366
      %6368 = vrot.lane.b32.xlu0 %v6318, 12
      %v6369 = vpop.permute.xlu0 %6368
      %6370 = vrot.lane.b32.xlu0 %v6335, 12
      %v6371 = vpop.permute.xlu0 %6370
      %v6390 = vcombine.low %v5606, %v5616
      %v6391 = vcombine.low %v5623, %v5633
      %v6392 = vcombine.low %v5640, %v5650
      %v6393 = vcombine.low %v5657, %v5667
      %v6394 = vcombine.low %v5674, %v5684
      %v6395 = vcombine.low %v5691, %v5701
      %v6396 = vcombine.low %v5708, %v5718
      %v6397 = vcombine.low %v5725, %v5735
      %v6398 = vcombine.low %v5742, %v5752
      %v6399 = vcombine.low %v5759, %v5769
      %v6400 = vcombine.low %v5776, %v5786
      %v6401 = vcombine.low %v5793, %v5803
      %v6402 = vcombine.low %v5810, %v5820
      %v6403 = vcombine.low %v5827, %v5837
      %v6404 = vcombine.low %v5844, %v5854
      %v6405 = vcombine.low %v5861, %v5871
      %v6406 = vcombine.low %v5215, %v5218
      %v6408 = vunpack.c.l.s4 1983009808
      %v6409 = vunpack.c.0.s8 %v6408
      %v6410 = vlaneseq
      %v6411 = vshrl.u32 %v6410, 7
      %v6412 = vsub.s32 %v6409, %v6411
      %v6413 = vrot.slane %v6406, %v6412
      %v6414 = vcombine.low %v5878, %v6413
      %v6415 = vcombine.low %v5221, %v5224
      %v6416 = vcombine.low %v5227, %v5230
      %v6418 = vunpack.c.l.s4 1983009808
      %v6419 = vunpack.c.0.s8 %v6418
      %v6420 = vlaneseq
      %v6421 = vshrl.u32 %v6420, 7
      %v6422 = vsub.s32 %v6419, %v6421
      %v6423 = vrot.slane %v6415, %v6422
      %v6425 = vunpack.c.l.s4 1983009808
      %v6426 = vunpack.c.0.s8 %v6425
      %v6427 = vlaneseq
      %v6428 = vshrl.u32 %v6427, 7
      %v6429 = vsub.s32 %v6426, %v6428
      %v6430 = vrot.slane %v6416, %v6429
      %v6431 = vcombine.low %v6423, %v6430
      %6432 = vrot.lane.b32.xlu0 %v6390, 16
      %v6433 = vpop.permute.xlu0 %6432
      %6434 = vrot.lane.b32.xlu0 %v6391, 16
      %v6435 = vpop.permute.xlu0 %6434
      %6436 = vrot.lane.b32.xlu0 %v6392, 16
      %v6437 = vpop.permute.xlu0 %6436
      %6438 = vrot.lane.b32.xlu0 %v6393, 16
      %v6439 = vpop.permute.xlu0 %6438
      %6440 = vrot.lane.b32.xlu0 %v6394, 16
      %v6441 = vpop.permute.xlu0 %6440
      %6442 = vrot.lane.b32.xlu0 %v6395, 16
      %v6443 = vpop.permute.xlu0 %6442
      %6444 = vrot.lane.b32.xlu0 %v6396, 16
      %v6445 = vpop.permute.xlu0 %6444
      %6446 = vrot.lane.b32.xlu0 %v6397, 16
      %v6447 = vpop.permute.xlu0 %6446
      %6448 = vrot.lane.b32.xlu0 %v6398, 16
      %v6449 = vpop.permute.xlu0 %6448
      %6450 = vrot.lane.b32.xlu0 %v6399, 16
      %v6451 = vpop.permute.xlu0 %6450
      %6452 = vrot.lane.b32.xlu0 %v6400, 16
      %v6453 = vpop.permute.xlu0 %6452
      %6454 = vrot.lane.b32.xlu0 %v6401, 16
      %v6455 = vpop.permute.xlu0 %6454
      %6456 = vrot.lane.b32.xlu0 %v6402, 16
      %v6457 = vpop.permute.xlu0 %6456
      %6458 = vrot.lane.b32.xlu0 %v6403, 16
      %v6459 = vpop.permute.xlu0 %6458
      %6460 = vrot.lane.b32.xlu0 %v6404, 16
      %v6461 = vpop.permute.xlu0 %6460
      %6462 = vrot.lane.b32.xlu0 %v6405, 16
      %v6463 = vpop.permute.xlu0 %6462
      %6464 = vrot.lane.b32.xlu0 %v6414, 16
      %v6465 = vpop.permute.xlu0 %6464
      %6466 = vrot.lane.b32.xlu0 %v6431, 16
      %v6467 = vpop.permute.xlu0 %6466
      %v6486 = vcombine.low %v5966, %v5976
      %v6487 = vcombine.low %v5983, %v5993
      %v6488 = vcombine.low %v6000, %v6010
      %v6489 = vcombine.low %v6017, %v6027
      %v6490 = vcombine.low %v6034, %v6044
      %v6491 = vcombine.low %v6051, %v6061
      %v6492 = vcombine.low %v6068, %v6078
      %v6493 = vcombine.low %v6085, %v6095
      %v6494 = vcombine.low %v6102, %v6112
      %v6495 = vcombine.low %v6119, %v6129
      %v6496 = vcombine.low %v6136, %v6146
      %v6497 = vcombine.low %v6153, %v6163
      %v6498 = vcombine.low %v6170, %v6180
      %v6499 = vcombine.low %v6187, %v6197
      %v6500 = vcombine.low %v6204, %v6214
      %v6501 = vcombine.low %v6221, %v6231
      %v6502 = vcombine.low %v4935, %v4934
      %v6504 = vunpack.c.l.s4 1983009808
      %v6505 = vunpack.c.0.s8 %v6504
      %v6506 = vlaneseq
      %v6507 = vshrl.u32 %v6506, 7
      %v6508 = vsub.s32 %v6505, %v6507
      %v6509 = vrot.slane %v6502, %v6508
      %v6510 = vcombine.low %v6238, %v6509
      %v6511 = vcombine.low %v4936, %v4944
      %v6512 = vcombine.low %v4952, %v4951
      %v6514 = vunpack.c.l.s4 1983009808
      %v6515 = vunpack.c.0.s8 %v6514
      %v6516 = vlaneseq
      %v6517 = vshrl.u32 %v6516, 7
      %v6518 = vsub.s32 %v6515, %v6517
      %v6519 = vrot.slane %v6511, %v6518
      %v6521 = vunpack.c.l.s4 1983009808
      %v6522 = vunpack.c.0.s8 %v6521
      %v6523 = vlaneseq
      %v6524 = vshrl.u32 %v6523, 7
      %v6525 = vsub.s32 %v6522, %v6524
      %v6526 = vrot.slane %v6512, %v6525
      %v6527 = vcombine.low %v6519, %v6526
      %6528 = vrot.lane.b32.xlu0 %v6486, 20
      %v6529 = vpop.permute.xlu0 %6528
      %6530 = vrot.lane.b32.xlu0 %v6487, 20
      %v6531 = vpop.permute.xlu0 %6530
      %6532 = vrot.lane.b32.xlu0 %v6488, 20
      %v6533 = vpop.permute.xlu0 %6532
      %6534 = vrot.lane.b32.xlu0 %v6489, 20
      %v6535 = vpop.permute.xlu0 %6534
      %6536 = vrot.lane.b32.xlu0 %v6490, 20
      %v6537 = vpop.permute.xlu0 %6536
      %6538 = vrot.lane.b32.xlu0 %v6491, 20
      %v6539 = vpop.permute.xlu0 %6538
      %6540 = vrot.lane.b32.xlu0 %v6492, 20
      %v6541 = vpop.permute.xlu0 %6540
      %6542 = vrot.lane.b32.xlu0 %v6493, 20
      %v6543 = vpop.permute.xlu0 %6542
      %6544 = vrot.lane.b32.xlu0 %v6494, 20
      %v6545 = vpop.permute.xlu0 %6544
      %6546 = vrot.lane.b32.xlu0 %v6495, 20
      %v6547 = vpop.permute.xlu0 %6546
      %6548 = vrot.lane.b32.xlu0 %v6496, 20
      %v6549 = vpop.permute.xlu0 %6548
      %6550 = vrot.lane.b32.xlu0 %v6497, 20
      %v6551 = vpop.permute.xlu0 %6550
      %6552 = vrot.lane.b32.xlu0 %v6498, 20
      %v6553 = vpop.permute.xlu0 %6552
      %6554 = vrot.lane.b32.xlu0 %v6499, 20
      %v6555 = vpop.permute.xlu0 %6554
      %6556 = vrot.lane.b32.xlu0 %v6500, 20
      %v6557 = vpop.permute.xlu0 %6556
      %6558 = vrot.lane.b32.xlu0 %v6501, 20
      %v6559 = vpop.permute.xlu0 %6558
      %6560 = vrot.lane.b32.xlu0 %v6510, 20
      %v6561 = vpop.permute.xlu0 %6560
      %6562 = vrot.lane.b32.xlu0 %v6527, 20
      %v6563 = vpop.permute.xlu0 %6562
      %v6582 = vcombine.low %v6317, %v6327
      %v6583 = vcombine.low %v4953, %v4961
      %v6585 = vunpack.c.l.s4 1983009808
      %v6586 = vunpack.c.0.s8 %v6585
      %v6587 = vlaneseq
      %v6588 = vshrl.u32 %v6587, 7
      %v6589 = vsub.s32 %v6586, %v6588
      %v6590 = vrot.slane %v6583, %v6589
      %v6591 = vcombine.low %v6334, %v6590
      %v6592 = vcombine.low %v4969, %v4968
      %v6593 = vcombine.low %v4970, %v4977
      %v6595 = vunpack.c.l.s4 1983009808
      %v6596 = vunpack.c.0.s8 %v6595
      %v6597 = vlaneseq
      %v6598 = vshrl.u32 %v6597, 7
      %v6599 = vsub.s32 %v6596, %v6598
      %v6600 = vrot.slane %v6592, %v6599
      %v6602 = vunpack.c.l.s4 1983009808
      %v6603 = vunpack.c.0.s8 %v6602
      %v6604 = vlaneseq
      %v6605 = vshrl.u32 %v6604, 7
      %v6606 = vsub.s32 %v6603, %v6605
      %v6607 = vrot.slane %v6593, %v6606
      %v6608 = vcombine.low %v6600, %v6607
      %6609 = vrot.lane.b32.xlu0 %v5317, 24
      %v6610 = vpop.permute.xlu0 %6609
      %6611 = vrot.lane.b32.xlu0 %v5334, 24
      %v6612 = vpop.permute.xlu0 %6611
      %6613 = vrot.lane.b32.xlu0 %v5351, 24
      %v6614 = vpop.permute.xlu0 %6613
      %6615 = vrot.lane.b32.xlu0 %v5368, 24
      %v6616 = vpop.permute.xlu0 %6615
      %6617 = vrot.lane.b32.xlu0 %v5385, 24
      %v6618 = vpop.permute.xlu0 %6617
      %6619 = vrot.lane.b32.xlu0 %v5402, 24
      %v6620 = vpop.permute.xlu0 %6619
      %6621 = vrot.lane.b32.xlu0 %v5419, 24
      %v6622 = vpop.permute.xlu0 %6621
      %6623 = vrot.lane.b32.xlu0 %v5436, 24
      %v6624 = vpop.permute.xlu0 %6623
      %6625 = vrot.lane.b32.xlu0 %v5453, 24
      %v6626 = vpop.permute.xlu0 %6625
      %6627 = vrot.lane.b32.xlu0 %v5470, 24
      %v6628 = vpop.permute.xlu0 %6627
      %6629 = vrot.lane.b32.xlu0 %v5487, 24
      %v6630 = vpop.permute.xlu0 %6629
      %6631 = vrot.lane.b32.xlu0 %v5504, 24
      %v6632 = vpop.permute.xlu0 %6631
      %6633 = vrot.lane.b32.xlu0 %v5521, 24
      %v6634 = vpop.permute.xlu0 %6633
      %6635 = vrot.lane.b32.xlu0 %v5538, 24
      %v6636 = vpop.permute.xlu0 %6635
      %6637 = vrot.lane.b32.xlu0 %v5555, 24
      %v6638 = vpop.permute.xlu0 %6637
      %6639 = vrot.lane.b32.xlu0 %v6582, 24
      %v6640 = vpop.permute.xlu0 %6639
      %6641 = vrot.lane.b32.xlu0 %v6591, 24
      %v6642 = vpop.permute.xlu0 %6641
      %6643 = vrot.lane.b32.xlu0 %v6608, 24
      %v6644 = vpop.permute.xlu0 %6643
      %v6663 = vcombine.low %v6413, %v6423
      %v6664 = vcombine.low %v5234, %v5237
      %v6666 = vunpack.c.l.s4 1983009808
      %v6667 = vunpack.c.0.s8 %v6666
      %v6668 = vlaneseq
      %v6669 = vshrl.u32 %v6668, 7
      %v6670 = vsub.s32 %v6667, %v6669
      %v6671 = vrot.slane %v6664, %v6670
      %v6672 = vcombine.low %v6430, %v6671
      %v6673 = vcombine.low %v5240, %v5243
      %v6674 = vcombine.low %v5246, %v5249
      %v6676 = vunpack.c.l.s4 1983009808
      %v6677 = vunpack.c.0.s8 %v6676
      %v6678 = vlaneseq
      %v6679 = vshrl.u32 %v6678, 7
      %v6680 = vsub.s32 %v6677, %v6679
      %v6681 = vrot.slane %v6673, %v6680
      %v6683 = vunpack.c.l.s4 1983009808
      %v6684 = vunpack.c.0.s8 %v6683
      %v6685 = vlaneseq
      %v6686 = vshrl.u32 %v6685, 7
      %v6687 = vsub.s32 %v6684, %v6686
      %v6688 = vrot.slane %v6674, %v6687
      %v6689 = vcombine.low %v6681, %v6688
      %6690 = vrot.lane.b32.xlu0 %v5641, 28
      %v6691 = vpop.permute.xlu0 %6690
      %6692 = vrot.lane.b32.xlu0 %v5658, 28
      %v6693 = vpop.permute.xlu0 %6692
      %6694 = vrot.lane.b32.xlu0 %v5675, 28
      %v6695 = vpop.permute.xlu0 %6694
      %6696 = vrot.lane.b32.xlu0 %v5692, 28
      %v6697 = vpop.permute.xlu0 %6696
      %6698 = vrot.lane.b32.xlu0 %v5709, 28
      %v6699 = vpop.permute.xlu0 %6698
      %6700 = vrot.lane.b32.xlu0 %v5726, 28
      %v6701 = vpop.permute.xlu0 %6700
      %6702 = vrot.lane.b32.xlu0 %v5743, 28
      %v6703 = vpop.permute.xlu0 %6702
      %6704 = vrot.lane.b32.xlu0 %v5760, 28
      %v6705 = vpop.permute.xlu0 %6704
      %6706 = vrot.lane.b32.xlu0 %v5777, 28
      %v6707 = vpop.permute.xlu0 %6706
      %6708 = vrot.lane.b32.xlu0 %v5794, 28
      %v6709 = vpop.permute.xlu0 %6708
      %6710 = vrot.lane.b32.xlu0 %v5811, 28
      %v6711 = vpop.permute.xlu0 %6710
      %6712 = vrot.lane.b32.xlu0 %v5828, 28
      %v6713 = vpop.permute.xlu0 %6712
      %6714 = vrot.lane.b32.xlu0 %v5845, 28
      %v6715 = vpop.permute.xlu0 %6714
      %6716 = vrot.lane.b32.xlu0 %v5862, 28
      %v6717 = vpop.permute.xlu0 %6716
      %6718 = vrot.lane.b32.xlu0 %v5879, 28
      %v6719 = vpop.permute.xlu0 %6718
      %6720 = vrot.lane.b32.xlu0 %v6663, 28
      %v6721 = vpop.permute.xlu0 %6720
      %6722 = vrot.lane.b32.xlu0 %v6672, 28
      %v6723 = vpop.permute.xlu0 %6722
      %6724 = vrot.lane.b32.xlu0 %v6689, 28
      %v6725 = vpop.permute.xlu0 %6724
      %v6744 = vcombine.low %v6509, %v6519
      %v6745 = vcombine.low %v4961, %v4969
      %v6747 = vunpack.c.l.s4 1983009808
      %v6748 = vunpack.c.0.s8 %v6747
      %v6749 = vlaneseq
      %v6750 = vshrl.u32 %v6749, 7
      %v6751 = vsub.s32 %v6748, %v6750
      %v6752 = vrot.slane %v6745, %v6751
      %v6753 = vcombine.low %v6526, %v6752
      %v6754 = vcombine.low %v4968, %v4970
      %v6755 = vcombine.low %v4977, %v4978
      %v6757 = vunpack.c.l.s4 1983009808
      %v6758 = vunpack.c.0.s8 %v6757
      %v6759 = vlaneseq
      %v6760 = vshrl.u32 %v6759, 7
      %v6761 = vsub.s32 %v6758, %v6760
      %v6762 = vrot.slane %v6754, %v6761
      %v6764 = vunpack.c.l.s4 1983009808
      %v6765 = vunpack.c.0.s8 %v6764
      %v6766 = vlaneseq
      %v6767 = vshrl.u32 %v6766, 7
      %v6768 = vsub.s32 %v6765, %v6767
      %v6769 = vrot.slane %v6755, %v6768
      %v6770 = vcombine.low %v6762, %v6769
      %6771 = vrot.lane.b32.xlu0 %v6001, 32
      %v6772 = vpop.permute.xlu0 %6771
      %6773 = vrot.lane.b32.xlu0 %v6018, 32
      %v6774 = vpop.permute.xlu0 %6773
      %6775 = vrot.lane.b32.xlu0 %v6035, 32
      %v6776 = vpop.permute.xlu0 %6775
      %6777 = vrot.lane.b32.xlu0 %v6052, 32
      %v6778 = vpop.permute.xlu0 %6777
      %6779 = vrot.lane.b32.xlu0 %v6069, 32
      %v6780 = vpop.permute.xlu0 %6779
      %6781 = vrot.lane.b32.xlu0 %v6086, 32
      %v6782 = vpop.permute.xlu0 %6781
      %6783 = vrot.lane.b32.xlu0 %v6103, 32
      %v6784 = vpop.permute.xlu0 %6783
      %6785 = vrot.lane.b32.xlu0 %v6120, 32
      %v6786 = vpop.permute.xlu0 %6785
      %6787 = vrot.lane.b32.xlu0 %v6137, 32
      %v6788 = vpop.permute.xlu0 %6787
      %6789 = vrot.lane.b32.xlu0 %v6154, 32
      %v6790 = vpop.permute.xlu0 %6789
      %6791 = vrot.lane.b32.xlu0 %v6171, 32
      %v6792 = vpop.permute.xlu0 %6791
      %6793 = vrot.lane.b32.xlu0 %v6188, 32
      %v6794 = vpop.permute.xlu0 %6793
      %6795 = vrot.lane.b32.xlu0 %v6205, 32
      %v6796 = vpop.permute.xlu0 %6795
      %6797 = vrot.lane.b32.xlu0 %v6222, 32
      %v6798 = vpop.permute.xlu0 %6797
      %6799 = vrot.lane.b32.xlu0 %v6239, 32
      %v6800 = vpop.permute.xlu0 %6799
      %6801 = vrot.lane.b32.xlu0 %v6744, 32
      %v6802 = vpop.permute.xlu0 %6801
      %6803 = vrot.lane.b32.xlu0 %v6753, 32
      %v6804 = vpop.permute.xlu0 %6803
      %6805 = vrot.lane.b32.xlu0 %v6770, 32
      %v6806 = vpop.permute.xlu0 %6805
      %v6825 = vsel %vm3978, %v5266, %v5881
      %v6826 = vsel %vm3978, %v5283, %v5883
      %v6827 = vsel %vm3978, %v5300, %v5885
      %v6828 = vsel %vm3978, %v5317, %v5887
      %v6829 = vsel %vm3978, %v5334, %v5889
      %v6830 = vsel %vm3978, %v5351, %v5891
      %v6831 = vsel %vm3978, %v5368, %v5893
      %v6832 = vsel %vm3978, %v5385, %v5895
      %v6833 = vsel %vm3978, %v5402, %v5897
      %v6834 = vsel %vm3978, %v5419, %v5899
      %v6835 = vsel %vm3978, %v5436, %v5901
      %v6836 = vsel %vm3978, %v5453, %v5903
      %v6837 = vsel %vm3978, %v5470, %v5905
      %v6838 = vsel %vm3978, %v5487, %v5907
      %v6839 = vsel %vm3978, %v5504, %v5909
      %v6840 = vsel %vm3978, %v5521, %v5911
      %v6841 = vsel %vm3978, %v5538, %v5913
      %v6842 = vsel %vm3978, %v5555, %v5915
      %v6843 = vsel %vm4004, %v6825, %v6241
      %v6844 = vsel %vm4004, %v6826, %v6243
      %v6845 = vsel %vm4004, %v6827, %v6245
      %v6846 = vsel %vm4004, %v6828, %v6247
      %v6847 = vsel %vm4004, %v6829, %v6249
      %v6848 = vsel %vm4004, %v6830, %v6251
      %v6849 = vsel %vm4004, %v6831, %v6253
      %v6850 = vsel %vm4004, %v6832, %v6255
      %v6851 = vsel %vm4004, %v6833, %v6257
      %v6852 = vsel %vm4004, %v6834, %v6259
      %v6853 = vsel %vm4004, %v6835, %v6261
      %v6854 = vsel %vm4004, %v6836, %v6263
      %v6855 = vsel %vm4004, %v6837, %v6265
      %v6856 = vsel %vm4004, %v6838, %v6267
      %v6857 = vsel %vm4004, %v6839, %v6269
      %v6858 = vsel %vm4004, %v6840, %v6271
      %v6859 = vsel %vm4004, %v6841, %v6273
      %v6860 = vsel %vm4004, %v6842, %v6275
      %v6861 = vsel %vm4030, %v6843, %v6337
      %v6862 = vsel %vm4030, %v6844, %v6339
      %v6863 = vsel %vm4030, %v6845, %v6341
      %v6864 = vsel %vm4030, %v6846, %v6343
      %v6865 = vsel %vm4030, %v6847, %v6345
      %v6866 = vsel %vm4030, %v6848, %v6347
      %v6867 = vsel %vm4030, %v6849, %v6349
      %v6868 = vsel %vm4030, %v6850, %v6351
      %v6869 = vsel %vm4030, %v6851, %v6353
      %v6870 = vsel %vm4030, %v6852, %v6355
      %v6871 = vsel %vm4030, %v6853, %v6357
      %v6872 = vsel %vm4030, %v6854, %v6359
      %v6873 = vsel %vm4030, %v6855, %v6361
      %v6874 = vsel %vm4030, %v6856, %v6363
      %v6875 = vsel %vm4030, %v6857, %v6365
      %v6876 = vsel %vm4030, %v6858, %v6367
      %v6877 = vsel %vm4030, %v6859, %v6369
      %v6878 = vsel %vm4030, %v6860, %v6371
      %v6879 = vsel %vm4056, %v6861, %v6433
      %v6880 = vsel %vm4056, %v6862, %v6435
      %v6881 = vsel %vm4056, %v6863, %v6437
      %v6882 = vsel %vm4056, %v6864, %v6439
      %v6883 = vsel %vm4056, %v6865, %v6441
      %v6884 = vsel %vm4056, %v6866, %v6443
      %v6885 = vsel %vm4056, %v6867, %v6445
      %v6886 = vsel %vm4056, %v6868, %v6447
      %v6887 = vsel %vm4056, %v6869, %v6449
      %v6888 = vsel %vm4056, %v6870, %v6451
      %v6889 = vsel %vm4056, %v6871, %v6453
      %v6890 = vsel %vm4056, %v6872, %v6455
      %v6891 = vsel %vm4056, %v6873, %v6457
      %v6892 = vsel %vm4056, %v6874, %v6459
      %v6893 = vsel %vm4056, %v6875, %v6461
      %v6894 = vsel %vm4056, %v6876, %v6463
      %v6895 = vsel %vm4056, %v6877, %v6465
      %v6896 = vsel %vm4056, %v6878, %v6467
      %v6897 = vsel %vm4082, %v6879, %v6529
      %v6898 = vsel %vm4082, %v6880, %v6531
      %v6899 = vsel %vm4082, %v6881, %v6533
      %v6900 = vsel %vm4082, %v6882, %v6535
      %v6901 = vsel %vm4082, %v6883, %v6537
      %v6902 = vsel %vm4082, %v6884, %v6539
      %v6903 = vsel %vm4082, %v6885, %v6541
      %v6904 = vsel %vm4082, %v6886, %v6543
      %v6905 = vsel %vm4082, %v6887, %v6545
      %v6906 = vsel %vm4082, %v6888, %v6547
      %v6907 = vsel %vm4082, %v6889, %v6549
      %v6908 = vsel %vm4082, %v6890, %v6551
      %v6909 = vsel %vm4082, %v6891, %v6553
      %v6910 = vsel %vm4082, %v6892, %v6555
      %v6911 = vsel %vm4082, %v6893, %v6557
      %v6912 = vsel %vm4082, %v6894, %v6559
      %v6913 = vsel %vm4082, %v6895, %v6561
      %v6914 = vsel %vm4082, %v6896, %v6563
      %v6915 = vsel %vm4108, %v6897, %v6610
      %v6916 = vsel %vm4108, %v6898, %v6612
      %v6917 = vsel %vm4108, %v6899, %v6614
      %v6918 = vsel %vm4108, %v6900, %v6616
      %v6919 = vsel %vm4108, %v6901, %v6618
      %v6920 = vsel %vm4108, %v6902, %v6620
      %v6921 = vsel %vm4108, %v6903, %v6622
      %v6922 = vsel %vm4108, %v6904, %v6624
      %v6923 = vsel %vm4108, %v6905, %v6626
      %v6924 = vsel %vm4108, %v6906, %v6628
      %v6925 = vsel %vm4108, %v6907, %v6630
      %v6926 = vsel %vm4108, %v6908, %v6632
      %v6927 = vsel %vm4108, %v6909, %v6634
      %v6928 = vsel %vm4108, %v6910, %v6636
      %v6929 = vsel %vm4108, %v6911, %v6638
      %v6930 = vsel %vm4108, %v6912, %v6640
      %v6931 = vsel %vm4108, %v6913, %v6642
      %v6932 = vsel %vm4108, %v6914, %v6644
      %v6933 = vsel %vm4134, %v6915, %v6691
      %v6934 = vsel %vm4134, %v6916, %v6693
      %v6935 = vsel %vm4134, %v6917, %v6695
      %v6936 = vsel %vm4134, %v6918, %v6697
      %v6937 = vsel %vm4134, %v6919, %v6699
      %v6938 = vsel %vm4134, %v6920, %v6701
      %v6939 = vsel %vm4134, %v6921, %v6703
      %v6940 = vsel %vm4134, %v6922, %v6705
      %v6941 = vsel %vm4134, %v6923, %v6707
      %v6942 = vsel %vm4134, %v6924, %v6709
      %v6943 = vsel %vm4134, %v6925, %v6711
      %v6944 = vsel %vm4134, %v6926, %v6713
      %v6945 = vsel %vm4134, %v6927, %v6715
      %v6946 = vsel %vm4134, %v6928, %v6717
      %v6947 = vsel %vm4134, %v6929, %v6719
      %v6948 = vsel %vm4134, %v6930, %v6721
      %v6949 = vsel %vm4134, %v6931, %v6723
      %v6950 = vsel %vm4134, %v6932, %v6725
      %v6951 = vsel %vm4160, %v6933, %v6772
      %v6952 = vsel %vm4160, %v6934, %v6774
      %v6953 = vsel %vm4160, %v6935, %v6776
      %v6954 = vsel %vm4160, %v6936, %v6778
      %v6955 = vsel %vm4160, %v6937, %v6780
      %v6956 = vsel %vm4160, %v6938, %v6782
      %v6957 = vsel %vm4160, %v6939, %v6784
      %v6958 = vsel %vm4160, %v6940, %v6786
      %v6959 = vsel %vm4160, %v6941, %v6788
      %v6960 = vsel %vm4160, %v6942, %v6790
      %v6961 = vsel %vm4160, %v6943, %v6792
      %v6962 = vsel %vm4160, %v6944, %v6794
      %v6963 = vsel %vm4160, %v6945, %v6796
      %v6964 = vsel %vm4160, %v6946, %v6798
      %v6965 = vsel %vm4160, %v6947, %v6800
      %v6966 = vsel %vm4160, %v6948, %v6802
      %v6967 = vsel %vm4160, %v6949, %v6804
      %v6968 = vsel %vm4160, %v6950, %v6806
      %v6969 = vld [vmem:[%s4] sm:$0x1]
      %v6971 = vlaneseq
      %v6972 = vshrl.u32 %v6971, 7
      %v6973 = vsub.s32 0, %v6972
      %v6974 = vrot.slane %v6969, %v6973
      %v6977 = vsel %vm4193, %v6951, 0
      %v6980 = vsel %vm4193, %v6952, 0
      %v6983 = vsel %vm4193, %v6953, 0
      %v6986 = vsel %vm4193, %v6954, 0
      %v6989 = vsel %vm4193, %v6955, 0
      %v6992 = vsel %vm4193, %v6956, 0
      %v6995 = vsel %vm4193, %v6957, 0
      %v6998 = vsel %vm4193, %v6958, 0
      %v7001 = vsel %vm4193, %v6959, 0
      %v7004 = vsel %vm4193, %v6960, 0
      %v7007 = vsel %vm4193, %v6961, 0
      %v7010 = vsel %vm4193, %v6962, 0
      %v7013 = vsel %vm4193, %v6963, 0
      %v7016 = vsel %vm4193, %v6964, 0
      %v7019 = vsel %vm4193, %v6965, 0
      %v7022 = vsel %vm4193, %v6966, 0
      %v7025 = vsel %vm4193, %v6967, 0
      %v7028 = vsel %vm4193, %v6968, 0
      %v7031 = vsel %vm4269, %v4983, 0
      %7033 = vmatprep.subr.mxu0 0.0
      %7034 = vmatpush1.msra.mxu0 0.0
      %7035 = vmatprep.subr.mxu0 0.0
      %7036 = vmatpush1.msra.mxu0 0.0
      %7037 = vmatprep.subr.mxu0 0.0
      %7038 = vmatpush1.msra.mxu0 0.0
      %7039 = vmatprep.subr.mxu0 0.0
      %7040 = vmatpush1.msra.mxu0 0.0
      %7041 = vmatprep.subr.mxu0 0.0
      %7042 = vmatpush1.msra.mxu0 0.0
      %7043 = vmatprep.subr.mxu0 0.0
      %7044 = vmatpush1.msra.mxu0 0.0
      %7045 = vmatprep.subr.mxu0 0.0
      %7046 = vmatpush1.msra.mxu0 0.0
      %7047 = vmatprep.subr.mxu0 0.0
      %7048 = vmatpush1.msra.mxu0 0.0
      %7049 = vmatprep.subr.mxu0 0.0
      %7050 = vmatpush1.msra.mxu0 0.0
      %7051 = vmatprep.subr.mxu0 0.0
      %7052 = vmatpush1.msra.mxu0 0.0
      %7053 = vmatprep.subr.mxu0 0.0
      %7054 = vmatpush1.msra.mxu0 0.0
      %7055 = vmatprep.subr.mxu0 0.0
      %7056 = vmatpush1.msra.mxu0 %v7031
      %7057 = vmatprep.subr.mxu0 0.0
      %7058 = vmatpush1.msra.mxu0 %v4982
      %7059 = vmatprep.subr.mxu0 0.0
      %7060 = vmatpush1.msra.mxu0 %v4981
      %7061 = vmatprep.subr.mxu0 0.0
      %7062 = vmatpush1.msra.mxu0 %v4980
      %7063 = vmatprep.subr.mxu0 0.0
      %7064 = vmatpush1.msra.mxu0 %v4979
      %7065 = vmatprep.subr.mxu0 0.0
      %7066 = vmatpush2.msra.mxu0 0.0
      %7067 = vmatprep.subr.mxu0 0.0
      %7068 = vmatpush2.msra.mxu0 0.0
      %7069 = vmatprep.subr.mxu0 0.0
      %7070 = vmatpush2.msra.mxu0 0.0
      %7071 = vmatprep.subr.mxu0 0.0
      %7072 = vmatpush2.msra.mxu0 0.0
      %7073 = vmatprep.subr.mxu0 0.0
      %7074 = vmatpush2.msra.mxu0 0.0
      %7075 = vmatprep.subr.mxu0 0.0
      %7076 = vmatpush2.msra.mxu0 0.0
      %7077 = vmatprep.subr.mxu0 0.0
      %7078 = vmatpush2.msra.mxu0 0.0
      %7079 = vmatprep.subr.mxu0 0.0
      %7080 = vmatpush2.msra.mxu0 0.0
      %7081 = vmatprep.subr.mxu0 0.0
      %7082 = vmatpush2.msra.mxu0 0.0
      %7083 = vmatprep.subr.mxu0 0.0
      %7084 = vmatpush2.msra.mxu0 0.0
      %7085 = vmatprep.subr.mxu0 0.0
      %7086 = vmatpush2.msra.mxu0 0.0
      %7087 = vmatprep.subr.mxu0 0.0
      %7088 = vmatpush2.msra.mxu0 0.0
      %7089 = vmatprep.subr.mxu0 0.0
      %7090 = vmatpush2.msra.mxu0 0.0
      %7091 = vmatprep.subr.mxu0 0.0
      %7092 = vmatpush2.msra.mxu0 0.0
      %7093 = vmatprep.subr.mxu0 0.0
      %7094 = vmatpush2.msra.mxu0 0.0
      %7095 = vmatprep.subr.mxu0 0.0
      %7096 = vmatpush2.msra.mxu0 0.0
      %7097 = vmatprep.mubr.f32.mxu0 0.0
      %7098 = vmatmul.mubr.f32.gmra.mxu0 %v6977
      %v7099 = vpop.f32.mrf.mxu0
      %v7100 = vadd.f32 %v6974, %v7099
      %v7101 = vpop.f32.mrf.mxu0
      %7102 = vmatprep.mubr.f32.mxu0 0.0
      %7103 = vmatmul.mubr.f32.gmra.mxu0 %v6980
      %v7104 = vpop.f32.mrf.mxu0
      %v7105 = vadd.f32 %v6974, %v7104
      %v7106 = vpop.f32.mrf.mxu0
      %7107 = vmatprep.mubr.f32.mxu0 0.0
      %7108 = vmatmul.mubr.f32.gmra.mxu0 %v6983
      %v7109 = vpop.f32.mrf.mxu0
      %v7110 = vadd.f32 %v6974, %v7109
      %v7111 = vpop.f32.mrf.mxu0
      %7112 = vmatprep.mubr.f32.mxu0 0.0
      %7113 = vmatmul.mubr.f32.gmra.mxu0 %v6986
      %v7114 = vpop.f32.mrf.mxu0
      %v7115 = vadd.f32 %v6974, %v7114
      %v7116 = vpop.f32.mrf.mxu0
      %7117 = vmatprep.mubr.f32.mxu0 0.0
      %7118 = vmatmul.mubr.f32.gmra.mxu0 %v6989
      %v7119 = vpop.f32.mrf.mxu0
      %v7120 = vadd.f32 %v6974, %v7119
      %v7121 = vpop.f32.mrf.mxu0
      %7122 = vmatprep.mubr.f32.mxu0 0.0
      %7123 = vmatmul.mubr.f32.gmra.mxu0 %v6992
      %v7124 = vpop.f32.mrf.mxu0
      %v7125 = vadd.f32 %v6974, %v7124
      %v7126 = vpop.f32.mrf.mxu0
      %7127 = vmatprep.mubr.f32.mxu0 0.0
      %7128 = vmatmul.mubr.f32.gmra.mxu0 %v6995
      %v7129 = vpop.f32.mrf.mxu0
      %v7130 = vadd.f32 %v6974, %v7129
      %v7131 = vpop.f32.mrf.mxu0
      %7132 = vmatprep.mubr.f32.mxu0 0.0
      %7133 = vmatmul.mubr.f32.gmra.mxu0 %v6998
      %v7134 = vpop.f32.mrf.mxu0
      %v7135 = vadd.f32 %v6974, %v7134
      %v7136 = vpop.f32.mrf.mxu0
      %7137 = vmatprep.mubr.f32.mxu0 0.0
      %7138 = vmatmul.mubr.f32.gmra.mxu0 %v7001
      %v7139 = vpop.f32.mrf.mxu0
      %v7140 = vadd.f32 %v6974, %v7139
      %v7141 = vpop.f32.mrf.mxu0
      %7142 = vmatprep.mubr.f32.mxu0 0.0
      %7143 = vmatmul.mubr.f32.gmra.mxu0 %v7004
      %v7144 = vpop.f32.mrf.mxu0
      %v7145 = vadd.f32 %v6974, %v7144
      %v7146 = vpop.f32.mrf.mxu0
      %7147 = vmatprep.mubr.f32.mxu0 0.0
      %7148 = vmatmul.mubr.f32.gmra.mxu0 %v7007
      %v7149 = vpop.f32.mrf.mxu0
      %v7150 = vadd.f32 %v6974, %v7149
      %v7151 = vpop.f32.mrf.mxu0
      %7152 = vmatprep.mubr.f32.mxu0 0.0
      %7153 = vmatmul.mubr.f32.gmra.mxu0 %v7010
      %v7154 = vpop.f32.mrf.mxu0
      %v7155 = vadd.f32 %v6974, %v7154
      %v7156 = vpop.f32.mrf.mxu0
      %7157 = vmatprep.mubr.f32.mxu0 0.0
      %7158 = vmatmul.mubr.f32.gmra.mxu0 %v7013
      %v7159 = vpop.f32.mrf.mxu0
      %v7160 = vadd.f32 %v6974, %v7159
      %v7161 = vpop.f32.mrf.mxu0
      %7162 = vmatprep.mubr.f32.mxu0 0.0
      %7163 = vmatmul.mubr.f32.gmra.mxu0 %v7016
      %v7164 = vpop.f32.mrf.mxu0
      %v7165 = vadd.f32 %v6974, %v7164
      %v7166 = vpop.f32.mrf.mxu0
      %7167 = vmatprep.mubr.f32.mxu0 0.0
      %7168 = vmatmul.mubr.f32.gmra.mxu0 %v7019
      %v7169 = vpop.f32.mrf.mxu0
      %v7170 = vadd.f32 %v6974, %v7169
      %v7171 = vpop.f32.mrf.mxu0
      %7172 = vmatprep.mubr.f32.mxu0 0.0
      %7173 = vmatmul.mubr.f32.gmra.mxu0 %v7022
      %v7174 = vpop.f32.mrf.mxu0
      %v7175 = vadd.f32 %v6974, %v7174
      %v7176 = vpop.f32.mrf.mxu0
      %7177 = vmatprep.mubr.f32.mxu0 0.0
      %7178 = vmatmul.mubr.f32.gmra.mxu0 %v7025
      %v7179 = vpop.f32.mrf.mxu0
      %v7180 = vadd.f32 %v6974, %v7179
      %v7181 = vpop.f32.mrf.mxu0
      %7182 = vmatprep.mubr.f32.mxu0 0.0
      %7183 = vmatmul.mubr.f32.gmra.mxu0 %v7028
      %v7184 = vpop.f32.mrf.mxu0
      %v7185 = vadd.f32 %v6974, %v7184
      %v7186 = vpop.f32.mrf.mxu0
      %7187 = vdwg.mxu0
      %vm7188 = vcmask 1041408
      %vm7189 = vcmask 1045508
      %vm7190 = vmor %vm7188, %vm7189
      %v7191 = vrot.slane %v229, 6
      %v7192 = vrot.slane %v7191, 4
      %v7193 = vrot.slane %v356, 6
      %v7194 = vsel %vm7190, %v7192, %v7193
      %v7195 = vrot.slane %v7193, 4
      %v7196 = vrot.slane %v230, 6
      %v7197 = vsel %vm7190, %v7195, %v7196
      %v7198 = vrot.slane %v7196, 4
      %v7199 = vrot.slane %v373, 6
      %v7200 = vsel %vm7190, %v7198, %v7199
      %v7201 = vrot.slane %v231, 6
      %v7202 = vrot.slane %v7201, 4
      %v7203 = vrot.slane %v389, 6
      %v7204 = vsel %vm7190, %v7202, %v7203
      %v7205 = vrot.slane %v7203, 4
      %v7206 = vrot.slane %v232, 6
      %v7207 = vsel %vm7190, %v7205, %v7206
      %v7208 = vrot.slane %v7206, 4
      %v7209 = vrot.slane %v406, 6
      %v7210 = vsel %vm7190, %v7208, %v7209
      %v7211 = vrot.slane %v233, 6
      %v7212 = vrot.slane %v7211, 4
      %v7213 = vrot.slane %v422, 6
      %v7214 = vsel %vm7190, %v7212, %v7213
      %v7215 = vrot.slane %v7213, 4
      %v7216 = vrot.slane %v234, 6
      %v7217 = vsel %vm7190, %v7215, %v7216
      %v7218 = vrot.slane %v7216, 4
      %v7219 = vrot.slane %v439, 6
      %v7220 = vsel %vm7190, %v7218, %v7219
      %v7221 = vrot.slane %v235, 6
      %v7222 = vrot.slane %v7221, 4
      %v7223 = vrot.slane %v455, 6
      %v7224 = vsel %vm7190, %v7222, %v7223
      %v7225 = vrot.slane %v7223, 4
      %v7226 = vrot.slane %v236, 6
      %v7227 = vsel %vm7190, %v7225, %v7226
      %v7228 = vrot.slane %v7226, 4
      %v7229 = vrot.slane %v472, 6
      %v7230 = vsel %vm7190, %v7228, %v7229
      %v7231 = vrot.slane %v237, 6
      %v7232 = vrot.slane %v7231, 4
      %v7233 = vrot.slane %v488, 6
      %v7234 = vsel %vm7190, %v7232, %v7233
      %v7235 = vrot.slane %v7233, 4
      %v7236 = vrot.slane %v238, 6
      %v7237 = vsel %vm7190, %v7235, %v7236
      %v7238 = vrot.slane %v7236, 4
      %v7239 = vrot.slane %v505, 6
      %v7240 = vsel %vm7190, %v7238, %v7239
      %v7241 = vrot.slane %v239, 6
      %v7242 = vrot.slane %v7241, 4
      %v7243 = vrot.slane %v521, 6
      %v7244 = vsel %vm7190, %v7242, %v7243
      %v7245 = vrot.slane %v7243, 4
      %v7246 = vrot.slane %v240, 6
      %v7247 = vsel %vm7190, %v7245, %v7246
      %v7248 = vrot.slane %v7246, 4
      %v7249 = vrot.slane %v538, 6
      %v7250 = vsel %vm7190, %v7248, %v7249
      %v7251 = vrot.slane %v241, 6
      %v7252 = vrot.slane %v7251, 4
      %v7253 = vrot.slane %v554, 6
      %v7254 = vsel %vm7190, %v7252, %v7253
      %v7255 = vrot.slane %v7253, 4
      %v7256 = vrot.slane %v242, 6
      %v7257 = vsel %vm7190, %v7255, %v7256
      %v7258 = vrot.slane %v7256, 4
      %v7259 = vrot.slane %v571, 6
      %v7260 = vsel %vm7190, %v7258, %v7259
      %v7261 = vrot.slane %v243, 6
      %v7262 = vrot.slane %v7261, 4
      %v7263 = vrot.slane %v587, 6
      %v7264 = vsel %vm7190, %v7262, %v7263
      %v7265 = vrot.slane %v7263, 4
      %v7266 = vrot.slane %v244, 6
      %v7267 = vsel %vm7190, %v7265, %v7266
      %v7268 = vrot.slane %v7266, 4
      %v7269 = vrot.slane %v604, 6
      %v7270 = vsel %vm7190, %v7268, %v7269
      %v7271 = vrot.slane %v245, 6
      %v7272 = vrot.slane %v7271, 4
      %v7273 = vrot.slane %v620, 6
      %v7274 = vsel %vm7190, %v7272, %v7273
      %v7275 = vrot.slane %v7273, 4
      %v7276 = vrot.slane %v246, 6
      %v7277 = vsel %vm7190, %v7275, %v7276
      %v7278 = vrot.slane %v7276, 4
      %v7279 = vrot.slane %v637, 6
      %v7280 = vsel %vm7190, %v7278, %v7279
      %v7281 = vrot.slane %v247, 6
      %v7282 = vrot.slane %v7281, 4
      %v7283 = vrot.slane %v653, 6
      %v7284 = vsel %vm7190, %v7282, %v7283
      %v7285 = vrot.slane %v7283, 4
      %v7286 = vrot.slane %v248, 6
      %v7287 = vsel %vm7190, %v7285, %v7286
      %v7288 = vrot.slane %v7286, 4
      %v7289 = vrot.slane %v670, 6
      %v7290 = vsel %vm7190, %v7288, %v7289
      %v7291 = vrot.slane %v249, 6
      %v7292 = vrot.slane %v7291, 4
      %v7293 = vrot.slane %v686, 6
      %v7294 = vsel %vm7190, %v7292, %v7293
      %v7295 = vrot.slane %v7293, 4
      %v7296 = vrot.slane %v250, 6
      %v7297 = vsel %vm7190, %v7295, %v7296
      %v7298 = vrot.slane %v7296, 4
      %v7299 = vrot.slane %v703, 6
      %v7300 = vsel %vm7190, %v7298, %v7299
      %v7301 = vrot.slane %v251, 6
      %v7302 = vrot.slane %v7301, 4
      %v7303 = vrot.slane %v719, 6
      %v7304 = vsel %vm7190, %v7302, %v7303
      %v7305 = vrot.slane %v7303, 4
      %v7306 = vrot.slane %v252, 6
      %v7307 = vsel %vm7190, %v7305, %v7306
      %v7308 = vrot.slane %v7306, 4
      %v7309 = vrot.slane %v736, 6
      %v7310 = vsel %vm7190, %v7308, %v7309
      %v7311 = vcombine.low %v7194, %v7197
      %v7312 = vcombine.low %v7200, %v7204
      %v7313 = vcombine.low %v7207, %v7210
      %v7314 = vcombine.low %v7214, %v7217
      %v7315 = vcombine.low %v7220, %v7224
      %v7316 = vcombine.low %v7227, %v7230
      %v7317 = vcombine.low %v7234, %v7237
      %v7318 = vcombine.low %v7240, %v7244
      %v7319 = vcombine.low %v7247, %v7250
      %v7320 = vcombine.low %v7254, %v7257
      %v7321 = vcombine.low %v7260, %v7264
      %v7322 = vcombine.low %v7267, %v7270
      %v7323 = vcombine.low %v7274, %v7277
      %v7324 = vcombine.low %v7280, %v7284
      %v7325 = vcombine.low %v7287, %v7290
      %v7326 = vcombine.low %v7294, %v7297
      %v7327 = vcombine.low %v7300, %v7304
      %v7328 = vcombine.low %v7307, %v7310
      %v7347 = vadd.f32 %v7100, %v7311
      %v7348 = vadd.f32 %v7105, %v7312
      %v7349 = vadd.f32 %v7110, %v7313
      %v7350 = vadd.f32 %v7115, %v7314
      %v7351 = vadd.f32 %v7120, %v7315
      %v7352 = vadd.f32 %v7125, %v7316
      %v7353 = vadd.f32 %v7130, %v7317
      %v7354 = vadd.f32 %v7135, %v7318
      %v7355 = vadd.f32 %v7140, %v7319
      %v7356 = vadd.f32 %v7145, %v7320
      %v7357 = vadd.f32 %v7150, %v7321
      %v7358 = vadd.f32 %v7155, %v7322
      %v7359 = vadd.f32 %v7160, %v7323
      %v7360 = vadd.f32 %v7165, %v7324
      %v7361 = vadd.f32 %v7170, %v7325
      %v7362 = vadd.f32 %v7175, %v7326
      %v7363 = vadd.f32 %v7180, %v7327
      %v7364 = vadd.f32 %v7185, %v7328
      %v7383 = vcombine.high %v7347, %v7347
      %v7384 = vcombine.high %v7348, %v7348
      %v7385 = vcombine.high %v7349, %v7349
      %v7386 = vcombine.high %v7350, %v7350
      %v7387 = vcombine.high %v7351, %v7351
      %v7388 = vcombine.high %v7352, %v7352
      %v7389 = vcombine.high %v7353, %v7353
      %v7390 = vcombine.high %v7354, %v7354
      %v7391 = vcombine.high %v7355, %v7355
      %v7392 = vcombine.high %v7356, %v7356
      %v7393 = vcombine.high %v7357, %v7357
      %v7394 = vcombine.high %v7358, %v7358
      %v7395 = vcombine.high %v7359, %v7359
      %v7396 = vcombine.high %v7360, %v7360
      %v7397 = vcombine.high %v7361, %v7361
      %v7398 = vcombine.high %v7362, %v7362
      %v7399 = vcombine.high %v7363, %v7363
      %v7400 = vcombine.high %v7364, %v7364
      %v7407 = vcombine.low %v7347, %v7383
      %v7408 = vcombine.low %v7384, %v7349
      %v7409 = vcombine.low %v7350, %v7386
      %v7410 = vcombine.low %v7387, %v7352
      %v7411 = vcombine.low %v7353, %v7389
      %v7412 = vcombine.low %v7390, %v7355
      %v7413 = vcombine.low %v7356, %v7392
      %v7414 = vcombine.low %v7393, %v7358
      %v7415 = vcombine.low %v7359, %v7395
      %v7416 = vcombine.low %v7396, %v7361
      %v7417 = vcombine.low %v7362, %v7398
      %v7418 = vcombine.low %v7399, %v7364
      %7431 = vst.msk [vmem:[%s224] sm:$0xff] %vm3978, %v7407
      %vm7432 = vcmask 27648
      %7433 = vst.msk [vmem:[%s224 + $0x8] sm:$0xf] %vm7432, %v7348
      %7434 = vst.msk [vmem:[%s224 + $0x10] sm:$0xff] %vm3978, %v7408
      %7435 = vst.msk [vmem:[%s224 + $0x18] sm:$0xf] %vm7432, %v7385
      %7436 = vst.msk [vmem:[%s224 + $0x20] sm:$0xff] %vm3978, %v7409
      %7437 = vst.msk [vmem:[%s224 + $0x28] sm:$0xf] %vm7432, %v7351
      %7438 = vst.msk [vmem:[%s224 + $0x30] sm:$0xff] %vm3978, %v7410
      %7439 = vst.msk [vmem:[%s224 + $0x38] sm:$0xf] %vm7432, %v7388
      %7440 = vst.msk [vmem:[%s224 + $0x40] sm:$0xff] %vm3978, %v7411
      %7441 = vst.msk [vmem:[%s224 + $0x48] sm:$0xf] %vm7432, %v7354
      %7442 = vst.msk [vmem:[%s224 + $0x50] sm:$0xff] %vm3978, %v7412
      %7443 = vst.msk [vmem:[%s224 + $0x58] sm:$0xf] %vm7432, %v7391
      %7444 = vst.msk [vmem:[%s224 + $0x60] sm:$0xff] %vm3978, %v7413
      %7445 = vst.msk [vmem:[%s224 + $0x68] sm:$0xf] %vm7432, %v7357
      %7446 = vst.msk [vmem:[%s224 + $0x70] sm:$0xff] %vm3978, %v7414
      %7447 = vst.msk [vmem:[%s224 + $0x78] sm:$0xf] %vm7432, %v7394
      %7448 = vst.msk [vmem:[%s224 + $0x80] sm:$0xff] %vm3978, %v7415
      %7449 = vst.msk [vmem:[%s224 + $0x88] sm:$0xf] %vm7432, %v7360
      %7450 = vst.msk [vmem:[%s224 + $0x90] sm:$0xff] %vm3978, %v7416
      %7451 = vst.msk [vmem:[%s224 + $0x98] sm:$0xf] %vm7432, %v7397
      %7452 = vst.msk [vmem:[%s224 + $0xa0] sm:$0xff] %vm3978, %v7417
      %7453 = vst.msk [vmem:[%s224 + $0xa8] sm:$0xf] %vm7432, %v7363
      %7454 = vst.msk [vmem:[%s224 + $0xb0] sm:$0xff] %vm3978, %v7418
      %7455 = vst.msk [vmem:[%s224 + $0xb8] sm:$0xf] %vm7432, %v7400
      %p7456 = scmp.lt.s32.totalorder %s16, 1
      %s7457 = scalar_select %p7456, %s16, 1
      %s7458 = smul.addr %s7457, 24
      %s7459 = smul.addr %s7458, 8
      %s7460 = scalar_lea.vmem %s5, %s7459
      // Predicated region
      $region41: #{tpu_custom_call.1} parent=39 // pred_check
        %p7461 = pneg %p144
      $region42: #{tpu_custom_call.1} parent=39 // pred_check_branch
        %7463 = sbr.rel (%p7461) target = $region44
      $region43: #{tpu_custom_call.1} parent=39 // pred_region
        _
      $region44: #{tpu_custom_call.1} parent=39 // pred_fallthru
        _
    $region40: #{tpu_custom_call.1} parent=5 // pred_fallthru
      _
    %p7464 = scmp.le.s32.totalorder 2, %s11
    // Predicated region
    $region45: #{tpu_custom_call.1} parent=5 // pred_check
      %p7465 = pneg %p7464
    $region46: #{tpu_custom_call.1} parent=5 // pred_check_branch
      %7467 = sbr.rel (%p7465) target = $region48
    $region47: #{tpu_custom_call.1} parent=5 // pred_region
      %s7468 = ssub.s32 %s11, 2
      // Predicated region
      $region49: #{tpu_custom_call.1} parent=47 // pred_check
        %p7469 = pneg %p150
      $region50: #{tpu_custom_call.1} parent=47 // pred_check_branch
        %7471 = sbr.rel (%p7469) target = $region52
      $region51: #{tpu_custom_call.1} parent=47 // pred_region
        %p7472 = scmp.lt.s32.totalorder %s17, 1
        %s7473 = scalar_select %p7472, %s17, 1
        %s7474 = smul.addr %s7473, 24
        %s7475 = smul.addr %s7474, 8
        %s7476 = scalar_lea.vmem %s5, %s7475
      $region52: #{tpu_custom_call.1} parent=47 // pred_fallthru
        _
    $region48: #{tpu_custom_call.1} parent=5 // pred_fallthru
      _
  $region6: #{tpu_custom_call.1} parent=0 // loop_footer
    %s15 = sadd.s32 1, %s11
  $region7: #{tpu_custom_call.1} parent=0 // loop_footer_branch
    %10 = sbr.rel target = $region3
  $region8: #{tpu_custom_call.1} parent=0 // loop_exit
    _

</llo_original>
